<compile_context>
chip_gen: v7x
topology: tpu7x:2x2x1
jax: 0.10.0
libtpu: 0.0.40
codegen_flags: <defaults>
</compile_context>

<pallas_src>
import jax
import jax.numpy as jnp
from jax.experimental import pallas as pl
from jax.experimental.pallas import tpu as pltpu


# --------------------------- Pallas kernels ---------------------------------

def encdec_kernel(patches_ref, wed_ref, bed_ref, out_ref):
    """Pre-composed encoder+decoder: (TILE_P,192)bf16 @ (192,192)bf16 + bias."""
    out_ref[...] = jnp.dot(patches_ref[...], wed_ref[...],
                           preferred_element_type=jnp.float32) + bed_ref[...]


def refine_kernel(rec_ref, w8_ref, b8_ref, w7_ref, b7_ref, out_ref,
                  pa_ref, pb_ref):
    """Fused refine: t = conv3x3(rec,W8); s = conv3x3(t,W7);
       out = clip(rec + s, -1, 1)[4:-4, 4:-4].

    rec_ref : (3, Hp, Wp) VMEM block (one batch element, channel-planar)
    w*_ref  : flat (81,) SMEM, order [co, ci, ky, kx];  b*_ref: (3,) SMEM
    out_ref : (3, H, W)  -- already the cropped, NCHW-ordered result
    pa_ref / pb_ref : (3, Hp+2, Wp+2) VMEM scratch (zero-halo buffers)
    """
    c_dim, hp, wp = rec_ref.shape
    _, h, w = out_ref.shape

    # zero the halo buffers, place rec into pa's interior
    pa_ref[...] = jnp.zeros_like(pa_ref)
    pb_ref[...] = jnp.zeros_like(pb_ref)
    for co in range(c_dim):
        pa_ref[co, 1:hp + 1, 1:wp + 1] = rec_ref[co]

    # pass 1: t = conv3x3(rec, W8) + b8  (full image) -> interior of pb
    for co in range(c_dim):
        acc = jnp.full((hp, wp), b8_ref[co], dtype=jnp.float32)
        for ci in range(c_dim):
            for ky in range(3):
                for kx in range(3):
                    wv = w8_ref[(co * c_dim + ci) * 9 + ky * 3 + kx]
                    acc = acc + wv * pa_ref[ci, ky:ky + hp, kx:kx + wp]
        pb_ref[co, 1:hp + 1, 1:wp + 1] = acc

    # pass 2: s = conv3x3(t, W7) + b7, evaluated only on the [4:-4,4:-4] crop,
    # then residual add + clip.
    # TODO(synk): smooth_clip() is not defined in the provided snippet; a
    # relu-style smooth_clip is forward-equivalent to a hard clamp, used here.
    for co in range(c_dim):
        acc = jnp.full((h, w), b7_ref[co], dtype=jnp.float32)
        for ci in range(c_dim):
            for ky in range(3):
                for kx in range(3):
                    wv = w7_ref[(co * c_dim + ci) * 9 + ky * 3 + kx]
                    acc = acc + wv * pb_ref[ci, 4 + ky:4 + ky + h,
                                            4 + kx:4 + kx + w]
        refined = rec_ref[co, 4:4 + h, 4:4 + w] + acc
        out_ref[co, :, :] = jnp.clip(refined, -1.0, 1.0)


# --------------------------- JAX glue (data movement) ------------------------

def _round_up(a, b):
    return (a + b - 1) // b * b


def _patchify8_nchw(padx):
    """(N,3,Hp,Wp) -> (N*Hf*Wf, 192); patch flattened in (c,i,j) order."""
    n, c, hp, wp = padx.shape
    hf, wf = hp // 8, wp // 8
    x = padx.reshape(n, c, hf, 8, wf, 8).transpose(0, 2, 4, 1, 3, 5)
    return x.reshape(n * hf * wf, c * 64), (n, hf, wf)


def _pixel_shuffle8_nchw(dec, n, hf, wf):
    """(N*Hf*Wf, 192) -> (N, 3, 8*Hf, 8*Wf); column o = c*64 + i*8 + j."""
    x = dec.reshape(n, hf, wf, 3, 8, 8).transpose(0, 3, 1, 4, 2, 5)
    return x.reshape(n, 3, hf * 8, wf * 8)


# --------------------------- parameters --------------------------------------

def init_params(key):
    ks = jax.random.split(key, 8)
    s = 0.05
    f32 = jnp.float32
    return dict(
        # encoder weight: rows flattened (c,i,j), cols = 16 output features
        We=s * jax.random.normal(ks[0], (192, 16), f32),
        be=s * jax.random.normal(ks[1], (1, 16), f32),
        # decoder (1x1) weight: 16 x 192, output channel o = c*64 + i*8 + j
        Wd=s * jax.random.normal(ks[2], (16, 192), f32),
        bd=s * jax.random.normal(ks[3], (1, 192), f32),
        # refine8 / refine7: flat (81,) in [co, ci, ky, kx] order, bias (3,)
        W8=s * jax.random.normal(ks[4], (81,), f32),
        b8=s * jax.random.normal(ks[5], (3,), f32),
        W7=s * jax.random.normal(ks[6], (81,), f32),
        b7=s * jax.random.normal(ks[7], (3,), f32),
    )


# --------------------------- forward ------------------------------------------

def naive_ae_8decode(params, x_nchw):
    x = x_nchw.astype(jnp.float32)
    n, c, h, w = x.shape
    hp, wp = h + 8, w + 8

    # ReflectionPad2d(4)
    padx = jnp.pad(x, ((0, 0), (0, 0), (4, 4), (4, 4)), mode="reflect")

    # --- encoder ∘ decoder pre-composed into a single (192,192) weight -------
    # (linear-algebra equivalent: dec = patch@We@Wd + (be@Wd + bd))
    wed = (params["We"] @ params["Wd"]).astype(jnp.bfloat16)      # (192,192)
    bed = params["be"] @ params["Wd"] + params["bd"]              # (1,192) f32

    patches, (n_, hf, wf) = _patchify8_nchw(padx)                 # (P,192)
    p = patches.shape[0]
    if p <= 1024:
        tile_p = _round_up(p, 16)
        p_pad = tile_p
    else:
        tile_p = 1024                          # >=1K rows: amortizes step cost,
        p_pad = _round_up(p, tile_p)           # fits scoped VMEM on v5e..v7x
    patches = jnp.pad(patches, ((0, p_pad - p), (0, 0))).astype(jnp.bfloat16)

    dec = pl.pallas_call(
        encdec_kernel,
        out_shape=jax.ShapeDtypeStruct((p_pad, 192), jnp.float32),
        grid=(p_pad // tile_p,),
        in_specs=[
            pl.BlockSpec((tile_p, 192), lambda i: (i, 0)),
            pl.BlockSpec((192, 192), lambda i: (0, 0)),
            pl.BlockSpec((1, 192), lambda i: (0, 0)),
        ],
        out_specs=pl.BlockSpec((tile_p, 192), lambda i: (i, 0)),
        compiler_params=pltpu.CompilerParams(
            dimension_semantics=("parallel",),
            vmem_limit_bytes=32 * 1024 * 1024),
        cost_estimate=pl.CostEstimate(
            flops=2 * p_pad * 192 * 192,
            transcendentals=0,
            bytes_accessed=p_pad * 192 * 2 + 192 * 192 * 2
                           + 192 * 4 + p_pad * 192 * 4),
    )(patches, wed, bed)[:p]

    # PixelShuffle(8) -> reconstruction in channel-planar NCHW layout
    rec = _pixel_shuffle8_nchw(dec, n_, hf, wf)                   # (N,3,Hp,Wp)

    # --- fused refine: conv8 -> conv7 -> residual -> clip -> crop ------------
    # Grid over batch (parallel => both v7x TensorCores).  Whole (3,Hp,Wp)
    # plane + two halo scratch buffers live in VMEM per step.
    # TODO(synk): for very large images, tile rows with a 2-pixel halo instead
    # of one whole image per grid step.
    # (input_output_aliases is not applicable: rec (N,3,Hp,Wp) and the cropped
    #  output (N,3,H,W) have different shapes.)
    smem_spec = pl.BlockSpec(memory_space=pltpu.MemorySpace.SMEM)
    out = pl.pallas_call(
        refine_kernel,
        out_shape=jax.ShapeDtypeStruct((n, 3, h, w), jnp.float32),
        grid=(n,),
        in_specs=[
            pl.BlockSpec((None, 3, hp, wp), lambda i: (i, 0, 0, 0)),
            smem_spec, smem_spec, smem_spec, smem_spec,
        ],
        out_specs=pl.BlockSpec((None, 3, h, w), lambda i: (i, 0, 0, 0)),
        scratch_shapes=[
            pltpu.VMEM((3, hp + 2, wp + 2), jnp.float32),
            pltpu.VMEM((3, hp + 2, wp + 2), jnp.float32),
        ],
        compiler_params=pltpu.CompilerParams(
            dimension_semantics=("parallel",),
            vmem_limit_bytes=32 * 1024 * 1024),
        cost_estimate=pl.CostEstimate(
            flops=n * (162 * hp * wp + 162 * h * w + 6 * h * w),
            transcendentals=0,
            bytes_accessed=n * 3 * (hp * wp + h * w) * 4 + 2 * 84 * 4),
    )(rec, params["W8"], params["b8"], params["W7"], params["b7"])

    return out                                                    # (N,3,H,W)


# --------------------------- main ---------------------------------------------

if __name__ == "__main__":
    key = jax.random.PRNGKey(0)
    pkey, xkey = jax.random.split(key)
    params = init_params(pkey)

    # PyTorch-style NCHW input: batch=2, channels=3, spatial=16x16
    x = jax.random.normal(xkey, (2, 3, 16, 16), dtype=jnp.float32)

    fwd = jax.jit(naive_ae_8decode)
    out = jax.block_until_ready(fwd(params, x))
    assert out.shape == (2, 3, 16, 16), out.shape
    assert bool(jnp.all(jnp.isfinite(out)))
    print("KERNEL_OK")
</pallas_src>

<mosaic_0001>
module attributes {stable_mosaic.version = 11 : i64} {
  func.func @encdec_kernel(%arg0: i32, %arg1: memref<32x192xbf16, #tpu.memory_space<vmem>>, %arg2: memref<192x192xbf16, #tpu.memory_space<vmem>>, %arg3: memref<1x192xf32, #tpu.memory_space<vmem>>, %arg4: memref<32x192xf32, #tpu.memory_space<vmem>>) attributes {dimension_semantics = [#tpu.dimension_semantics<parallel>], iteration_bounds = array<i64: 1>, scalar_prefetch = 0 : i64, scratch_operands = 0 : i64, tpu.core_type = #tpu.core_type<tc>, window_params = [{transform_indices = @transform_0, window_bounds = array<i64: 32, 192>}, {pipeline_mode = #tpu.pipeline_mode<synchronous>, transform_indices = @transform_1, window_bounds = array<i64: 192, 192>}, {pipeline_mode = #tpu.pipeline_mode<synchronous>, transform_indices = @transform_2, window_bounds = array<i64: 1, 192>}, {transform_indices = @transform_3, window_bounds = array<i64: 32, 192>}]} {
    %c0 = arith.constant 0 : index
    %c0_0 = arith.constant 0 : index
    %0 = vector.load %arg1[%c0, %c0_0] : memref<32x192xbf16, #tpu.memory_space<vmem>>, vector<32x192xbf16>
    %c0_1 = arith.constant 0 : index
    %c0_2 = arith.constant 0 : index
    %1 = vector.load %arg2[%c0_1, %c0_2] : memref<192x192xbf16, #tpu.memory_space<vmem>>, vector<192x192xbf16>
    %cst = arith.constant dense<0.000000e+00> : vector<32x192xf32>
    %2 = tpu.matmul %0, %1, %cst {dimension_numbers = #tpu.dot_dimension_numbers<[1], [0], [0], [1], [0, 0, 1, 1], [], []>} : vector<32x192xbf16>, vector<192x192xbf16>, vector<32x192xf32> -> vector<32x192xf32>
    %c0_3 = arith.constant 0 : index
    %c0_4 = arith.constant 0 : index
    %3 = vector.load %arg3[%c0_3, %c0_4] : memref<1x192xf32, #tpu.memory_space<vmem>>, vector<1x192xf32>
    %4 = vector.broadcast %3 : vector<1x192xf32> to vector<32x192xf32>
    %5 = arith.addf %2, %4 : vector<32x192xf32>
    %c0_5 = arith.constant 0 : index
    %c0_6 = arith.constant 0 : index
    %6 = vector.load %arg4[%c0_5, %c0_6] : memref<32x192xf32, #tpu.memory_space<vmem>>, vector<32x192xf32>
    tpu.vector_store %arg4[%c0_5, %c0_6], %5 {strides = array<i32>} : memref<32x192xf32, #tpu.memory_space<vmem>>, vector<32x192xf32>,
    return
  }
  func.func @transform_0(%arg0: i32) -> (i32, i32) {
    %c0_i32 = arith.constant 0 : i32
    %c0_i32_0 = arith.constant 0 : i32
    return %arg0, %c0_i32 : i32, i32
  }
  func.func @transform_1(%arg0: i32) -> (i32, i32) {
    %c0_i32 = arith.constant 0 : i32
    %c0_i32_0 = arith.constant 0 : i32
    %c0_i32_1 = arith.constant 0 : i32
    return %c0_i32, %c0_i32_0 : i32, i32
  }
  func.func @transform_2(%arg0: i32) -> (i32, i32) {
    %c0_i32 = arith.constant 0 : i32
    %c0_i32_0 = arith.constant 0 : i32
    %c0_i32_1 = arith.constant 0 : i32
    return %c0_i32, %c0_i32_0 : i32, i32
  }
  func.func @transform_3(%arg0: i32) -> (i32, i32) {
    %c0_i32 = arith.constant 0 : i32
    %c0_i32_0 = arith.constant 0 : i32
    return %arg0, %c0_i32 : i32, i32
  }
}

module attributes {stable_mosaic.version = 11 : i64} {
  func.func @refine_kernel(%arg0: i32, %arg1: memref<1x3x24x24xf32, #tpu.memory_space<vmem>>, %arg2: memref<81xf32, #tpu.memory_space<smem>>, %arg3: memref<3xf32, #tpu.memory_space<smem>>, %arg4: memref<81xf32, #tpu.memory_space<smem>>, %arg5: memref<3xf32, #tpu.memory_space<smem>>, %arg6: memref<1x3x16x16xf32, #tpu.memory_space<vmem>>, %arg7: memref<3x26x26xf32, #tpu.memory_space<vmem>>, %arg8: memref<3x26x26xf32, #tpu.memory_space<vmem>>) attributes {dimension_semantics = [#tpu.dimension_semantics<parallel>], iteration_bounds = array<i64: 2>, scalar_prefetch = 0 : i64, scratch_operands = 2 : i64, tpu.core_type = #tpu.core_type<tc>, window_params = [{transform_indices = @transform_0, window_bounds = array<i64: 1, 3, 24, 24>}, {transform_indices = @transform_1, window_bounds = array<i64: 81>}, {transform_indices = @transform_2, window_bounds = array<i64: 3>}, {transform_indices = @transform_3, window_bounds = array<i64: 81>}, {transform_indices = @transform_4, window_bounds = array<i64: 3>}, {transform_indices = @transform_5, window_bounds = array<i64: 1, 3, 16, 16>}]} {
    %cst = arith.constant 0.000000e+00 : f32
    %0 = vector.broadcast %cst : f32 to vector<3x26x26xf32>
    %c0 = arith.constant 0 : index
    %c0_0 = arith.constant 0 : index
    %c0_1 = arith.constant 0 : index
    %1 = vector.load %arg7[%c0, %c0_0, %c0_1] : memref<3x26x26xf32, #tpu.memory_space<vmem>>, vector<3x26x26xf32>
    tpu.vector_store %arg7[%c0, %c0_0, %c0_1], %0 {strides = array<i32>} : memref<3x26x26xf32, #tpu.memory_space<vmem>>, vector<3x26x26xf32>,
    %cst_2 = arith.constant 0.000000e+00 : f32
    %2 = vector.broadcast %cst_2 : f32 to vector<3x26x26xf32>
    %c0_3 = arith.constant 0 : index
    %c0_4 = arith.constant 0 : index
    %c0_5 = arith.constant 0 : index
    %3 = vector.load %arg8[%c0_3, %c0_4, %c0_5] : memref<3x26x26xf32, #tpu.memory_space<vmem>>, vector<3x26x26xf32>
    tpu.vector_store %arg8[%c0_3, %c0_4, %c0_5], %2 {strides = array<i32>} : memref<3x26x26xf32, #tpu.memory_space<vmem>>, vector<3x26x26xf32>,
    %c0_6 = arith.constant 0 : index
    %c0_7 = arith.constant 0 : index
    %c0_8 = arith.constant 0 : index
    %c0_9 = arith.constant 0 : index
    %4 = vector.load %arg1[%c0_6, %c0_7, %c0_8, %c0_9] : memref<1x3x24x24xf32, #tpu.memory_space<vmem>>, vector<1x1x24x24xf32>
    %5 = vector.shape_cast %4 : vector<1x1x24x24xf32> to vector<24x24xf32>
    %c0_10 = arith.constant 0 : index
    %c1 = arith.constant 1 : index
    %c1_11 = arith.constant 1 : index
    %6 = vector.load %arg7[%c0_10, %c1, %c1_11] : memref<3x26x26xf32, #tpu.memory_space<vmem>>, vector<1x24x24xf32>
    %7 = vector.shape_cast %6 : vector<1x24x24xf32> to vector<24x24xf32>
    %8 = vector.shape_cast %5 : vector<24x24xf32> to vector<1x24x24xf32>
    tpu.vector_store %arg7[%c0_10, %c1, %c1_11], %8 {strides = array<i32>} : memref<3x26x26xf32, #tpu.memory_space<vmem>>, vector<1x24x24xf32>,
    %c0_12 = arith.constant 0 : index
    %c1_13 = arith.constant 1 : index
    %c0_14 = arith.constant 0 : index
    %c0_15 = arith.constant 0 : index
    %9 = vector.load %arg1[%c0_12, %c1_13, %c0_14, %c0_15] : memref<1x3x24x24xf32, #tpu.memory_space<vmem>>, vector<1x1x24x24xf32>
    %10 = vector.shape_cast %9 : vector<1x1x24x24xf32> to vector<24x24xf32>
    %c1_16 = arith.constant 1 : index
    %c1_17 = arith.constant 1 : index
    %c1_18 = arith.constant 1 : index
    %11 = vector.load %arg7[%c1_16, %c1_17, %c1_18] : memref<3x26x26xf32, #tpu.memory_space<vmem>>, vector<1x24x24xf32>
    %12 = vector.shape_cast %11 : vector<1x24x24xf32> to vector<24x24xf32>
    %13 = vector.shape_cast %10 : vector<24x24xf32> to vector<1x24x24xf32>
    tpu.vector_store %arg7[%c1_16, %c1_17, %c1_18], %13 {strides = array<i32>} : memref<3x26x26xf32, #tpu.memory_space<vmem>>, vector<1x24x24xf32>,
    %c0_19 = arith.constant 0 : index
    %c2 = arith.constant 2 : index
    %c0_20 = arith.constant 0 : index
    %c0_21 = arith.constant 0 : index
    %14 = vector.load %arg1[%c0_19, %c2, %c0_20, %c0_21] : memref<1x3x24x24xf32, #tpu.memory_space<vmem>>, vector<1x1x24x24xf32>
    %15 = vector.shape_cast %14 : vector<1x1x24x24xf32> to vector<24x24xf32>
    %c2_22 = arith.constant 2 : index
    %c1_23 = arith.constant 1 : index
    %c1_24 = arith.constant 1 : index
    %16 = vector.load %arg7[%c2_22, %c1_23, %c1_24] : memref<3x26x26xf32, #tpu.memory_space<vmem>>, vector<1x24x24xf32>
    %17 = vector.shape_cast %16 : vector<1x24x24xf32> to vector<24x24xf32>
    %18 = vector.shape_cast %15 : vector<24x24xf32> to vector<1x24x24xf32>
    tpu.vector_store %arg7[%c2_22, %c1_23, %c1_24], %18 {strides = array<i32>} : memref<3x26x26xf32, #tpu.memory_space<vmem>>, vector<1x24x24xf32>,
    %c0_25 = arith.constant 0 : index
    %19 = memref.load %arg3[%c0_25] : memref<3xf32, #tpu.memory_space<smem>>
    %20 = vector.broadcast %19 : f32 to vector<24x24xf32>
    %c0_26 = arith.constant 0 : index
    %21 = memref.load %arg2[%c0_26] : memref<81xf32, #tpu.memory_space<smem>>
    %c0_27 = arith.constant 0 : index
    %c0_28 = arith.constant 0 : index
    %c0_29 = arith.constant 0 : index
    %22 = vector.load %arg7[%c0_27, %c0_28, %c0_29] : memref<3x26x26xf32, #tpu.memory_space<vmem>>, vector<1x24x24xf32>
    %23 = vector.shape_cast %22 : vector<1x24x24xf32> to vector<24x24xf32>
    %24 = vector.broadcast %21 : f32 to vector<24x24xf32>
    %25 = arith.mulf %24, %23 : vector<24x24xf32>
    %26 = arith.addf %20, %25 : vector<24x24xf32>
    %c1_30 = arith.constant 1 : index
    %27 = memref.load %arg2[%c1_30] : memref<81xf32, #tpu.memory_space<smem>>
    %c0_31 = arith.constant 0 : index
    %c0_32 = arith.constant 0 : index
    %c1_33 = arith.constant 1 : index
    %28 = vector.load %arg7[%c0_31, %c0_32, %c1_33] : memref<3x26x26xf32, #tpu.memory_space<vmem>>, vector<1x24x24xf32>
    %29 = vector.shape_cast %28 : vector<1x24x24xf32> to vector<24x24xf32>
    %30 = vector.broadcast %27 : f32 to vector<24x24xf32>
    %31 = arith.mulf %30, %29 : vector<24x24xf32>
    %32 = arith.addf %26, %31 : vector<24x24xf32>
    %c2_34 = arith.constant 2 : index
    %33 = memref.load %arg2[%c2_34] : memref<81xf32, #tpu.memory_space<smem>>
    %c0_35 = arith.constant 0 : index
    %c0_36 = arith.constant 0 : index
    %c2_37 = arith.constant 2 : index
    %34 = vector.load %arg7[%c0_35, %c0_36, %c2_37] : memref<3x26x26xf32, #tpu.memory_space<vmem>>, vector<1x24x24xf32>
    %35 = vector.shape_cast %34 : vector<1x24x24xf32> to vector<24x24xf32>
    %36 = vector.broadcast %33 : f32 to vector<24x24xf32>
    %37 = arith.mulf %36, %35 : vector<24x24xf32>
    %38 = arith.addf %32, %37 : vector<24x24xf32>
    %c3 = arith.constant 3 : index
    %39 = memref.load %arg2[%c3] : memref<81xf32, #tpu.memory_space<smem>>
    %c0_38 = arith.constant 0 : index
    %c1_39 = arith.constant 1 : index
    %c0_40 = arith.constant 0 : index
    %40 = vector.load %arg7[%c0_38, %c1_39, %c0_40] : memref<3x26x26xf32, #tpu.memory_space<vmem>>, vector<1x24x24xf32>
    %41 = vector.shape_cast %40 : vector<1x24x24xf32> to vector<24x24xf32>
    %42 = vector.broadcast %39 : f32 to vector<24x24xf32>
    %43 = arith.mulf %42, %41 : vector<24x24xf32>
    %44 = arith.addf %38, %43 : vector<24x24xf32>
    %c4 = arith.constant 4 : index
    %45 = memref.load %arg2[%c4] : memref<81xf32, #tpu.memory_space<smem>>
    %c0_41 = arith.constant 0 : index
    %c1_42 = arith.constant 1 : index
    %c1_43 = arith.constant 1 : index
    %46 = vector.load %arg7[%c0_41, %c1_42, %c1_43] : memref<3x26x26xf32, #tpu.memory_space<vmem>>, vector<1x24x24xf32>
    %47 = vector.shape_cast %46 : vector<1x24x24xf32> to vector<24x24xf32>
    %48 = vector.broadcast %45 : f32 to vector<24x24xf32>
    %49 = arith.mulf %48, %47 : vector<24x24xf32>
    %50 = arith.addf %44, %49 : vector<24x24xf32>
    %c5 = arith.constant 5 : index
    %51 = memref.load %arg2[%c5] : memref<81xf32, #tpu.memory_space<smem>>
    %c0_44 = arith.constant 0 : index
    %c1_45 = arith.constant 1 : index
    %c2_46 = arith.constant 2 : index
    %52 = vector.load %arg7[%c0_44, %c1_45, %c2_46] : memref<3x26x26xf32, #tpu.memory_space<vmem>>, vector<1x24x24xf32>
    %53 = vector.shape_cast %52 : vector<1x24x24xf32> to vector<24x24xf32>
    %54 = vector.broadcast %51 : f32 to vector<24x24xf32>
    %55 = arith.mulf %54, %53 : vector<24x24xf32>
    %56 = arith.addf %50, %55 : vector<24x24xf32>
    %c6 = arith.constant 6 : index
    %57 = memref.load %arg2[%c6] : memref<81xf32, #tpu.memory_space<smem>>
    %c0_47 = arith.constant 0 : index
    %c2_48 = arith.constant 2 : index
    %c0_49 = arith.constant 0 : index
    %58 = vector.load %arg7[%c0_47, %c2_48, %c0_49] : memref<3x26x26xf32, #tpu.memory_space<vmem>>, vector<1x24x24xf32>
    %59 = vector.shape_cast %58 : vector<1x24x24xf32> to vector<24x24xf32>
    %60 = vector.broadcast %57 : f32 to vector<24x24xf32>
    %61 = arith.mulf %60, %59 : vector<24x24xf32>
    %62 = arith.addf %56, %61 : vector<24x24xf32>
    %c7 = arith.constant 7 : index
    %63 = memref.load %arg2[%c7] : memref<81xf32, #tpu.memory_space<smem>>
    %c0_50 = arith.constant 0 : index
    %c2_51 = arith.constant 2 : index
    %c1_52 = arith.constant 1 : index
    %64 = vector.load %arg7[%c0_50, %c2_51, %c1_52] : memref<3x26x26xf32, #tpu.memory_space<vmem>>, vector<1x24x24xf32>
    %65 = vector.shape_cast %64 : vector<1x24x24xf32> to vector<24x24xf32>
    %66 = vector.broadcast %63 : f32 to vector<24x24xf32>
    %67 = arith.mulf %66, %65 : vector<24x24xf32>
    %68 = arith.addf %62, %67 : vector<24x24xf32>
    %c8 = arith.constant 8 : index
    %69 = memref.load %arg2[%c8] : memref<81xf32, #tpu.memory_space<smem>>
    %c0_53 = arith.constant 0 : index
    %c2_54 = arith.constant 2 : index
    %c2_55 = arith.constant 2 : index
    %70 = vector.load %arg7[%c0_53, %c2_54, %c2_55] : memref<3x26x26xf32, #tpu.memory_space<vmem>>, vector<1x24x24xf32>
    %71 = vector.shape_cast %70 : vector<1x24x24xf32> to vector<24x24xf32>
    %72 = vector.broadcast %69 : f32 to vector<24x24xf32>
    %73 = arith.mulf %72, %71 : vector<24x24xf32>
    %74 = arith.addf %68, %73 : vector<24x24xf32>
    %c9 = arith.constant 9 : index
    %75 = memref.load %arg2[%c9] : memref<81xf32, #tpu.memory_space<smem>>
    %c1_56 = arith.constant 1 : index
    %c0_57 = arith.constant 0 : index
    %c0_58 = arith.constant 0 : index
    %76 = vector.load %arg7[%c1_56, %c0_57, %c0_58] : memref<3x26x26xf32, #tpu.memory_space<vmem>>, vector<1x24x24xf32>
    %77 = vector.shape_cast %76 : vector<1x24x24xf32> to vector<24x24xf32>
    %78 = vector.broadcast %75 : f32 to vector<24x24xf32>
    %79 = arith.mulf %78, %77 : vector<24x24xf32>
    %80 = arith.addf %74, %79 : vector<24x24xf32>
    %c10 = arith.constant 10 : index
    %81 = memref.load %arg2[%c10] : memref<81xf32, #tpu.memory_space<smem>>
    %c1_59 = arith.constant 1 : index
    %c0_60 = arith.constant 0 : index
    %c1_61 = arith.constant 1 : index
    %82 = vector.load %arg7[%c1_59, %c0_60, %c1_61] : memref<3x26x26xf32, #tpu.memory_space<vmem>>, vector<1x24x24xf32>
    %83 = vector.shape_cast %82 : vector<1x24x24xf32> to vector<24x24xf32>
    %84 = vector.broadcast %81 : f32 to vector<24x24xf32>
    %85 = arith.mulf %84, %83 : vector<24x24xf32>
    %86 = arith.addf %80, %85 : vector<24x24xf32>
    %c11 = arith.constant 11 : index
    %87 = memref.load %arg2[%c11] : memref<81xf32, #tpu.memory_space<smem>>
    %c1_62 = arith.constant 1 : index
    %c0_63 = arith.constant 0 : index
    %c2_64 = arith.constant 2 : index
    %88 = vector.load %arg7[%c1_62, %c0_63, %c2_64] : memref<3x26x26xf32, #tpu.memory_space<vmem>>, vector<1x24x24xf32>
    %89 = vector.shape_cast %88 : vector<1x24x24xf32> to vector<24x24xf32>
    %90 = vector.broadcast %87 : f32 to vector<24x24xf32>
    %91 = arith.mulf %90, %89 : vector<24x24xf32>
    %92 = arith.addf %86, %91 : vector<24x24xf32>
    %c12 = arith.constant 12 : index
    %93 = memref.load %arg2[%c12] : memref<81xf32, #tpu.memory_space<smem>>
    %c1_65 = arith.constant 1 : index
    %c1_66 = arith.constant 1 : index
    %c0_67 = arith.constant 0 : index
    %94 = vector.load %arg7[%c1_65, %c1_66, %c0_67] : memref<3x26x26xf32, #tpu.memory_space<vmem>>, vector<1x24x24xf32>
    %95 = vector.shape_cast %94 : vector<1x24x24xf32> to vector<24x24xf32>
    %96 = vector.broadcast %93 : f32 to vector<24x24xf32>
    %97 = arith.mulf %96, %95 : vector<24x24xf32>
    %98 = arith.addf %92, %97 : vector<24x24xf32>
    %c13 = arith.constant 13 : index
    %99 = memref.load %arg2[%c13] : memref<81xf32, #tpu.memory_space<smem>>
    %c1_68 = arith.constant 1 : index
    %c1_69 = arith.constant 1 : index
    %c1_70 = arith.constant 1 : index
    %100 = vector.load %arg7[%c1_68, %c1_69, %c1_70] : memref<3x26x26xf32, #tpu.memory_space<vmem>>, vector<1x24x24xf32>
    %101 = vector.shape_cast %100 : vector<1x24x24xf32> to vector<24x24xf32>
    %102 = vector.broadcast %99 : f32 to vector<24x24xf32>
    %103 = arith.mulf %102, %101 : vector<24x24xf32>
    %104 = arith.addf %98, %103 : vector<24x24xf32>
    %c14 = arith.constant 14 : index
    %105 = memref.load %arg2[%c14] : memref<81xf32, #tpu.memory_space<smem>>
    %c1_71 = arith.constant 1 : index
    %c1_72 = arith.constant 1 : index
    %c2_73 = arith.constant 2 : index
    %106 = vector.load %arg7[%c1_71, %c1_72, %c2_73] : memref<3x26x26xf32, #tpu.memory_space<vmem>>, vector<1x24x24xf32>
    %107 = vector.shape_cast %106 : vector<1x24x24xf32> to vector<24x24xf32>
    %108 = vector.broadcast %105 : f32 to vector<24x24xf32>
    %109 = arith.mulf %108, %107 : vector<24x24xf32>
    %110 = arith.addf %104, %109 : vector<24x24xf32>
    %c15 = arith.constant 15 : index
    %111 = memref.load %arg2[%c15] : memref<81xf32, #tpu.memory_space<smem>>
    %c1_74 = arith.constant 1 : index
    %c2_75 = arith.constant 2 : index
    %c0_76 = arith.constant 0 : index
    %112 = vector.load %arg7[%c1_74, %c2_75, %c0_76] : memref<3x26x26xf32, #tpu.memory_space<vmem>>, vector<1x24x24xf32>
    %113 = vector.shape_cast %112 : vector<1x24x24xf32> to vector<24x24xf32>
    %114 = vector.broadcast %111 : f32 to vector<24x24xf32>
    %115 = arith.mulf %114, %113 : vector<24x24xf32>
    %116 = arith.addf %110, %115 : vector<24x24xf32>
    %c16 = arith.constant 16 : index
    %117 = memref.load %arg2[%c16] : memref<81xf32, #tpu.memory_space<smem>>
    %c1_77 = arith.constant 1 : index
    %c2_78 = arith.constant 2 : index
    %c1_79 = arith.constant 1 : index
    %118 = vector.load %arg7[%c1_77, %c2_78, %c1_79] : memref<3x26x26xf32, #tpu.memory_space<vmem>>, vector<1x24x24xf32>
    %119 = vector.shape_cast %118 : vector<1x24x24xf32> to vector<24x24xf32>
    %120 = vector.broadcast %117 : f32 to vector<24x24xf32>
    %121 = arith.mulf %120, %119 : vector<24x24xf32>
    %122 = arith.addf %116, %121 : vector<24x24xf32>
    %c17 = arith.constant 17 : index
    %123 = memref.load %arg2[%c17] : memref<81xf32, #tpu.memory_space<smem>>
    %c1_80 = arith.constant 1 : index
    %c2_81 = arith.constant 2 : index
    %c2_82 = arith.constant 2 : index
    %124 = vector.load %arg7[%c1_80, %c2_81, %c2_82] : memref<3x26x26xf32, #tpu.memory_space<vmem>>, vector<1x24x24xf32>
    %125 = vector.shape_cast %124 : vector<1x24x24xf32> to vector<24x24xf32>
    %126 = vector.broadcast %123 : f32 to vector<24x24xf32>
    %127 = arith.mulf %126, %125 : vector<24x24xf32>
    %128 = arith.addf %122, %127 : vector<24x24xf32>
    %c18 = arith.constant 18 : index
    %129 = memref.load %arg2[%c18] : memref<81xf32, #tpu.memory_space<smem>>
    %c2_83 = arith.constant 2 : index
    %c0_84 = arith.constant 0 : index
    %c0_85 = arith.constant 0 : index
    %130 = vector.load %arg7[%c2_83, %c0_84, %c0_85] : memref<3x26x26xf32, #tpu.memory_space<vmem>>, vector<1x24x24xf32>
    %131 = vector.shape_cast %130 : vector<1x24x24xf32> to vector<24x24xf32>
    %132 = vector.broadcast %129 : f32 to vector<24x24xf32>
    %133 = arith.mulf %132, %131 : vector<24x24xf32>
    %134 = arith.addf %128, %133 : vector<24x24xf32>
    %c19 = arith.constant 19 : index
    %135 = memref.load %arg2[%c19] : memref<81xf32, #tpu.memory_space<smem>>
    %c2_86 = arith.constant 2 : index
    %c0_87 = arith.constant 0 : index
    %c1_88 = arith.constant 1 : index
    %136 = vector.load %arg7[%c2_86, %c0_87, %c1_88] : memref<3x26x26xf32, #tpu.memory_space<vmem>>, vector<1x24x24xf32>
    %137 = vector.shape_cast %136 : vector<1x24x24xf32> to vector<24x24xf32>
    %138 = vector.broadcast %135 : f32 to vector<24x24xf32>
    %139 = arith.mulf %138, %137 : vector<24x24xf32>
    %140 = arith.addf %134, %139 : vector<24x24xf32>
    %c20 = arith.constant 20 : index
    %141 = memref.load %arg2[%c20] : memref<81xf32, #tpu.memory_space<smem>>
    %c2_89 = arith.constant 2 : index
    %c0_90 = arith.constant 0 : index
    %c2_91 = arith.constant 2 : index
    %142 = vector.load %arg7[%c2_89, %c0_90, %c2_91] : memref<3x26x26xf32, #tpu.memory_space<vmem>>, vector<1x24x24xf32>
    %143 = vector.shape_cast %142 : vector<1x24x24xf32> to vector<24x24xf32>
    %144 = vector.broadcast %141 : f32 to vector<24x24xf32>
    %145 = arith.mulf %144, %143 : vector<24x24xf32>
    %146 = arith.addf %140, %145 : vector<24x24xf32>
    %c21 = arith.constant 21 : index
    %147 = memref.load %arg2[%c21] : memref<81xf32, #tpu.memory_space<smem>>
    %c2_92 = arith.constant 2 : index
    %c1_93 = arith.constant 1 : index
    %c0_94 = arith.constant 0 : index
    %148 = vector.load %arg7[%c2_92, %c1_93, %c0_94] : memref<3x26x26xf32, #tpu.memory_space<vmem>>, vector<1x24x24xf32>
    %149 = vector.shape_cast %148 : vector<1x24x24xf32> to vector<24x24xf32>
    %150 = vector.broadcast %147 : f32 to vector<24x24xf32>
    %151 = arith.mulf %150, %149 : vector<24x24xf32>
    %152 = arith.addf %146, %151 : vector<24x24xf32>
    %c22 = arith.constant 22 : index
    %153 = memref.load %arg2[%c22] : memref<81xf32, #tpu.memory_space<smem>>
    %c2_95 = arith.constant 2 : index
    %c1_96 = arith.constant 1 : index
    %c1_97 = arith.constant 1 : index
    %154 = vector.load %arg7[%c2_95, %c1_96, %c1_97] : memref<3x26x26xf32, #tpu.memory_space<vmem>>, vector<1x24x24xf32>
    %155 = vector.shape_cast %154 : vector<1x24x24xf32> to vector<24x24xf32>
    %156 = vector.broadcast %153 : f32 to vector<24x24xf32>
    %157 = arith.mulf %156, %155 : vector<24x24xf32>
    %158 = arith.addf %152, %157 : vector<24x24xf32>
    %c23 = arith.constant 23 : index
    %159 = memref.load %arg2[%c23] : memref<81xf32, #tpu.memory_space<smem>>
    %c2_98 = arith.constant 2 : index
    %c1_99 = arith.constant 1 : index
    %c2_100 = arith.constant 2 : index
    %160 = vector.load %arg7[%c2_98, %c1_99, %c2_100] : memref<3x26x26xf32, #tpu.memory_space<vmem>>, vector<1x24x24xf32>
    %161 = vector.shape_cast %160 : vector<1x24x24xf32> to vector<24x24xf32>
    %162 = vector.broadcast %159 : f32 to vector<24x24xf32>
    %163 = arith.mulf %162, %161 : vector<24x24xf32>
    %164 = arith.addf %158, %163 : vector<24x24xf32>
    %c24 = arith.constant 24 : index
    %165 = memref.load %arg2[%c24] : memref<81xf32, #tpu.memory_space<smem>>
    %c2_101 = arith.constant 2 : index
    %c2_102 = arith.constant 2 : index
    %c0_103 = arith.constant 0 : index
    %166 = vector.load %arg7[%c2_101, %c2_102, %c0_103] : memref<3x26x26xf32, #tpu.memory_space<vmem>>, vector<1x24x24xf32>
    %167 = vector.shape_cast %166 : vector<1x24x24xf32> to vector<24x24xf32>
    %168 = vector.broadcast %165 : f32 to vector<24x24xf32>
    %169 = arith.mulf %168, %167 : vector<24x24xf32>
    %170 = arith.addf %164, %169 : vector<24x24xf32>
    %c25 = arith.constant 25 : index
    %171 = memref.load %arg2[%c25] : memref<81xf32, #tpu.memory_space<smem>>
    %c2_104 = arith.constant 2 : index
    %c2_105 = arith.constant 2 : index
    %c1_106 = arith.constant 1 : index
    %172 = vector.load %arg7[%c2_104, %c2_105, %c1_106] : memref<3x26x26xf32, #tpu.memory_space<vmem>>, vector<1x24x24xf32>
    %173 = vector.shape_cast %172 : vector<1x24x24xf32> to vector<24x24xf32>
    %174 = vector.broadcast %171 : f32 to vector<24x24xf32>
    %175 = arith.mulf %174, %173 : vector<24x24xf32>
    %176 = arith.addf %170, %175 : vector<24x24xf32>
    %c26 = arith.constant 26 : index
    %177 = memref.load %arg2[%c26] : memref<81xf32, #tpu.memory_space<smem>>
    %c2_107 = arith.constant 2 : index
    %c2_108 = arith.constant 2 : index
    %c2_109 = arith.constant 2 : index
    %178 = vector.load %arg7[%c2_107, %c2_108, %c2_109] : memref<3x26x26xf32, #tpu.memory_space<vmem>>, vector<1x24x24xf32>
    %179 = vector.shape_cast %178 : vector<1x24x24xf32> to vector<24x24xf32>
    %180 = vector.broadcast %177 : f32 to vector<24x24xf32>
    %181 = arith.mulf %180, %179 : vector<24x24xf32>
    %182 = arith.addf %176, %181 : vector<24x24xf32>
    %c0_110 = arith.constant 0 : index
    %c1_111 = arith.constant 1 : index
    %c1_112 = arith.constant 1 : index
    %183 = vector.load %arg8[%c0_110, %c1_111, %c1_112] : memref<3x26x26xf32, #tpu.memory_space<vmem>>, vector<1x24x24xf32>
    %184 = vector.shape_cast %183 : vector<1x24x24xf32> to vector<24x24xf32>
    %185 = vector.shape_cast %182 : vector<24x24xf32> to vector<1x24x24xf32>
    tpu.vector_store %arg8[%c0_110, %c1_111, %c1_112], %185 {strides = array<i32>} : memref<3x26x26xf32, #tpu.memory_space<vmem>>, vector<1x24x24xf32>,
    %c1_113 = arith.constant 1 : index
    %186 = memref.load %arg3[%c1_113] : memref<3xf32, #tpu.memory_space<smem>>
    %187 = vector.broadcast %186 : f32 to vector<24x24xf32>
    %c27 = arith.constant 27 : index
    %188 = memref.load %arg2[%c27] : memref<81xf32, #tpu.memory_space<smem>>
    %c0_114 = arith.constant 0 : index
    %c0_115 = arith.constant 0 : index
    %c0_116 = arith.constant 0 : index
    %189 = vector.load %arg7[%c0_114, %c0_115, %c0_116] : memref<3x26x26xf32, #tpu.memory_space<vmem>>, vector<1x24x24xf32>
    %190 = vector.shape_cast %189 : vector<1x24x24xf32> to vector<24x24xf32>
    %191 = vector.broadcast %188 : f32 to vector<24x24xf32>
    %192 = arith.mulf %191, %190 : vector<24x24xf32>
    %193 = arith.addf %187, %192 : vector<24x24xf32>
    %c28 = arith.constant 28 : index
    %194 = memref.load %arg2[%c28] : memref<81xf32, #tpu.memory_space<smem>>
    %c0_117 = arith.constant 0 : index
    %c0_118 = arith.constant 0 : index
    %c1_119 = arith.constant 1 : index
    %195 = vector.load %arg7[%c0_117, %c0_118, %c1_119] : memref<3x26x26xf32, #tpu.memory_space<vmem>>, vector<1x24x24xf32>
    %196 = vector.shape_cast %195 : vector<1x24x24xf32> to vector<24x24xf32>
    %197 = vector.broadcast %194 : f32 to vector<24x24xf32>
    %198 = arith.mulf %197, %196 : vector<24x24xf32>
    %199 = arith.addf %193, %198 : vector<24x24xf32>
    %c29 = arith.constant 29 : index
    %200 = memref.load %arg2[%c29] : memref<81xf32, #tpu.memory_space<smem>>
    %c0_120 = arith.constant 0 : index
    %c0_121 = arith.constant 0 : index
    %c2_122 = arith.constant 2 : index
    %201 = vector.load %arg7[%c0_120, %c0_121, %c2_122] : memref<3x26x26xf32, #tpu.memory_space<vmem>>, vector<1x24x24xf32>
    %202 = vector.shape_cast %201 : vector<1x24x24xf32> to vector<24x24xf32>
    %203 = vector.broadcast %200 : f32 to vector<24x24xf32>
    %204 = arith.mulf %203, %202 : vector<24x24xf32>
    %205 = arith.addf %199, %204 : vector<24x24xf32>
    %c30 = arith.constant 30 : index
    %206 = memref.load %arg2[%c30] : memref<81xf32, #tpu.memory_space<smem>>
    %c0_123 = arith.constant 0 : index
    %c1_124 = arith.constant 1 : index
    %c0_125 = arith.constant 0 : index
    %207 = vector.load %arg7[%c0_123, %c1_124, %c0_125] : memref<3x26x26xf32, #tpu.memory_space<vmem>>, vector<1x24x24xf32>
    %208 = vector.shape_cast %207 : vector<1x24x24xf32> to vector<24x24xf32>
    %209 = vector.broadcast %206 : f32 to vector<24x24xf32>
    %210 = arith.mulf %209, %208 : vector<24x24xf32>
    %211 = arith.addf %205, %210 : vector<24x24xf32>
    %c31 = arith.constant 31 : index
    %212 = memref.load %arg2[%c31] : memref<81xf32, #tpu.memory_space<smem>>
    %c0_126 = arith.constant 0 : index
    %c1_127 = arith.constant 1 : index
    %c1_128 = arith.constant 1 : index
    %213 = vector.load %arg7[%c0_126, %c1_127, %c1_128] : memref<3x26x26xf32, #tpu.memory_space<vmem>>, vector<1x24x24xf32>
    %214 = vector.shape_cast %213 : vector<1x24x24xf32> to vector<24x24xf32>
    %215 = vector.broadcast %212 : f32 to vector<24x24xf32>
    %216 = arith.mulf %215, %214 : vector<24x24xf32>
    %217 = arith.addf %211, %216 : vector<24x24xf32>
    %c32 = arith.constant 32 : index
    %218 = memref.load %arg2[%c32] : memref<81xf32, #tpu.memory_space<smem>>
    %c0_129 = arith.constant 0 : index
    %c1_130 = arith.constant 1 : index
    %c2_131 = arith.constant 2 : index
    %219 = vector.load %arg7[%c0_129, %c1_130, %c2_131] : memref<3x26x26xf32, #tpu.memory_space<vmem>>, vector<1x24x24xf32>
    %220 = vector.shape_cast %219 : vector<1x24x24xf32> to vector<24x24xf32>
    %221 = vector.broadcast %218 : f32 to vector<24x24xf32>
    %222 = arith.mulf %221, %220 : vector<24x24xf32>
    %223 = arith.addf %217, %222 : vector<24x24xf32>
    %c33 = arith.constant 33 : index
    %224 = memref.load %arg2[%c33] : memref<81xf32, #tpu.memory_space<smem>>
    %c0_132 = arith.constant 0 : index
    %c2_133 = arith.constant 2 : index
    %c0_134 = arith.constant 0 : index
    %225 = vector.load %arg7[%c0_132, %c2_133, %c0_134] : memref<3x26x26xf32, #tpu.memory_space<vmem>>, vector<1x24x24xf32>
    %226 = vector.shape_cast %225 : vector<1x24x24xf32> to vector<24x24xf32>
    %227 = vector.broadcast %224 : f32 to vector<24x24xf32>
    %228 = arith.mulf %227, %226 : vector<24x24xf32>
    %229 = arith.addf %223, %228 : vector<24x24xf32>
    %c34 = arith.constant 34 : index
    %230 = memref.load %arg2[%c34] : memref<81xf32, #tpu.memory_space<smem>>
    %c0_135 = arith.constant 0 : index
    %c2_136 = arith.constant 2 : index
    %c1_137 = arith.constant 1 : index
    %231 = vector.load %arg7[%c0_135, %c2_136, %c1_137] : memref<3x26x26xf32, #tpu.memory_space<vmem>>, vector<1x24x24xf32>
    %232 = vector.shape_cast %231 : vector<1x24x24xf32> to vector<24x24xf32>
    %233 = vector.broadcast %230 : f32 to vector<24x24xf32>
    %234 = arith.mulf %233, %232 : vector<24x24xf32>
    %235 = arith.addf %229, %234 : vector<24x24xf32>
    %c35 = arith.constant 35 : index
    %236 = memref.load %arg2[%c35] : memref<81xf32, #tpu.memory_space<smem>>
    %c0_138 = arith.constant 0 : index
    %c2_139 = arith.constant 2 : index
    %c2_140 = arith.constant 2 : index
    %237 = vector.load %arg7[%c0_138, %c2_139, %c2_140] : memref<3x26x26xf32, #tpu.memory_space<vmem>>, vector<1x24x24xf32>
    %238 = vector.shape_cast %237 : vector<1x24x24xf32> to vector<24x24xf32>
    %239 = vector.broadcast %236 : f32 to vector<24x24xf32>
    %240 = arith.mulf %239, %238 : vector<24x24xf32>
    %241 = arith.addf %235, %240 : vector<24x24xf32>
    %c36 = arith.constant 36 : index
    %242 = memref.load %arg2[%c36] : memref<81xf32, #tpu.memory_space<smem>>
    %c1_141 = arith.constant 1 : index
    %c0_142 = arith.constant 0 : index
    %c0_143 = arith.constant 0 : index
    %243 = vector.load %arg7[%c1_141, %c0_142, %c0_143] : memref<3x26x26xf32, #tpu.memory_space<vmem>>, vector<1x24x24xf32>
    %244 = vector.shape_cast %243 : vector<1x24x24xf32> to vector<24x24xf32>
    %245 = vector.broadcast %242 : f32 to vector<24x24xf32>
    %246 = arith.mulf %245, %244 : vector<24x24xf32>
    %247 = arith.addf %241, %246 : vector<24x24xf32>
    %c37 = arith.constant 37 : index
    %248 = memref.load %arg2[%c37] : memref<81xf32, #tpu.memory_space<smem>>
    %c1_144 = arith.constant 1 : index
    %c0_145 = arith.constant 0 : index
    %c1_146 = arith.constant 1 : index
    %249 = vector.load %arg7[%c1_144, %c0_145, %c1_146] : memref<3x26x26xf32, #tpu.memory_space<vmem>>, vector<1x24x24xf32>
    %250 = vector.shape_cast %249 : vector<1x24x24xf32> to vector<24x24xf32>
    %251 = vector.broadcast %248 : f32 to vector<24x24xf32>
    %252 = arith.mulf %251, %250 : vector<24x24xf32>
    %253 = arith.addf %247, %252 : vector<24x24xf32>
    %c38 = arith.constant 38 : index
    %254 = memref.load %arg2[%c38] : memref<81xf32, #tpu.memory_space<smem>>
    %c1_147 = arith.constant 1 : index
    %c0_148 = arith.constant 0 : index
    %c2_149 = arith.constant 2 : index
    %255 = vector.load %arg7[%c1_147, %c0_148, %c2_149] : memref<3x26x26xf32, #tpu.memory_space<vmem>>, vector<1x24x24xf32>
    %256 = vector.shape_cast %255 : vector<1x24x24xf32> to vector<24x24xf32>
    %257 = vector.broadcast %254 : f32 to vector<24x24xf32>
    %258 = arith.mulf %257, %256 : vector<24x24xf32>
    %259 = arith.addf %253, %258 : vector<24x24xf32>
    %c39 = arith.constant 39 : index
    %260 = memref.load %arg2[%c39] : memref<81xf32, #tpu.memory_space<smem>>
    %c1_150 = arith.constant 1 : index
    %c1_151 = arith.constant 1 : index
    %c0_152 = arith.constant 0 : index
    %261 = vector.load %arg7[%c1_150, %c1_151, %c0_152] : memref<3x26x26xf32, #tpu.memory_space<vmem>>, vector<1x24x24xf32>
    %262 = vector.shape_cast %261 : vector<1x24x24xf32> to vector<24x24xf32>
    %263 = vector.broadcast %260 : f32 to vector<24x24xf32>
    %264 = arith.mulf %263, %262 : vector<24x24xf32>
    %265 = arith.addf %259, %264 : vector<24x24xf32>
    %c40 = arith.constant 40 : index
    %266 = memref.load %arg2[%c40] : memref<81xf32, #tpu.memory_space<smem>>
    %c1_153 = arith.constant 1 : index
    %c1_154 = arith.constant 1 : index
    %c1_155 = arith.constant 1 : index
    %267 = vector.load %arg7[%c1_153, %c1_154, %c1_155] : memref<3x26x26xf32, #tpu.memory_space<vmem>>, vector<1x24x24xf32>
    %268 = vector.shape_cast %267 : vector<1x24x24xf32> to vector<24x24xf32>
    %269 = vector.broadcast %266 : f32 to vector<24x24xf32>
    %270 = arith.mulf %269, %268 : vector<24x24xf32>
    %271 = arith.addf %265, %270 : vector<24x24xf32>
    %c41 = arith.constant 41 : index
    %272 = memref.load %arg2[%c41] : memref<81xf32, #tpu.memory_space<smem>>
    %c1_156 = arith.constant 1 : index
    %c1_157 = arith.constant 1 : index
    %c2_158 = arith.constant 2 : index
    %273 = vector.load %arg7[%c1_156, %c1_157, %c2_158] : memref<3x26x26xf32, #tpu.memory_space<vmem>>, vector<1x24x24xf32>
    %274 = vector.shape_cast %273 : vector<1x24x24xf32> to vector<24x24xf32>
    %275 = vector.broadcast %272 : f32 to vector<24x24xf32>
    %276 = arith.mulf %275, %274 : vector<24x24xf32>
    %277 = arith.addf %271, %276 : vector<24x24xf32>
    %c42 = arith.constant 42 : index
    %278 = memref.load %arg2[%c42] : memref<81xf32, #tpu.memory_space<smem>>
    %c1_159 = arith.constant 1 : index
    %c2_160 = arith.constant 2 : index
    %c0_161 = arith.constant 0 : index
    %279 = vector.load %arg7[%c1_159, %c2_160, %c0_161] : memref<3x26x26xf32, #tpu.memory_space<vmem>>, vector<1x24x24xf32>
    %280 = vector.shape_cast %279 : vector<1x24x24xf32> to vector<24x24xf32>
    %281 = vector.broadcast %278 : f32 to vector<24x24xf32>
    %282 = arith.mulf %281, %280 : vector<24x24xf32>
    %283 = arith.addf %277, %282 : vector<24x24xf32>
    %c43 = arith.constant 43 : index
    %284 = memref.load %arg2[%c43] : memref<81xf32, #tpu.memory_space<smem>>
    %c1_162 = arith.constant 1 : index
    %c2_163 = arith.constant 2 : index
    %c1_164 = arith.constant 1 : index
    %285 = vector.load %arg7[%c1_162, %c2_163, %c1_164] : memref<3x26x26xf32, #tpu.memory_space<vmem>>, vector<1x24x24xf32>
    %286 = vector.shape_cast %285 : vector<1x24x24xf32> to vector<24x24xf32>
    %287 = vector.broadcast %284 : f32 to vector<24x24xf32>
    %288 = arith.mulf %287, %286 : vector<24x24xf32>
    %289 = arith.addf %283, %288 : vector<24x24xf32>
    %c44 = arith.constant 44 : index
    %290 = memref.load %arg2[%c44] : memref<81xf32, #tpu.memory_space<smem>>
    %c1_165 = arith.constant 1 : index
    %c2_166 = arith.constant 2 : index
    %c2_167 = arith.constant 2 : index
    %291 = vector.load %arg7[%c1_165, %c2_166, %c2_167] : memref<3x26x26xf32, #tpu.memory_space<vmem>>, vector<1x24x24xf32>
    %292 = vector.shape_cast %291 : vector<1x24x24xf32> to vector<24x24xf32>
    %293 = vector.broadcast %290 : f32 to vector<24x24xf32>
    %294 = arith.mulf %293, %292 : vector<24x24xf32>
    %295 = arith.addf %289, %294 : vector<24x24xf32>
    %c45 = arith.constant 45 : index
    %296 = memref.load %arg2[%c45] : memref<81xf32, #tpu.memory_space<smem>>
    %c2_168 = arith.constant 2 : index
    %c0_169 = arith.constant 0 : index
    %c0_170 = arith.constant 0 : index
    %297 = vector.load %arg7[%c2_168, %c0_169, %c0_170] : memref<3x26x26xf32, #tpu.memory_space<vmem>>, vector<1x24x24xf32>
    %298 = vector.shape_cast %297 : vector<1x24x24xf32> to vector<24x24xf32>
    %299 = vector.broadcast %296 : f32 to vector<24x24xf32>
    %300 = arith.mulf %299, %298 : vector<24x24xf32>
    %301 = arith.addf %295, %300 : vector<24x24xf32>
    %c46 = arith.constant 46 : index
    %302 = memref.load %arg2[%c46] : memref<81xf32, #tpu.memory_space<smem>>
    %c2_171 = arith.constant 2 : index
    %c0_172 = arith.constant 0 : index
    %c1_173 = arith.constant 1 : index
    %303 = vector.load %arg7[%c2_171, %c0_172, %c1_173] : memref<3x26x26xf32, #tpu.memory_space<vmem>>, vector<1x24x24xf32>
    %304 = vector.shape_cast %303 : vector<1x24x24xf32> to vector<24x24xf32>
    %305 = vector.broadcast %302 : f32 to vector<24x24xf32>
    %306 = arith.mulf %305, %304 : vector<24x24xf32>
    %307 = arith.addf %301, %306 : vector<24x24xf32>
    %c47 = arith.constant 47 : index
    %308 = memref.load %arg2[%c47] : memref<81xf32, #tpu.memory_space<smem>>
    %c2_174 = arith.constant 2 : index
    %c0_175 = arith.constant 0 : index
    %c2_176 = arith.constant 2 : index
    %309 = vector.load %arg7[%c2_174, %c0_175, %c2_176] : memref<3x26x26xf32, #tpu.memory_space<vmem>>, vector<1x24x24xf32>
    %310 = vector.shape_cast %309 : vector<1x24x24xf32> to vector<24x24xf32>
    %311 = vector.broadcast %308 : f32 to vector<24x24xf32>
    %312 = arith.mulf %311, %310 : vector<24x24xf32>
    %313 = arith.addf %307, %312 : vector<24x24xf32>
    %c48 = arith.constant 48 : index
    %314 = memref.load %arg2[%c48] : memref<81xf32, #tpu.memory_space<smem>>
    %c2_177 = arith.constant 2 : index
    %c1_178 = arith.constant 1 : index
    %c0_179 = arith.constant 0 : index
    %315 = vector.load %arg7[%c2_177, %c1_178, %c0_179] : memref<3x26x26xf32, #tpu.memory_space<vmem>>, vector<1x24x24xf32>
    %316 = vector.shape_cast %315 : vector<1x24x24xf32> to vector<24x24xf32>
    %317 = vector.broadcast %314 : f32 to vector<24x24xf32>
    %318 = arith.mulf %317, %316 : vector<24x24xf32>
    %319 = arith.addf %313, %318 : vector<24x24xf32>
    %c49 = arith.constant 49 : index
    %320 = memref.load %arg2[%c49] : memref<81xf32, #tpu.memory_space<smem>>
    %c2_180 = arith.constant 2 : index
    %c1_181 = arith.constant 1 : index
    %c1_182 = arith.constant 1 : index
    %321 = vector.load %arg7[%c2_180, %c1_181, %c1_182] : memref<3x26x26xf32, #tpu.memory_space<vmem>>, vector<1x24x24xf32>
    %322 = vector.shape_cast %321 : vector<1x24x24xf32> to vector<24x24xf32>
    %323 = vector.broadcast %320 : f32 to vector<24x24xf32>
    %324 = arith.mulf %323, %322 : vector<24x24xf32>
    %325 = arith.addf %319, %324 : vector<24x24xf32>
    %c50 = arith.constant 50 : index
    %326 = memref.load %arg2[%c50] : memref<81xf32, #tpu.memory_space<smem>>
    %c2_183 = arith.constant 2 : index
    %c1_184 = arith.constant 1 : index
    %c2_185 = arith.constant 2 : index
    %327 = vector.load %arg7[%c2_183, %c1_184, %c2_185] : memref<3x26x26xf32, #tpu.memory_space<vmem>>, vector<1x24x24xf32>
    %328 = vector.shape_cast %327 : vector<1x24x24xf32> to vector<24x24xf32>
    %329 = vector.broadcast %326 : f32 to vector<24x24xf32>
    %330 = arith.mulf %329, %328 : vector<24x24xf32>
    %331 = arith.addf %325, %330 : vector<24x24xf32>
    %c51 = arith.constant 51 : index
    %332 = memref.load %arg2[%c51] : memref<81xf32, #tpu.memory_space<smem>>
    %c2_186 = arith.constant 2 : index
    %c2_187 = arith.constant 2 : index
    %c0_188 = arith.constant 0 : index
    %333 = vector.load %arg7[%c2_186, %c2_187, %c0_188] : memref<3x26x26xf32, #tpu.memory_space<vmem>>, vector<1x24x24xf32>
    %334 = vector.shape_cast %333 : vector<1x24x24xf32> to vector<24x24xf32>
    %335 = vector.broadcast %332 : f32 to vector<24x24xf32>
    %336 = arith.mulf %335, %334 : vector<24x24xf32>
    %337 = arith.addf %331, %336 : vector<24x24xf32>
    %c52 = arith.constant 52 : index
    %338 = memref.load %arg2[%c52] : memref<81xf32, #tpu.memory_space<smem>>
    %c2_189 = arith.constant 2 : index
    %c2_190 = arith.constant 2 : index
    %c1_191 = arith.constant 1 : index
    %339 = vector.load %arg7[%c2_189, %c2_190, %c1_191] : memref<3x26x26xf32, #tpu.memory_space<vmem>>, vector<1x24x24xf32>
    %340 = vector.shape_cast %339 : vector<1x24x24xf32> to vector<24x24xf32>
    %341 = vector.broadcast %338 : f32 to vector<24x24xf32>
    %342 = arith.mulf %341, %340 : vector<24x24xf32>
    %343 = arith.addf %337, %342 : vector<24x24xf32>
    %c53 = arith.constant 53 : index
    %344 = memref.load %arg2[%c53] : memref<81xf32, #tpu.memory_space<smem>>
    %c2_192 = arith.constant 2 : index
    %c2_193 = arith.constant 2 : index
    %c2_194 = arith.constant 2 : index
    %345 = vector.load %arg7[%c2_192, %c2_193, %c2_194] : memref<3x26x26xf32, #tpu.memory_space<vmem>>, vector<1x24x24xf32>
    %346 = vector.shape_cast %345 : vector<1x24x24xf32> to vector<24x24xf32>
    %347 = vector.broadcast %344 : f32 to vector<24x24xf32>
    %348 = arith.mulf %347, %346 : vector<24x24xf32>
    %349 = arith.addf %343, %348 : vector<24x24xf32>
    %c1_195 = arith.constant 1 : index
    %c1_196 = arith.constant 1 : index
    %c1_197 = arith.constant 1 : index
    %350 = vector.load %arg8[%c1_195, %c1_196, %c1_197] : memref<3x26x26xf32, #tpu.memory_space<vmem>>, vector<1x24x24xf32>
    %351 = vector.shape_cast %350 : vector<1x24x24xf32> to vector<24x24xf32>
    %352 = vector.shape_cast %349 : vector<24x24xf32> to vector<1x24x24xf32>
    tpu.vector_store %arg8[%c1_195, %c1_196, %c1_197], %352 {strides = array<i32>} : memref<3x26x26xf32, #tpu.memory_space<vmem>>, vector<1x24x24xf32>,
    %c2_198 = arith.constant 2 : index
    %353 = memref.load %arg3[%c2_198] : memref<3xf32, #tpu.memory_space<smem>>
    %354 = vector.broadcast %353 : f32 to vector<24x24xf32>
    %c54 = arith.constant 54 : index
    %355 = memref.load %arg2[%c54] : memref<81xf32, #tpu.memory_space<smem>>
    %c0_199 = arith.constant 0 : index
    %c0_200 = arith.constant 0 : index
    %c0_201 = arith.constant 0 : index
    %356 = vector.load %arg7[%c0_199, %c0_200, %c0_201] : memref<3x26x26xf32, #tpu.memory_space<vmem>>, vector<1x24x24xf32>
    %357 = vector.shape_cast %356 : vector<1x24x24xf32> to vector<24x24xf32>
    %358 = vector.broadcast %355 : f32 to vector<24x24xf32>
    %359 = arith.mulf %358, %357 : vector<24x24xf32>
    %360 = arith.addf %354, %359 : vector<24x24xf32>
    %c55 = arith.constant 55 : index
    %361 = memref.load %arg2[%c55] : memref<81xf32, #tpu.memory_space<smem>>
    %c0_202 = arith.constant 0 : index
    %c0_203 = arith.constant 0 : index
    %c1_204 = arith.constant 1 : index
    %362 = vector.load %arg7[%c0_202, %c0_203, %c1_204] : memref<3x26x26xf32, #tpu.memory_space<vmem>>, vector<1x24x24xf32>
    %363 = vector.shape_cast %362 : vector<1x24x24xf32> to vector<24x24xf32>
    %364 = vector.broadcast %361 : f32 to vector<24x24xf32>
    %365 = arith.mulf %364, %363 : vector<24x24xf32>
    %366 = arith.addf %360, %365 : vector<24x24xf32>
    %c56 = arith.constant 56 : index
    %367 = memref.load %arg2[%c56] : memref<81xf32, #tpu.memory_space<smem>>
    %c0_205 = arith.constant 0 : index
    %c0_206 = arith.constant 0 : index
    %c2_207 = arith.constant 2 : index
    %368 = vector.load %arg7[%c0_205, %c0_206, %c2_207] : memref<3x26x26xf32, #tpu.memory_space<vmem>>, vector<1x24x24xf32>
    %369 = vector.shape_cast %368 : vector<1x24x24xf32> to vector<24x24xf32>
    %370 = vector.broadcast %367 : f32 to vector<24x24xf32>
    %371 = arith.mulf %370, %369 : vector<24x24xf32>
    %372 = arith.addf %366, %371 : vector<24x24xf32>
    %c57 = arith.constant 57 : index
    %373 = memref.load %arg2[%c57] : memref<81xf32, #tpu.memory_space<smem>>
    %c0_208 = arith.constant 0 : index
    %c1_209 = arith.constant 1 : index
    %c0_210 = arith.constant 0 : index
    %374 = vector.load %arg7[%c0_208, %c1_209, %c0_210] : memref<3x26x26xf32, #tpu.memory_space<vmem>>, vector<1x24x24xf32>
    %375 = vector.shape_cast %374 : vector<1x24x24xf32> to vector<24x24xf32>
    %376 = vector.broadcast %373 : f32 to vector<24x24xf32>
    %377 = arith.mulf %376, %375 : vector<24x24xf32>
    %378 = arith.addf %372, %377 : vector<24x24xf32>
    %c58 = arith.constant 58 : index
    %379 = memref.load %arg2[%c58] : memref<81xf32, #tpu.memory_space<smem>>
    %c0_211 = arith.constant 0 : index
    %c1_212 = arith.constant 1 : index
    %c1_213 = arith.constant 1 : index
    %380 = vector.load %arg7[%c0_211, %c1_212, %c1_213] : memref<3x26x26xf32, #tpu.memory_space<vmem>>, vector<1x24x24xf32>
    %381 = vector.shape_cast %380 : vector<1x24x24xf32> to vector<24x24xf32>
    %382 = vector.broadcast %379 : f32 to vector<24x24xf32>
    %383 = arith.mulf %382, %381 : vector<24x24xf32>
    %384 = arith.addf %378, %383 : vector<24x24xf32>
    %c59 = arith.constant 59 : index
    %385 = memref.load %arg2[%c59] : memref<81xf32, #tpu.memory_space<smem>>
    %c0_214 = arith.constant 0 : index
    %c1_215 = arith.constant 1 : index
    %c2_216 = arith.constant 2 : index
    %386 = vector.load %arg7[%c0_214, %c1_215, %c2_216] : memref<3x26x26xf32, #tpu.memory_space<vmem>>, vector<1x24x24xf32>
    %387 = vector.shape_cast %386 : vector<1x24x24xf32> to vector<24x24xf32>
    %388 = vector.broadcast %385 : f32 to vector<24x24xf32>
    %389 = arith.mulf %388, %387 : vector<24x24xf32>
    %390 = arith.addf %384, %389 : vector<24x24xf32>
    %c60 = arith.constant 60 : index
    %391 = memref.load %arg2[%c60] : memref<81xf32, #tpu.memory_space<smem>>
    %c0_217 = arith.constant 0 : index
    %c2_218 = arith.constant 2 : index
    %c0_219 = arith.constant 0 : index
    %392 = vector.load %arg7[%c0_217, %c2_218, %c0_219] : memref<3x26x26xf32, #tpu.memory_space<vmem>>, vector<1x24x24xf32>
    %393 = vector.shape_cast %392 : vector<1x24x24xf32> to vector<24x24xf32>
    %394 = vector.broadcast %391 : f32 to vector<24x24xf32>
    %395 = arith.mulf %394, %393 : vector<24x24xf32>
    %396 = arith.addf %390, %395 : vector<24x24xf32>
    %c61 = arith.constant 61 : index
    %397 = memref.load %arg2[%c61] : memref<81xf32, #tpu.memory_space<smem>>
    %c0_220 = arith.constant 0 : index
    %c2_221 = arith.constant 2 : index
    %c1_222 = arith.constant 1 : index
    %398 = vector.load %arg7[%c0_220, %c2_221, %c1_222] : memref<3x26x26xf32, #tpu.memory_space<vmem>>, vector<1x24x24xf32>
    %399 = vector.shape_cast %398 : vector<1x24x24xf32> to vector<24x24xf32>
    %400 = vector.broadcast %397 : f32 to vector<24x24xf32>
    %401 = arith.mulf %400, %399 : vector<24x24xf32>
    %402 = arith.addf %396, %401 : vector<24x24xf32>
    %c62 = arith.constant 62 : index
    %403 = memref.load %arg2[%c62] : memref<81xf32, #tpu.memory_space<smem>>
    %c0_223 = arith.constant 0 : index
    %c2_224 = arith.constant 2 : index
    %c2_225 = arith.constant 2 : index
    %404 = vector.load %arg7[%c0_223, %c2_224, %c2_225] : memref<3x26x26xf32, #tpu.memory_space<vmem>>, vector<1x24x24xf32>
    %405 = vector.shape_cast %404 : vector<1x24x24xf32> to vector<24x24xf32>
    %406 = vector.broadcast %403 : f32 to vector<24x24xf32>
    %407 = arith.mulf %406, %405 : vector<24x24xf32>
    %408 = arith.addf %402, %407 : vector<24x24xf32>
    %c63 = arith.constant 63 : index
    %409 = memref.load %arg2[%c63] : memref<81xf32, #tpu.memory_space<smem>>
    %c1_226 = arith.constant 1 : index
    %c0_227 = arith.constant 0 : index
    %c0_228 = arith.constant 0 : index
    %410 = vector.load %arg7[%c1_226, %c0_227, %c0_228] : memref<3x26x26xf32, #tpu.memory_space<vmem>>, vector<1x24x24xf32>
    %411 = vector.shape_cast %410 : vector<1x24x24xf32> to vector<24x24xf32>
    %412 = vector.broadcast %409 : f32 to vector<24x24xf32>
    %413 = arith.mulf %412, %411 : vector<24x24xf32>
    %414 = arith.addf %408, %413 : vector<24x24xf32>
    %c64 = arith.constant 64 : index
    %415 = memref.load %arg2[%c64] : memref<81xf32, #tpu.memory_space<smem>>
    %c1_229 = arith.constant 1 : index
    %c0_230 = arith.constant 0 : index
    %c1_231 = arith.constant 1 : index
    %416 = vector.load %arg7[%c1_229, %c0_230, %c1_231] : memref<3x26x26xf32, #tpu.memory_space<vmem>>, vector<1x24x24xf32>
    %417 = vector.shape_cast %416 : vector<1x24x24xf32> to vector<24x24xf32>
    %418 = vector.broadcast %415 : f32 to vector<24x24xf32>
    %419 = arith.mulf %418, %417 : vector<24x24xf32>
    %420 = arith.addf %414, %419 : vector<24x24xf32>
    %c65 = arith.constant 65 : index
    %421 = memref.load %arg2[%c65] : memref<81xf32, #tpu.memory_space<smem>>
    %c1_232 = arith.constant 1 : index
    %c0_233 = arith.constant 0 : index
    %c2_234 = arith.constant 2 : index
    %422 = vector.load %arg7[%c1_232, %c0_233, %c2_234] : memref<3x26x26xf32, #tpu.memory_space<vmem>>, vector<1x24x24xf32>
    %423 = vector.shape_cast %422 : vector<1x24x24xf32> to vector<24x24xf32>
    %424 = vector.broadcast %421 : f32 to vector<24x24xf32>
    %425 = arith.mulf %424, %423 : vector<24x24xf32>
    %426 = arith.addf %420, %425 : vector<24x24xf32>
    %c66 = arith.constant 66 : index
    %427 = memref.load %arg2[%c66] : memref<81xf32, #tpu.memory_space<smem>>
    %c1_235 = arith.constant 1 : index
    %c1_236 = arith.constant 1 : index
    %c0_237 = arith.constant 0 : index
    %428 = vector.load %arg7[%c1_235, %c1_236, %c0_237] : memref<3x26x26xf32, #tpu.memory_space<vmem>>, vector<1x24x24xf32>
    %429 = vector.shape_cast %428 : vector<1x24x24xf32> to vector<24x24xf32>
    %430 = vector.broadcast %427 : f32 to vector<24x24xf32>
    %431 = arith.mulf %430, %429 : vector<24x24xf32>
    %432 = arith.addf %426, %431 : vector<24x24xf32>
    %c67 = arith.constant 67 : index
    %433 = memref.load %arg2[%c67] : memref<81xf32, #tpu.memory_space<smem>>
    %c1_238 = arith.constant 1 : index
    %c1_239 = arith.constant 1 : index
    %c1_240 = arith.constant 1 : index
    %434 = vector.load %arg7[%c1_238, %c1_239, %c1_240] : memref<3x26x26xf32, #tpu.memory_space<vmem>>, vector<1x24x24xf32>
    %435 = vector.shape_cast %434 : vector<1x24x24xf32> to vector<24x24xf32>
    %436 = vector.broadcast %433 : f32 to vector<24x24xf32>
    %437 = arith.mulf %436, %435 : vector<24x24xf32>
    %438 = arith.addf %432, %437 : vector<24x24xf32>
    %c68 = arith.constant 68 : index
    %439 = memref.load %arg2[%c68] : memref<81xf32, #tpu.memory_space<smem>>
    %c1_241 = arith.constant 1 : index
    %c1_242 = arith.constant 1 : index
    %c2_243 = arith.constant 2 : index
    %440 = vector.load %arg7[%c1_241, %c1_242, %c2_243] : memref<3x26x26xf32, #tpu.memory_space<vmem>>, vector<1x24x24xf32>
    %441 = vector.shape_cast %440 : vector<1x24x24xf32> to vector<24x24xf32>
    %442 = vector.broadcast %439 : f32 to vector<24x24xf32>
    %443 = arith.mulf %442, %441 : vector<24x24xf32>
    %444 = arith.addf %438, %443 : vector<24x24xf32>
    %c69 = arith.constant 69 : index
    %445 = memref.load %arg2[%c69] : memref<81xf32, #tpu.memory_space<smem>>
    %c1_244 = arith.constant 1 : index
    %c2_245 = arith.constant 2 : index
    %c0_246 = arith.constant 0 : index
    %446 = vector.load %arg7[%c1_244, %c2_245, %c0_246] : memref<3x26x26xf32, #tpu.memory_space<vmem>>, vector<1x24x24xf32>
    %447 = vector.shape_cast %446 : vector<1x24x24xf32> to vector<24x24xf32>
    %448 = vector.broadcast %445 : f32 to vector<24x24xf32>
    %449 = arith.mulf %448, %447 : vector<24x24xf32>
    %450 = arith.addf %444, %449 : vector<24x24xf32>
    %c70 = arith.constant 70 : index
    %451 = memref.load %arg2[%c70] : memref<81xf32, #tpu.memory_space<smem>>
    %c1_247 = arith.constant 1 : index
    %c2_248 = arith.constant 2 : index
    %c1_249 = arith.constant 1 : index
    %452 = vector.load %arg7[%c1_247, %c2_248, %c1_249] : memref<3x26x26xf32, #tpu.memory_space<vmem>>, vector<1x24x24xf32>
    %453 = vector.shape_cast %452 : vector<1x24x24xf32> to vector<24x24xf32>
    %454 = vector.broadcast %451 : f32 to vector<24x24xf32>
    %455 = arith.mulf %454, %453 : vector<24x24xf32>
    %456 = arith.addf %450, %455 : vector<24x24xf32>
    %c71 = arith.constant 71 : index
    %457 = memref.load %arg2[%c71] : memref<81xf32, #tpu.memory_space<smem>>
    %c1_250 = arith.constant 1 : index
    %c2_251 = arith.constant 2 : index
    %c2_252 = arith.constant 2 : index
    %458 = vector.load %arg7[%c1_250, %c2_251, %c2_252] : memref<3x26x26xf32, #tpu.memory_space<vmem>>, vector<1x24x24xf32>
    %459 = vector.shape_cast %458 : vector<1x24x24xf32> to vector<24x24xf32>
    %460 = vector.broadcast %457 : f32 to vector<24x24xf32>
    %461 = arith.mulf %460, %459 : vector<24x24xf32>
    %462 = arith.addf %456, %461 : vector<24x24xf32>
    %c72 = arith.constant 72 : index
    %463 = memref.load %arg2[%c72] : memref<81xf32, #tpu.memory_space<smem>>
    %c2_253 = arith.constant 2 : index
    %c0_254 = arith.constant 0 : index
    %c0_255 = arith.constant 0 : index
    %464 = vector.load %arg7[%c2_253, %c0_254, %c0_255] : memref<3x26x26xf32, #tpu.memory_space<vmem>>, vector<1x24x24xf32>
    %465 = vector.shape_cast %464 : vector<1x24x24xf32> to vector<24x24xf32>
    %466 = vector.broadcast %463 : f32 to vector<24x24xf32>
    %467 = arith.mulf %466, %465 : vector<24x24xf32>
    %468 = arith.addf %462, %467 : vector<24x24xf32>
    %c73 = arith.constant 73 : index
    %469 = memref.load %arg2[%c73] : memref<81xf32, #tpu.memory_space<smem>>
    %c2_256 = arith.constant 2 : index
    %c0_257 = arith.constant 0 : index
    %c1_258 = arith.constant 1 : index
    %470 = vector.load %arg7[%c2_256, %c0_257, %c1_258] : memref<3x26x26xf32, #tpu.memory_space<vmem>>, vector<1x24x24xf32>
    %471 = vector.shape_cast %470 : vector<1x24x24xf32> to vector<24x24xf32>
    %472 = vector.broadcast %469 : f32 to vector<24x24xf32>
    %473 = arith.mulf %472, %471 : vector<24x24xf32>
    %474 = arith.addf %468, %473 : vector<24x24xf32>
    %c74 = arith.constant 74 : index
    %475 = memref.load %arg2[%c74] : memref<81xf32, #tpu.memory_space<smem>>
    %c2_259 = arith.constant 2 : index
    %c0_260 = arith.constant 0 : index
    %c2_261 = arith.constant 2 : index
    %476 = vector.load %arg7[%c2_259, %c0_260, %c2_261] : memref<3x26x26xf32, #tpu.memory_space<vmem>>, vector<1x24x24xf32>
    %477 = vector.shape_cast %476 : vector<1x24x24xf32> to vector<24x24xf32>
    %478 = vector.broadcast %475 : f32 to vector<24x24xf32>
    %479 = arith.mulf %478, %477 : vector<24x24xf32>
    %480 = arith.addf %474, %479 : vector<24x24xf32>
    %c75 = arith.constant 75 : index
    %481 = memref.load %arg2[%c75] : memref<81xf32, #tpu.memory_space<smem>>
    %c2_262 = arith.constant 2 : index
    %c1_263 = arith.constant 1 : index
    %c0_264 = arith.constant 0 : index
    %482 = vector.load %arg7[%c2_262, %c1_263, %c0_264] : memref<3x26x26xf32, #tpu.memory_space<vmem>>, vector<1x24x24xf32>
    %483 = vector.shape_cast %482 : vector<1x24x24xf32> to vector<24x24xf32>
    %484 = vector.broadcast %481 : f32 to vector<24x24xf32>
    %485 = arith.mulf %484, %483 : vector<24x24xf32>
    %486 = arith.addf %480, %485 : vector<24x24xf32>
    %c76 = arith.constant 76 : index
    %487 = memref.load %arg2[%c76] : memref<81xf32, #tpu.memory_space<smem>>
    %c2_265 = arith.constant 2 : index
    %c1_266 = arith.constant 1 : index
    %c1_267 = arith.constant 1 : index
    %488 = vector.load %arg7[%c2_265, %c1_266, %c1_267] : memref<3x26x26xf32, #tpu.memory_space<vmem>>, vector<1x24x24xf32>
    %489 = vector.shape_cast %488 : vector<1x24x24xf32> to vector<24x24xf32>
    %490 = vector.broadcast %487 : f32 to vector<24x24xf32>
    %491 = arith.mulf %490, %489 : vector<24x24xf32>
    %492 = arith.addf %486, %491 : vector<24x24xf32>
    %c77 = arith.constant 77 : index
    %493 = memref.load %arg2[%c77] : memref<81xf32, #tpu.memory_space<smem>>
    %c2_268 = arith.constant 2 : index
    %c1_269 = arith.constant 1 : index
    %c2_270 = arith.constant 2 : index
    %494 = vector.load %arg7[%c2_268, %c1_269, %c2_270] : memref<3x26x26xf32, #tpu.memory_space<vmem>>, vector<1x24x24xf32>
    %495 = vector.shape_cast %494 : vector<1x24x24xf32> to vector<24x24xf32>
    %496 = vector.broadcast %493 : f32 to vector<24x24xf32>
    %497 = arith.mulf %496, %495 : vector<24x24xf32>
    %498 = arith.addf %492, %497 : vector<24x24xf32>
    %c78 = arith.constant 78 : index
    %499 = memref.load %arg2[%c78] : memref<81xf32, #tpu.memory_space<smem>>
    %c2_271 = arith.constant 2 : index
    %c2_272 = arith.constant 2 : index
    %c0_273 = arith.constant 0 : index
    %500 = vector.load %arg7[%c2_271, %c2_272, %c0_273] : memref<3x26x26xf32, #tpu.memory_space<vmem>>, vector<1x24x24xf32>
    %501 = vector.shape_cast %500 : vector<1x24x24xf32> to vector<24x24xf32>
    %502 = vector.broadcast %499 : f32 to vector<24x24xf32>
    %503 = arith.mulf %502, %501 : vector<24x24xf32>
    %504 = arith.addf %498, %503 : vector<24x24xf32>
    %c79 = arith.constant 79 : index
    %505 = memref.load %arg2[%c79] : memref<81xf32, #tpu.memory_space<smem>>
    %c2_274 = arith.constant 2 : index
    %c2_275 = arith.constant 2 : index
    %c1_276 = arith.constant 1 : index
    %506 = vector.load %arg7[%c2_274, %c2_275, %c1_276] : memref<3x26x26xf32, #tpu.memory_space<vmem>>, vector<1x24x24xf32>
    %507 = vector.shape_cast %506 : vector<1x24x24xf32> to vector<24x24xf32>
    %508 = vector.broadcast %505 : f32 to vector<24x24xf32>
    %509 = arith.mulf %508, %507 : vector<24x24xf32>
    %510 = arith.addf %504, %509 : vector<24x24xf32>
    %c80 = arith.constant 80 : index
    %511 = memref.load %arg2[%c80] : memref<81xf32, #tpu.memory_space<smem>>
    %c2_277 = arith.constant 2 : index
    %c2_278 = arith.constant 2 : index
    %c2_279 = arith.constant 2 : index
    %512 = vector.load %arg7[%c2_277, %c2_278, %c2_279] : memref<3x26x26xf32, #tpu.memory_space<vmem>>, vector<1x24x24xf32>
    %513 = vector.shape_cast %512 : vector<1x24x24xf32> to vector<24x24xf32>
    %514 = vector.broadcast %511 : f32 to vector<24x24xf32>
    %515 = arith.mulf %514, %513 : vector<24x24xf32>
    %516 = arith.addf %510, %515 : vector<24x24xf32>
    %c2_280 = arith.constant 2 : index
    %c1_281 = arith.constant 1 : index
    %c1_282 = arith.constant 1 : index
    %517 = vector.load %arg8[%c2_280, %c1_281, %c1_282] : memref<3x26x26xf32, #tpu.memory_space<vmem>>, vector<1x24x24xf32>
    %518 = vector.shape_cast %517 : vector<1x24x24xf32> to vector<24x24xf32>
    %519 = vector.shape_cast %516 : vector<24x24xf32> to vector<1x24x24xf32>
    tpu.vector_store %arg8[%c2_280, %c1_281, %c1_282], %519 {strides = array<i32>} : memref<3x26x26xf32, #tpu.memory_space<vmem>>, vector<1x24x24xf32>,
    %c0_283 = arith.constant 0 : index
    %520 = memref.load %arg5[%c0_283] : memref<3xf32, #tpu.memory_space<smem>>
    %521 = vector.broadcast %520 : f32 to vector<16x16xf32>
    %c0_284 = arith.constant 0 : index
    %522 = memref.load %arg4[%c0_284] : memref<81xf32, #tpu.memory_space<smem>>
    %c0_285 = arith.constant 0 : index
    %c4_286 = arith.constant 4 : index
    %c4_287 = arith.constant 4 : index
    %523 = vector.load %arg8[%c0_285, %c4_286, %c4_287] : memref<3x26x26xf32, #tpu.memory_space<vmem>>, vector<1x16x16xf32>
    %524 = vector.shape_cast %523 : vector<1x16x16xf32> to vector<16x16xf32>
    %525 = vector.broadcast %522 : f32 to vector<16x16xf32>
    %526 = arith.mulf %525, %524 : vector<16x16xf32>
    %527 = arith.addf %521, %526 : vector<16x16xf32>
    %c1_288 = arith.constant 1 : index
    %528 = memref.load %arg4[%c1_288] : memref<81xf32, #tpu.memory_space<smem>>
    %c0_289 = arith.constant 0 : index
    %c4_290 = arith.constant 4 : index
    %c5_291 = arith.constant 5 : index
    %529 = vector.load %arg8[%c0_289, %c4_290, %c5_291] : memref<3x26x26xf32, #tpu.memory_space<vmem>>, vector<1x16x16xf32>
    %530 = vector.shape_cast %529 : vector<1x16x16xf32> to vector<16x16xf32>
    %531 = vector.broadcast %528 : f32 to vector<16x16xf32>
    %532 = arith.mulf %531, %530 : vector<16x16xf32>
    %533 = arith.addf %527, %532 : vector<16x16xf32>
    %c2_292 = arith.constant 2 : index
    %534 = memref.load %arg4[%c2_292] : memref<81xf32, #tpu.memory_space<smem>>
    %c0_293 = arith.constant 0 : index
    %c4_294 = arith.constant 4 : index
    %c6_295 = arith.constant 6 : index
    %535 = vector.load %arg8[%c0_293, %c4_294, %c6_295] : memref<3x26x26xf32, #tpu.memory_space<vmem>>, vector<1x16x16xf32>
    %536 = vector.shape_cast %535 : vector<1x16x16xf32> to vector<16x16xf32>
    %537 = vector.broadcast %534 : f32 to vector<16x16xf32>
    %538 = arith.mulf %537, %536 : vector<16x16xf32>
    %539 = arith.addf %533, %538 : vector<16x16xf32>
    %c3_296 = arith.constant 3 : index
    %540 = memref.load %arg4[%c3_296] : memref<81xf32, #tpu.memory_space<smem>>
    %c0_297 = arith.constant 0 : index
    %c5_298 = arith.constant 5 : index
    %c4_299 = arith.constant 4 : index
    %541 = vector.load %arg8[%c0_297, %c5_298, %c4_299] : memref<3x26x26xf32, #tpu.memory_space<vmem>>, vector<1x16x16xf32>
    %542 = vector.shape_cast %541 : vector<1x16x16xf32> to vector<16x16xf32>
    %543 = vector.broadcast %540 : f32 to vector<16x16xf32>
    %544 = arith.mulf %543, %542 : vector<16x16xf32>
    %545 = arith.addf %539, %544 : vector<16x16xf32>
    %c4_300 = arith.constant 4 : index
    %546 = memref.load %arg4[%c4_300] : memref<81xf32, #tpu.memory_space<smem>>
    %c0_301 = arith.constant 0 : index
    %c5_302 = arith.constant 5 : index
    %c5_303 = arith.constant 5 : index
    %547 = vector.load %arg8[%c0_301, %c5_302, %c5_303] : memref<3x26x26xf32, #tpu.memory_space<vmem>>, vector<1x16x16xf32>
    %548 = vector.shape_cast %547 : vector<1x16x16xf32> to vector<16x16xf32>
    %549 = vector.broadcast %546 : f32 to vector<16x16xf32>
    %550 = arith.mulf %549, %548 : vector<16x16xf32>
    %551 = arith.addf %545, %550 : vector<16x16xf32>
    %c5_304 = arith.constant 5 : index
    %552 = memref.load %arg4[%c5_304] : memref<81xf32, #tpu.memory_space<smem>>
    %c0_305 = arith.constant 0 : index
    %c5_306 = arith.constant 5 : index
    %c6_307 = arith.constant 6 : index
    %553 = vector.load %arg8[%c0_305, %c5_306, %c6_307] : memref<3x26x26xf32, #tpu.memory_space<vmem>>, vector<1x16x16xf32>
    %554 = vector.shape_cast %553 : vector<1x16x16xf32> to vector<16x16xf32>
    %555 = vector.broadcast %552 : f32 to vector<16x16xf32>
    %556 = arith.mulf %555, %554 : vector<16x16xf32>
    %557 = arith.addf %551, %556 : vector<16x16xf32>
    %c6_308 = arith.constant 6 : index
    %558 = memref.load %arg4[%c6_308] : memref<81xf32, #tpu.memory_space<smem>>
    %c0_309 = arith.constant 0 : index
    %c6_310 = arith.constant 6 : index
    %c4_311 = arith.constant 4 : index
    %559 = vector.load %arg8[%c0_309, %c6_310, %c4_311] : memref<3x26x26xf32, #tpu.memory_space<vmem>>, vector<1x16x16xf32>
    %560 = vector.shape_cast %559 : vector<1x16x16xf32> to vector<16x16xf32>
    %561 = vector.broadcast %558 : f32 to vector<16x16xf32>
    %562 = arith.mulf %561, %560 : vector<16x16xf32>
    %563 = arith.addf %557, %562 : vector<16x16xf32>
    %c7_312 = arith.constant 7 : index
    %564 = memref.load %arg4[%c7_312] : memref<81xf32, #tpu.memory_space<smem>>
    %c0_313 = arith.constant 0 : index
    %c6_314 = arith.constant 6 : index
    %c5_315 = arith.constant 5 : index
    %565 = vector.load %arg8[%c0_313, %c6_314, %c5_315] : memref<3x26x26xf32, #tpu.memory_space<vmem>>, vector<1x16x16xf32>
    %566 = vector.shape_cast %565 : vector<1x16x16xf32> to vector<16x16xf32>
    %567 = vector.broadcast %564 : f32 to vector<16x16xf32>
    %568 = arith.mulf %567, %566 : vector<16x16xf32>
    %569 = arith.addf %563, %568 : vector<16x16xf32>
    %c8_316 = arith.constant 8 : index
    %570 = memref.load %arg4[%c8_316] : memref<81xf32, #tpu.memory_space<smem>>
    %c0_317 = arith.constant 0 : index
    %c6_318 = arith.constant 6 : index
    %c6_319 = arith.constant 6 : index
    %571 = vector.load %arg8[%c0_317, %c6_318, %c6_319] : memref<3x26x26xf32, #tpu.memory_space<vmem>>, vector<1x16x16xf32>
    %572 = vector.shape_cast %571 : vector<1x16x16xf32> to vector<16x16xf32>
    %573 = vector.broadcast %570 : f32 to vector<16x16xf32>
    %574 = arith.mulf %573, %572 : vector<16x16xf32>
    %575 = arith.addf %569, %574 : vector<16x16xf32>
    %c9_320 = arith.constant 9 : index
    %576 = memref.load %arg4[%c9_320] : memref<81xf32, #tpu.memory_space<smem>>
    %c1_321 = arith.constant 1 : index
    %c4_322 = arith.constant 4 : index
    %c4_323 = arith.constant 4 : index
    %577 = vector.load %arg8[%c1_321, %c4_322, %c4_323] : memref<3x26x26xf32, #tpu.memory_space<vmem>>, vector<1x16x16xf32>
    %578 = vector.shape_cast %577 : vector<1x16x16xf32> to vector<16x16xf32>
    %579 = vector.broadcast %576 : f32 to vector<16x16xf32>
    %580 = arith.mulf %579, %578 : vector<16x16xf32>
    %581 = arith.addf %575, %580 : vector<16x16xf32>
    %c10_324 = arith.constant 10 : index
    %582 = memref.load %arg4[%c10_324] : memref<81xf32, #tpu.memory_space<smem>>
    %c1_325 = arith.constant 1 : index
    %c4_326 = arith.constant 4 : index
    %c5_327 = arith.constant 5 : index
    %583 = vector.load %arg8[%c1_325, %c4_326, %c5_327] : memref<3x26x26xf32, #tpu.memory_space<vmem>>, vector<1x16x16xf32>
    %584 = vector.shape_cast %583 : vector<1x16x16xf32> to vector<16x16xf32>
    %585 = vector.broadcast %582 : f32 to vector<16x16xf32>
    %586 = arith.mulf %585, %584 : vector<16x16xf32>
    %587 = arith.addf %581, %586 : vector<16x16xf32>
    %c11_328 = arith.constant 11 : index
    %588 = memref.load %arg4[%c11_328] : memref<81xf32, #tpu.memory_space<smem>>
    %c1_329 = arith.constant 1 : index
    %c4_330 = arith.constant 4 : index
    %c6_331 = arith.constant 6 : index
    %589 = vector.load %arg8[%c1_329, %c4_330, %c6_331] : memref<3x26x26xf32, #tpu.memory_space<vmem>>, vector<1x16x16xf32>
    %590 = vector.shape_cast %589 : vector<1x16x16xf32> to vector<16x16xf32>
    %591 = vector.broadcast %588 : f32 to vector<16x16xf32>
    %592 = arith.mulf %591, %590 : vector<16x16xf32>
    %593 = arith.addf %587, %592 : vector<16x16xf32>
    %c12_332 = arith.constant 12 : index
    %594 = memref.load %arg4[%c12_332] : memref<81xf32, #tpu.memory_space<smem>>
    %c1_333 = arith.constant 1 : index
    %c5_334 = arith.constant 5 : index
    %c4_335 = arith.constant 4 : index
    %595 = vector.load %arg8[%c1_333, %c5_334, %c4_335] : memref<3x26x26xf32, #tpu.memory_space<vmem>>, vector<1x16x16xf32>
    %596 = vector.shape_cast %595 : vector<1x16x16xf32> to vector<16x16xf32>
    %597 = vector.broadcast %594 : f32 to vector<16x16xf32>
    %598 = arith.mulf %597, %596 : vector<16x16xf32>
    %599 = arith.addf %593, %598 : vector<16x16xf32>
    %c13_336 = arith.constant 13 : index
    %600 = memref.load %arg4[%c13_336] : memref<81xf32, #tpu.memory_space<smem>>
    %c1_337 = arith.constant 1 : index
    %c5_338 = arith.constant 5 : index
    %c5_339 = arith.constant 5 : index
    %601 = vector.load %arg8[%c1_337, %c5_338, %c5_339] : memref<3x26x26xf32, #tpu.memory_space<vmem>>, vector<1x16x16xf32>
    %602 = vector.shape_cast %601 : vector<1x16x16xf32> to vector<16x16xf32>
    %603 = vector.broadcast %600 : f32 to vector<16x16xf32>
    %604 = arith.mulf %603, %602 : vector<16x16xf32>
    %605 = arith.addf %599, %604 : vector<16x16xf32>
    %c14_340 = arith.constant 14 : index
    %606 = memref.load %arg4[%c14_340] : memref<81xf32, #tpu.memory_space<smem>>
    %c1_341 = arith.constant 1 : index
    %c5_342 = arith.constant 5 : index
    %c6_343 = arith.constant 6 : index
    %607 = vector.load %arg8[%c1_341, %c5_342, %c6_343] : memref<3x26x26xf32, #tpu.memory_space<vmem>>, vector<1x16x16xf32>
    %608 = vector.shape_cast %607 : vector<1x16x16xf32> to vector<16x16xf32>
    %609 = vector.broadcast %606 : f32 to vector<16x16xf32>
    %610 = arith.mulf %609, %608 : vector<16x16xf32>
    %611 = arith.addf %605, %610 : vector<16x16xf32>
    %c15_344 = arith.constant 15 : index
    %612 = memref.load %arg4[%c15_344] : memref<81xf32, #tpu.memory_space<smem>>
    %c1_345 = arith.constant 1 : index
    %c6_346 = arith.constant 6 : index
    %c4_347 = arith.constant 4 : index
    %613 = vector.load %arg8[%c1_345, %c6_346, %c4_347] : memref<3x26x26xf32, #tpu.memory_space<vmem>>, vector<1x16x16xf32>
    %614 = vector.shape_cast %613 : vector<1x16x16xf32> to vector<16x16xf32>
    %615 = vector.broadcast %612 : f32 to vector<16x16xf32>
    %616 = arith.mulf %615, %614 : vector<16x16xf32>
    %617 = arith.addf %611, %616 : vector<16x16xf32>
    %c16_348 = arith.constant 16 : index
    %618 = memref.load %arg4[%c16_348] : memref<81xf32, #tpu.memory_space<smem>>
    %c1_349 = arith.constant 1 : index
    %c6_350 = arith.constant 6 : index
    %c5_351 = arith.constant 5 : index
    %619 = vector.load %arg8[%c1_349, %c6_350, %c5_351] : memref<3x26x26xf32, #tpu.memory_space<vmem>>, vector<1x16x16xf32>
    %620 = vector.shape_cast %619 : vector<1x16x16xf32> to vector<16x16xf32>
    %621 = vector.broadcast %618 : f32 to vector<16x16xf32>
    %622 = arith.mulf %621, %620 : vector<16x16xf32>
    %623 = arith.addf %617, %622 : vector<16x16xf32>
    %c17_352 = arith.constant 17 : index
    %624 = memref.load %arg4[%c17_352] : memref<81xf32, #tpu.memory_space<smem>>
    %c1_353 = arith.constant 1 : index
    %c6_354 = arith.constant 6 : index
    %c6_355 = arith.constant 6 : index
    %625 = vector.load %arg8[%c1_353, %c6_354, %c6_355] : memref<3x26x26xf32, #tpu.memory_space<vmem>>, vector<1x16x16xf32>
    %626 = vector.shape_cast %625 : vector<1x16x16xf32> to vector<16x16xf32>
    %627 = vector.broadcast %624 : f32 to vector<16x16xf32>
    %628 = arith.mulf %627, %626 : vector<16x16xf32>
    %629 = arith.addf %623, %628 : vector<16x16xf32>
    %c18_356 = arith.constant 18 : index
    %630 = memref.load %arg4[%c18_356] : memref<81xf32, #tpu.memory_space<smem>>
    %c2_357 = arith.constant 2 : index
    %c4_358 = arith.constant 4 : index
    %c4_359 = arith.constant 4 : index
    %631 = vector.load %arg8[%c2_357, %c4_358, %c4_359] : memref<3x26x26xf32, #tpu.memory_space<vmem>>, vector<1x16x16xf32>
    %632 = vector.shape_cast %631 : vector<1x16x16xf32> to vector<16x16xf32>
    %633 = vector.broadcast %630 : f32 to vector<16x16xf32>
    %634 = arith.mulf %633, %632 : vector<16x16xf32>
    %635 = arith.addf %629, %634 : vector<16x16xf32>
    %c19_360 = arith.constant 19 : index
    %636 = memref.load %arg4[%c19_360] : memref<81xf32, #tpu.memory_space<smem>>
    %c2_361 = arith.constant 2 : index
    %c4_362 = arith.constant 4 : index
    %c5_363 = arith.constant 5 : index
    %637 = vector.load %arg8[%c2_361, %c4_362, %c5_363] : memref<3x26x26xf32, #tpu.memory_space<vmem>>, vector<1x16x16xf32>
    %638 = vector.shape_cast %637 : vector<1x16x16xf32> to vector<16x16xf32>
    %639 = vector.broadcast %636 : f32 to vector<16x16xf32>
    %640 = arith.mulf %639, %638 : vector<16x16xf32>
    %641 = arith.addf %635, %640 : vector<16x16xf32>
    %c20_364 = arith.constant 20 : index
    %642 = memref.load %arg4[%c20_364] : memref<81xf32, #tpu.memory_space<smem>>
    %c2_365 = arith.constant 2 : index
    %c4_366 = arith.constant 4 : index
    %c6_367 = arith.constant 6 : index
    %643 = vector.load %arg8[%c2_365, %c4_366, %c6_367] : memref<3x26x26xf32, #tpu.memory_space<vmem>>, vector<1x16x16xf32>
    %644 = vector.shape_cast %643 : vector<1x16x16xf32> to vector<16x16xf32>
    %645 = vector.broadcast %642 : f32 to vector<16x16xf32>
    %646 = arith.mulf %645, %644 : vector<16x16xf32>
    %647 = arith.addf %641, %646 : vector<16x16xf32>
    %c21_368 = arith.constant 21 : index
    %648 = memref.load %arg4[%c21_368] : memref<81xf32, #tpu.memory_space<smem>>
    %c2_369 = arith.constant 2 : index
    %c5_370 = arith.constant 5 : index
    %c4_371 = arith.constant 4 : index
    %649 = vector.load %arg8[%c2_369, %c5_370, %c4_371] : memref<3x26x26xf32, #tpu.memory_space<vmem>>, vector<1x16x16xf32>
    %650 = vector.shape_cast %649 : vector<1x16x16xf32> to vector<16x16xf32>
    %651 = vector.broadcast %648 : f32 to vector<16x16xf32>
    %652 = arith.mulf %651, %650 : vector<16x16xf32>
    %653 = arith.addf %647, %652 : vector<16x16xf32>
    %c22_372 = arith.constant 22 : index
    %654 = memref.load %arg4[%c22_372] : memref<81xf32, #tpu.memory_space<smem>>
    %c2_373 = arith.constant 2 : index
    %c5_374 = arith.constant 5 : index
    %c5_375 = arith.constant 5 : index
    %655 = vector.load %arg8[%c2_373, %c5_374, %c5_375] : memref<3x26x26xf32, #tpu.memory_space<vmem>>, vector<1x16x16xf32>
    %656 = vector.shape_cast %655 : vector<1x16x16xf32> to vector<16x16xf32>
    %657 = vector.broadcast %654 : f32 to vector<16x16xf32>
    %658 = arith.mulf %657, %656 : vector<16x16xf32>
    %659 = arith.addf %653, %658 : vector<16x16xf32>
    %c23_376 = arith.constant 23 : index
    %660 = memref.load %arg4[%c23_376] : memref<81xf32, #tpu.memory_space<smem>>
    %c2_377 = arith.constant 2 : index
    %c5_378 = arith.constant 5 : index
    %c6_379 = arith.constant 6 : index
    %661 = vector.load %arg8[%c2_377, %c5_378, %c6_379] : memref<3x26x26xf32, #tpu.memory_space<vmem>>, vector<1x16x16xf32>
    %662 = vector.shape_cast %661 : vector<1x16x16xf32> to vector<16x16xf32>
    %663 = vector.broadcast %660 : f32 to vector<16x16xf32>
    %664 = arith.mulf %663, %662 : vector<16x16xf32>
    %665 = arith.addf %659, %664 : vector<16x16xf32>
    %c24_380 = arith.constant 24 : index
    %666 = memref.load %arg4[%c24_380] : memref<81xf32, #tpu.memory_space<smem>>
    %c2_381 = arith.constant 2 : index
    %c6_382 = arith.constant 6 : index
    %c4_383 = arith.constant 4 : index
    %667 = vector.load %arg8[%c2_381, %c6_382, %c4_383] : memref<3x26x26xf32, #tpu.memory_space<vmem>>, vector<1x16x16xf32>
    %668 = vector.shape_cast %667 : vector<1x16x16xf32> to vector<16x16xf32>
    %669 = vector.broadcast %666 : f32 to vector<16x16xf32>
    %670 = arith.mulf %669, %668 : vector<16x16xf32>
    %671 = arith.addf %665, %670 : vector<16x16xf32>
    %c25_384 = arith.constant 25 : index
    %672 = memref.load %arg4[%c25_384] : memref<81xf32, #tpu.memory_space<smem>>
    %c2_385 = arith.constant 2 : index
    %c6_386 = arith.constant 6 : index
    %c5_387 = arith.constant 5 : index
    %673 = vector.load %arg8[%c2_385, %c6_386, %c5_387] : memref<3x26x26xf32, #tpu.memory_space<vmem>>, vector<1x16x16xf32>
    %674 = vector.shape_cast %673 : vector<1x16x16xf32> to vector<16x16xf32>
    %675 = vector.broadcast %672 : f32 to vector<16x16xf32>
    %676 = arith.mulf %675, %674 : vector<16x16xf32>
    %677 = arith.addf %671, %676 : vector<16x16xf32>
    %c26_388 = arith.constant 26 : index
    %678 = memref.load %arg4[%c26_388] : memref<81xf32, #tpu.memory_space<smem>>
    %c2_389 = arith.constant 2 : index
    %c6_390 = arith.constant 6 : index
    %c6_391 = arith.constant 6 : index
    %679 = vector.load %arg8[%c2_389, %c6_390, %c6_391] : memref<3x26x26xf32, #tpu.memory_space<vmem>>, vector<1x16x16xf32>
    %680 = vector.shape_cast %679 : vector<1x16x16xf32> to vector<16x16xf32>
    %681 = vector.broadcast %678 : f32 to vector<16x16xf32>
    %682 = arith.mulf %681, %680 : vector<16x16xf32>
    %683 = arith.addf %677, %682 : vector<16x16xf32>
    %c0_392 = arith.constant 0 : index
    %c0_393 = arith.constant 0 : index
    %c4_394 = arith.constant 4 : index
    %c4_395 = arith.constant 4 : index
    %684 = vector.load %arg1[%c0_392, %c0_393, %c4_394, %c4_395] : memref<1x3x24x24xf32, #tpu.memory_space<vmem>>, vector<1x1x16x16xf32>
    %685 = vector.shape_cast %684 : vector<1x1x16x16xf32> to vector<16x16xf32>
    %686 = arith.addf %685, %683 : vector<16x16xf32>
    %cst_396 = arith.constant -1.000000e+00 : f32
    %cst_397 = arith.constant 1.000000e+00 : f32
    %687 = vector.broadcast %cst_396 : f32 to vector<16x16xf32>
    %688 = arith.maximumf %687, %686 : vector<16x16xf32>
    %689 = vector.broadcast %cst_397 : f32 to vector<16x16xf32>
    %690 = arith.minimumf %689, %688 : vector<16x16xf32>
    %c0_398 = arith.constant 0 : index
    %c0_399 = arith.constant 0 : index
    %c0_400 = arith.constant 0 : index
    %c0_401 = arith.constant 0 : index
    %691 = vector.load %arg6[%c0_398, %c0_399, %c0_400, %c0_401] : memref<1x3x16x16xf32, #tpu.memory_space<vmem>>, vector<1x1x16x16xf32>
    %692 = vector.shape_cast %691 : vector<1x1x16x16xf32> to vector<16x16xf32>
    %693 = vector.shape_cast %690 : vector<16x16xf32> to vector<1x1x16x16xf32>
    tpu.vector_store %arg6[%c0_398, %c0_399, %c0_400, %c0_401], %693 {strides = array<i32>} : memref<1x3x16x16xf32, #tpu.memory_space<vmem>>, vector<1x1x16x16xf32>,
    %c1_402 = arith.constant 1 : index
    %694 = memref.load %arg5[%c1_402] : memref<3xf32, #tpu.memory_space<smem>>
    %695 = vector.broadcast %694 : f32 to vector<16x16xf32>
    %c27_403 = arith.constant 27 : index
    %696 = memref.load %arg4[%c27_403] : memref<81xf32, #tpu.memory_space<smem>>
    %c0_404 = arith.constant 0 : index
    %c4_405 = arith.constant 4 : index
    %c4_406 = arith.constant 4 : index
    %697 = vector.load %arg8[%c0_404, %c4_405, %c4_406] : memref<3x26x26xf32, #tpu.memory_space<vmem>>, vector<1x16x16xf32>
    %698 = vector.shape_cast %697 : vector<1x16x16xf32> to vector<16x16xf32>
    %699 = vector.broadcast %696 : f32 to vector<16x16xf32>
    %700 = arith.mulf %699, %698 : vector<16x16xf32>
    %701 = arith.addf %695, %700 : vector<16x16xf32>
    %c28_407 = arith.constant 28 : index
    %702 = memref.load %arg4[%c28_407] : memref<81xf32, #tpu.memory_space<smem>>
    %c0_408 = arith.constant 0 : index
    %c4_409 = arith.constant 4 : index
    %c5_410 = arith.constant 5 : index
    %703 = vector.load %arg8[%c0_408, %c4_409, %c5_410] : memref<3x26x26xf32, #tpu.memory_space<vmem>>, vector<1x16x16xf32>
    %704 = vector.shape_cast %703 : vector<1x16x16xf32> to vector<16x16xf32>
    %705 = vector.broadcast %702 : f32 to vector<16x16xf32>
    %706 = arith.mulf %705, %704 : vector<16x16xf32>
    %707 = arith.addf %701, %706 : vector<16x16xf32>
    %c29_411 = arith.constant 29 : index
    %708 = memref.load %arg4[%c29_411] : memref<81xf32, #tpu.memory_space<smem>>
    %c0_412 = arith.constant 0 : index
    %c4_413 = arith.constant 4 : index
    %c6_414 = arith.constant 6 : index
    %709 = vector.load %arg8[%c0_412, %c4_413, %c6_414] : memref<3x26x26xf32, #tpu.memory_space<vmem>>, vector<1x16x16xf32>
    %710 = vector.shape_cast %709 : vector<1x16x16xf32> to vector<16x16xf32>
    %711 = vector.broadcast %708 : f32 to vector<16x16xf32>
    %712 = arith.mulf %711, %710 : vector<16x16xf32>
    %713 = arith.addf %707, %712 : vector<16x16xf32>
    %c30_415 = arith.constant 30 : index
    %714 = memref.load %arg4[%c30_415] : memref<81xf32, #tpu.memory_space<smem>>
    %c0_416 = arith.constant 0 : index
    %c5_417 = arith.constant 5 : index
    %c4_418 = arith.constant 4 : index
    %715 = vector.load %arg8[%c0_416, %c5_417, %c4_418] : memref<3x26x26xf32, #tpu.memory_space<vmem>>, vector<1x16x16xf32>
    %716 = vector.shape_cast %715 : vector<1x16x16xf32> to vector<16x16xf32>
    %717 = vector.broadcast %714 : f32 to vector<16x16xf32>
    %718 = arith.mulf %717, %716 : vector<16x16xf32>
    %719 = arith.addf %713, %718 : vector<16x16xf32>
    %c31_419 = arith.constant 31 : index
    %720 = memref.load %arg4[%c31_419] : memref<81xf32, #tpu.memory_space<smem>>
    %c0_420 = arith.constant 0 : index
    %c5_421 = arith.constant 5 : index
    %c5_422 = arith.constant 5 : index
    %721 = vector.load %arg8[%c0_420, %c5_421, %c5_422] : memref<3x26x26xf32, #tpu.memory_space<vmem>>, vector<1x16x16xf32>
    %722 = vector.shape_cast %721 : vector<1x16x16xf32> to vector<16x16xf32>
    %723 = vector.broadcast %720 : f32 to vector<16x16xf32>
    %724 = arith.mulf %723, %722 : vector<16x16xf32>
    %725 = arith.addf %719, %724 : vector<16x16xf32>
    %c32_423 = arith.constant 32 : index
    %726 = memref.load %arg4[%c32_423] : memref<81xf32, #tpu.memory_space<smem>>
    %c0_424 = arith.constant 0 : index
    %c5_425 = arith.constant 5 : index
    %c6_426 = arith.constant 6 : index
    %727 = vector.load %arg8[%c0_424, %c5_425, %c6_426] : memref<3x26x26xf32, #tpu.memory_space<vmem>>, vector<1x16x16xf32>
    %728 = vector.shape_cast %727 : vector<1x16x16xf32> to vector<16x16xf32>
    %729 = vector.broadcast %726 : f32 to vector<16x16xf32>
    %730 = arith.mulf %729, %728 : vector<16x16xf32>
    %731 = arith.addf %725, %730 : vector<16x16xf32>
    %c33_427 = arith.constant 33 : index
    %732 = memref.load %arg4[%c33_427] : memref<81xf32, #tpu.memory_space<smem>>
    %c0_428 = arith.constant 0 : index
    %c6_429 = arith.constant 6 : index
    %c4_430 = arith.constant 4 : index
    %733 = vector.load %arg8[%c0_428, %c6_429, %c4_430] : memref<3x26x26xf32, #tpu.memory_space<vmem>>, vector<1x16x16xf32>
    %734 = vector.shape_cast %733 : vector<1x16x16xf32> to vector<16x16xf32>
    %735 = vector.broadcast %732 : f32 to vector<16x16xf32>
    %736 = arith.mulf %735, %734 : vector<16x16xf32>
    %737 = arith.addf %731, %736 : vector<16x16xf32>
    %c34_431 = arith.constant 34 : index
    %738 = memref.load %arg4[%c34_431] : memref<81xf32, #tpu.memory_space<smem>>
    %c0_432 = arith.constant 0 : index
    %c6_433 = arith.constant 6 : index
    %c5_434 = arith.constant 5 : index
    %739 = vector.load %arg8[%c0_432, %c6_433, %c5_434] : memref<3x26x26xf32, #tpu.memory_space<vmem>>, vector<1x16x16xf32>
    %740 = vector.shape_cast %739 : vector<1x16x16xf32> to vector<16x16xf32>
    %741 = vector.broadcast %738 : f32 to vector<16x16xf32>
    %742 = arith.mulf %741, %740 : vector<16x16xf32>
    %743 = arith.addf %737, %742 : vector<16x16xf32>
    %c35_435 = arith.constant 35 : index
    %744 = memref.load %arg4[%c35_435] : memref<81xf32, #tpu.memory_space<smem>>
    %c0_436 = arith.constant 0 : index
    %c6_437 = arith.constant 6 : index
    %c6_438 = arith.constant 6 : index
    %745 = vector.load %arg8[%c0_436, %c6_437, %c6_438] : memref<3x26x26xf32, #tpu.memory_space<vmem>>, vector<1x16x16xf32>
    %746 = vector.shape_cast %745 : vector<1x16x16xf32> to vector<16x16xf32>
    %747 = vector.broadcast %744 : f32 to vector<16x16xf32>
    %748 = arith.mulf %747, %746 : vector<16x16xf32>
    %749 = arith.addf %743, %748 : vector<16x16xf32>
    %c36_439 = arith.constant 36 : index
    %750 = memref.load %arg4[%c36_439] : memref<81xf32, #tpu.memory_space<smem>>
    %c1_440 = arith.constant 1 : index
    %c4_441 = arith.constant 4 : index
    %c4_442 = arith.constant 4 : index
    %751 = vector.load %arg8[%c1_440, %c4_441, %c4_442] : memref<3x26x26xf32, #tpu.memory_space<vmem>>, vector<1x16x16xf32>
    %752 = vector.shape_cast %751 : vector<1x16x16xf32> to vector<16x16xf32>
    %753 = vector.broadcast %750 : f32 to vector<16x16xf32>
    %754 = arith.mulf %753, %752 : vector<16x16xf32>
    %755 = arith.addf %749, %754 : vector<16x16xf32>
    %c37_443 = arith.constant 37 : index
    %756 = memref.load %arg4[%c37_443] : memref<81xf32, #tpu.memory_space<smem>>
    %c1_444 = arith.constant 1 : index
    %c4_445 = arith.constant 4 : index
    %c5_446 = arith.constant 5 : index
    %757 = vector.load %arg8[%c1_444, %c4_445, %c5_446] : memref<3x26x26xf32, #tpu.memory_space<vmem>>, vector<1x16x16xf32>
    %758 = vector.shape_cast %757 : vector<1x16x16xf32> to vector<16x16xf32>
    %759 = vector.broadcast %756 : f32 to vector<16x16xf32>
    %760 = arith.mulf %759, %758 : vector<16x16xf32>
    %761 = arith.addf %755, %760 : vector<16x16xf32>
    %c38_447 = arith.constant 38 : index
    %762 = memref.load %arg4[%c38_447] : memref<81xf32, #tpu.memory_space<smem>>
    %c1_448 = arith.constant 1 : index
    %c4_449 = arith.constant 4 : index
    %c6_450 = arith.constant 6 : index
    %763 = vector.load %arg8[%c1_448, %c4_449, %c6_450] : memref<3x26x26xf32, #tpu.memory_space<vmem>>, vector<1x16x16xf32>
    %764 = vector.shape_cast %763 : vector<1x16x16xf32> to vector<16x16xf32>
    %765 = vector.broadcast %762 : f32 to vector<16x16xf32>
    %766 = arith.mulf %765, %764 : vector<16x16xf32>
    %767 = arith.addf %761, %766 : vector<16x16xf32>
    %c39_451 = arith.constant 39 : index
    %768 = memref.load %arg4[%c39_451] : memref<81xf32, #tpu.memory_space<smem>>
    %c1_452 = arith.constant 1 : index
    %c5_453 = arith.constant 5 : index
    %c4_454 = arith.constant 4 : index
    %769 = vector.load %arg8[%c1_452, %c5_453, %c4_454] : memref<3x26x26xf32, #tpu.memory_space<vmem>>, vector<1x16x16xf32>
    %770 = vector.shape_cast %769 : vector<1x16x16xf32> to vector<16x16xf32>
    %771 = vector.broadcast %768 : f32 to vector<16x16xf32>
    %772 = arith.mulf %771, %770 : vector<16x16xf32>
    %773 = arith.addf %767, %772 : vector<16x16xf32>
    %c40_455 = arith.constant 40 : index
    %774 = memref.load %arg4[%c40_455] : memref<81xf32, #tpu.memory_space<smem>>
    %c1_456 = arith.constant 1 : index
    %c5_457 = arith.constant 5 : index
    %c5_458 = arith.constant 5 : index
    %775 = vector.load %arg8[%c1_456, %c5_457, %c5_458] : memref<3x26x26xf32, #tpu.memory_space<vmem>>, vector<1x16x16xf32>
    %776 = vector.shape_cast %775 : vector<1x16x16xf32> to vector<16x16xf32>
    %777 = vector.broadcast %774 : f32 to vector<16x16xf32>
    %778 = arith.mulf %777, %776 : vector<16x16xf32>
    %779 = arith.addf %773, %778 : vector<16x16xf32>
    %c41_459 = arith.constant 41 : index
    %780 = memref.load %arg4[%c41_459] : memref<81xf32, #tpu.memory_space<smem>>
    %c1_460 = arith.constant 1 : index
    %c5_461 = arith.constant 5 : index
    %c6_462 = arith.constant 6 : index
    %781 = vector.load %arg8[%c1_460, %c5_461, %c6_462] : memref<3x26x26xf32, #tpu.memory_space<vmem>>, vector<1x16x16xf32>
    %782 = vector.shape_cast %781 : vector<1x16x16xf32> to vector<16x16xf32>
    %783 = vector.broadcast %780 : f32 to vector<16x16xf32>
    %784 = arith.mulf %783, %782 : vector<16x16xf32>
    %785 = arith.addf %779, %784 : vector<16x16xf32>
    %c42_463 = arith.constant 42 : index
    %786 = memref.load %arg4[%c42_463] : memref<81xf32, #tpu.memory_space<smem>>
    %c1_464 = arith.constant 1 : index
    %c6_465 = arith.constant 6 : index
    %c4_466 = arith.constant 4 : index
    %787 = vector.load %arg8[%c1_464, %c6_465, %c4_466] : memref<3x26x26xf32, #tpu.memory_space<vmem>>, vector<1x16x16xf32>
    %788 = vector.shape_cast %787 : vector<1x16x16xf32> to vector<16x16xf32>
    %789 = vector.broadcast %786 : f32 to vector<16x16xf32>
    %790 = arith.mulf %789, %788 : vector<16x16xf32>
    %791 = arith.addf %785, %790 : vector<16x16xf32>
    %c43_467 = arith.constant 43 : index
    %792 = memref.load %arg4[%c43_467] : memref<81xf32, #tpu.memory_space<smem>>
    %c1_468 = arith.constant 1 : index
    %c6_469 = arith.constant 6 : index
    %c5_470 = arith.constant 5 : index
    %793 = vector.load %arg8[%c1_468, %c6_469, %c5_470] : memref<3x26x26xf32, #tpu.memory_space<vmem>>, vector<1x16x16xf32>
    %794 = vector.shape_cast %793 : vector<1x16x16xf32> to vector<16x16xf32>
    %795 = vector.broadcast %792 : f32 to vector<16x16xf32>
    %796 = arith.mulf %795, %794 : vector<16x16xf32>
    %797 = arith.addf %791, %796 : vector<16x16xf32>
    %c44_471 = arith.constant 44 : index
    %798 = memref.load %arg4[%c44_471] : memref<81xf32, #tpu.memory_space<smem>>
    %c1_472 = arith.constant 1 : index
    %c6_473 = arith.constant 6 : index
    %c6_474 = arith.constant 6 : index
    %799 = vector.load %arg8[%c1_472, %c6_473, %c6_474] : memref<3x26x26xf32, #tpu.memory_space<vmem>>, vector<1x16x16xf32>
    %800 = vector.shape_cast %799 : vector<1x16x16xf32> to vector<16x16xf32>
    %801 = vector.broadcast %798 : f32 to vector<16x16xf32>
    %802 = arith.mulf %801, %800 : vector<16x16xf32>
    %803 = arith.addf %797, %802 : vector<16x16xf32>
    %c45_475 = arith.constant 45 : index
    %804 = memref.load %arg4[%c45_475] : memref<81xf32, #tpu.memory_space<smem>>
    %c2_476 = arith.constant 2 : index
    %c4_477 = arith.constant 4 : index
    %c4_478 = arith.constant 4 : index
    %805 = vector.load %arg8[%c2_476, %c4_477, %c4_478] : memref<3x26x26xf32, #tpu.memory_space<vmem>>, vector<1x16x16xf32>
    %806 = vector.shape_cast %805 : vector<1x16x16xf32> to vector<16x16xf32>
    %807 = vector.broadcast %804 : f32 to vector<16x16xf32>
    %808 = arith.mulf %807, %806 : vector<16x16xf32>
    %809 = arith.addf %803, %808 : vector<16x16xf32>
    %c46_479 = arith.constant 46 : index
    %810 = memref.load %arg4[%c46_479] : memref<81xf32, #tpu.memory_space<smem>>
    %c2_480 = arith.constant 2 : index
    %c4_481 = arith.constant 4 : index
    %c5_482 = arith.constant 5 : index
    %811 = vector.load %arg8[%c2_480, %c4_481, %c5_482] : memref<3x26x26xf32, #tpu.memory_space<vmem>>, vector<1x16x16xf32>
    %812 = vector.shape_cast %811 : vector<1x16x16xf32> to vector<16x16xf32>
    %813 = vector.broadcast %810 : f32 to vector<16x16xf32>
    %814 = arith.mulf %813, %812 : vector<16x16xf32>
    %815 = arith.addf %809, %814 : vector<16x16xf32>
    %c47_483 = arith.constant 47 : index
    %816 = memref.load %arg4[%c47_483] : memref<81xf32, #tpu.memory_space<smem>>
    %c2_484 = arith.constant 2 : index
    %c4_485 = arith.constant 4 : index
    %c6_486 = arith.constant 6 : index
    %817 = vector.load %arg8[%c2_484, %c4_485, %c6_486] : memref<3x26x26xf32, #tpu.memory_space<vmem>>, vector<1x16x16xf32>
    %818 = vector.shape_cast %817 : vector<1x16x16xf32> to vector<16x16xf32>
    %819 = vector.broadcast %816 : f32 to vector<16x16xf32>
    %820 = arith.mulf %819, %818 : vector<16x16xf32>
    %821 = arith.addf %815, %820 : vector<16x16xf32>
    %c48_487 = arith.constant 48 : index
    %822 = memref.load %arg4[%c48_487] : memref<81xf32, #tpu.memory_space<smem>>
    %c2_488 = arith.constant 2 : index
    %c5_489 = arith.constant 5 : index
    %c4_490 = arith.constant 4 : index
    %823 = vector.load %arg8[%c2_488, %c5_489, %c4_490] : memref<3x26x26xf32, #tpu.memory_space<vmem>>, vector<1x16x16xf32>
    %824 = vector.shape_cast %823 : vector<1x16x16xf32> to vector<16x16xf32>
    %825 = vector.broadcast %822 : f32 to vector<16x16xf32>
    %826 = arith.mulf %825, %824 : vector<16x16xf32>
    %827 = arith.addf %821, %826 : vector<16x16xf32>
    %c49_491 = arith.constant 49 : index
    %828 = memref.load %arg4[%c49_491] : memref<81xf32, #tpu.memory_space<smem>>
    %c2_492 = arith.constant 2 : index
    %c5_493 = arith.constant 5 : index
    %c5_494 = arith.constant 5 : index
    %829 = vector.load %arg8[%c2_492, %c5_493, %c5_494] : memref<3x26x26xf32, #tpu.memory_space<vmem>>, vector<1x16x16xf32>
    %830 = vector.shape_cast %829 : vector<1x16x16xf32> to vector<16x16xf32>
    %831 = vector.broadcast %828 : f32 to vector<16x16xf32>
    %832 = arith.mulf %831, %830 : vector<16x16xf32>
    %833 = arith.addf %827, %832 : vector<16x16xf32>
    %c50_495 = arith.constant 50 : index
    %834 = memref.load %arg4[%c50_495] : memref<81xf32, #tpu.memory_space<smem>>
    %c2_496 = arith.constant 2 : index
    %c5_497 = arith.constant 5 : index
    %c6_498 = arith.constant 6 : index
    %835 = vector.load %arg8[%c2_496, %c5_497, %c6_498] : memref<3x26x26xf32, #tpu.memory_space<vmem>>, vector<1x16x16xf32>
    %836 = vector.shape_cast %835 : vector<1x16x16xf32> to vector<16x16xf32>
    %837 = vector.broadcast %834 : f32 to vector<16x16xf32>
    %838 = arith.mulf %837, %836 : vector<16x16xf32>
    %839 = arith.addf %833, %838 : vector<16x16xf32>
    %c51_499 = arith.constant 51 : index
    %840 = memref.load %arg4[%c51_499] : memref<81xf32, #tpu.memory_space<smem>>
    %c2_500 = arith.constant 2 : index
    %c6_501 = arith.constant 6 : index
    %c4_502 = arith.constant 4 : index
    %841 = vector.load %arg8[%c2_500, %c6_501, %c4_502] : memref<3x26x26xf32, #tpu.memory_space<vmem>>, vector<1x16x16xf32>
    %842 = vector.shape_cast %841 : vector<1x16x16xf32> to vector<16x16xf32>
    %843 = vector.broadcast %840 : f32 to vector<16x16xf32>
    %844 = arith.mulf %843, %842 : vector<16x16xf32>
    %845 = arith.addf %839, %844 : vector<16x16xf32>
    %c52_503 = arith.constant 52 : index
    %846 = memref.load %arg4[%c52_503] : memref<81xf32, #tpu.memory_space<smem>>
    %c2_504 = arith.constant 2 : index
    %c6_505 = arith.constant 6 : index
    %c5_506 = arith.constant 5 : index
    %847 = vector.load %arg8[%c2_504, %c6_505, %c5_506] : memref<3x26x26xf32, #tpu.memory_space<vmem>>, vector<1x16x16xf32>
    %848 = vector.shape_cast %847 : vector<1x16x16xf32> to vector<16x16xf32>
    %849 = vector.broadcast %846 : f32 to vector<16x16xf32>
    %850 = arith.mulf %849, %848 : vector<16x16xf32>
    %851 = arith.addf %845, %850 : vector<16x16xf32>
    %c53_507 = arith.constant 53 : index
    %852 = memref.load %arg4[%c53_507] : memref<81xf32, #tpu.memory_space<smem>>
    %c2_508 = arith.constant 2 : index
    %c6_509 = arith.constant 6 : index
    %c6_510 = arith.constant 6 : index
    %853 = vector.load %arg8[%c2_508, %c6_509, %c6_510] : memref<3x26x26xf32, #tpu.memory_space<vmem>>, vector<1x16x16xf32>
    %854 = vector.shape_cast %853 : vector<1x16x16xf32> to vector<16x16xf32>
    %855 = vector.broadcast %852 : f32 to vector<16x16xf32>
    %856 = arith.mulf %855, %854 : vector<16x16xf32>
    %857 = arith.addf %851, %856 : vector<16x16xf32>
    %c0_511 = arith.constant 0 : index
    %c1_512 = arith.constant 1 : index
    %c4_513 = arith.constant 4 : index
    %c4_514 = arith.constant 4 : index
    %858 = vector.load %arg1[%c0_511, %c1_512, %c4_513, %c4_514] : memref<1x3x24x24xf32, #tpu.memory_space<vmem>>, vector<1x1x16x16xf32>
    %859 = vector.shape_cast %858 : vector<1x1x16x16xf32> to vector<16x16xf32>
    %860 = arith.addf %859, %857 : vector<16x16xf32>
    %cst_515 = arith.constant -1.000000e+00 : f32
    %cst_516 = arith.constant 1.000000e+00 : f32
    %861 = vector.broadcast %cst_515 : f32 to vector<16x16xf32>
    %862 = arith.maximumf %861, %860 : vector<16x16xf32>
    %863 = vector.broadcast %cst_516 : f32 to vector<16x16xf32>
    %864 = arith.minimumf %863, %862 : vector<16x16xf32>
    %c0_517 = arith.constant 0 : index
    %c1_518 = arith.constant 1 : index
    %c0_519 = arith.constant 0 : index
    %c0_520 = arith.constant 0 : index
    %865 = vector.load %arg6[%c0_517, %c1_518, %c0_519, %c0_520] : memref<1x3x16x16xf32, #tpu.memory_space<vmem>>, vector<1x1x16x16xf32>
    %866 = vector.shape_cast %865 : vector<1x1x16x16xf32> to vector<16x16xf32>
    %867 = vector.shape_cast %864 : vector<16x16xf32> to vector<1x1x16x16xf32>
    tpu.vector_store %arg6[%c0_517, %c1_518, %c0_519, %c0_520], %867 {strides = array<i32>} : memref<1x3x16x16xf32, #tpu.memory_space<vmem>>, vector<1x1x16x16xf32>,
    %c2_521 = arith.constant 2 : index
    %868 = memref.load %arg5[%c2_521] : memref<3xf32, #tpu.memory_space<smem>>
    %869 = vector.broadcast %868 : f32 to vector<16x16xf32>
    %c54_522 = arith.constant 54 : index
    %870 = memref.load %arg4[%c54_522] : memref<81xf32, #tpu.memory_space<smem>>
    %c0_523 = arith.constant 0 : index
    %c4_524 = arith.constant 4 : index
    %c4_525 = arith.constant 4 : index
    %871 = vector.load %arg8[%c0_523, %c4_524, %c4_525] : memref<3x26x26xf32, #tpu.memory_space<vmem>>, vector<1x16x16xf32>
    %872 = vector.shape_cast %871 : vector<1x16x16xf32> to vector<16x16xf32>
    %873 = vector.broadcast %870 : f32 to vector<16x16xf32>
    %874 = arith.mulf %873, %872 : vector<16x16xf32>
    %875 = arith.addf %869, %874 : vector<16x16xf32>
    %c55_526 = arith.constant 55 : index
    %876 = memref.load %arg4[%c55_526] : memref<81xf32, #tpu.memory_space<smem>>
    %c0_527 = arith.constant 0 : index
    %c4_528 = arith.constant 4 : index
    %c5_529 = arith.constant 5 : index
    %877 = vector.load %arg8[%c0_527, %c4_528, %c5_529] : memref<3x26x26xf32, #tpu.memory_space<vmem>>, vector<1x16x16xf32>
    %878 = vector.shape_cast %877 : vector<1x16x16xf32> to vector<16x16xf32>
    %879 = vector.broadcast %876 : f32 to vector<16x16xf32>
    %880 = arith.mulf %879, %878 : vector<16x16xf32>
    %881 = arith.addf %875, %880 : vector<16x16xf32>
    %c56_530 = arith.constant 56 : index
    %882 = memref.load %arg4[%c56_530] : memref<81xf32, #tpu.memory_space<smem>>
    %c0_531 = arith.constant 0 : index
    %c4_532 = arith.constant 4 : index
    %c6_533 = arith.constant 6 : index
    %883 = vector.load %arg8[%c0_531, %c4_532, %c6_533] : memref<3x26x26xf32, #tpu.memory_space<vmem>>, vector<1x16x16xf32>
    %884 = vector.shape_cast %883 : vector<1x16x16xf32> to vector<16x16xf32>
    %885 = vector.broadcast %882 : f32 to vector<16x16xf32>
    %886 = arith.mulf %885, %884 : vector<16x16xf32>
    %887 = arith.addf %881, %886 : vector<16x16xf32>
    %c57_534 = arith.constant 57 : index
    %888 = memref.load %arg4[%c57_534] : memref<81xf32, #tpu.memory_space<smem>>
    %c0_535 = arith.constant 0 : index
    %c5_536 = arith.constant 5 : index
    %c4_537 = arith.constant 4 : index
    %889 = vector.load %arg8[%c0_535, %c5_536, %c4_537] : memref<3x26x26xf32, #tpu.memory_space<vmem>>, vector<1x16x16xf32>
    %890 = vector.shape_cast %889 : vector<1x16x16xf32> to vector<16x16xf32>
    %891 = vector.broadcast %888 : f32 to vector<16x16xf32>
    %892 = arith.mulf %891, %890 : vector<16x16xf32>
    %893 = arith.addf %887, %892 : vector<16x16xf32>
    %c58_538 = arith.constant 58 : index
    %894 = memref.load %arg4[%c58_538] : memref<81xf32, #tpu.memory_space<smem>>
    %c0_539 = arith.constant 0 : index
    %c5_540 = arith.constant 5 : index
    %c5_541 = arith.constant 5 : index
    %895 = vector.load %arg8[%c0_539, %c5_540, %c5_541] : memref<3x26x26xf32, #tpu.memory_space<vmem>>, vector<1x16x16xf32>
    %896 = vector.shape_cast %895 : vector<1x16x16xf32> to vector<16x16xf32>
    %897 = vector.broadcast %894 : f32 to vector<16x16xf32>
    %898 = arith.mulf %897, %896 : vector<16x16xf32>
    %899 = arith.addf %893, %898 : vector<16x16xf32>
    %c59_542 = arith.constant 59 : index
    %900 = memref.load %arg4[%c59_542] : memref<81xf32, #tpu.memory_space<smem>>
    %c0_543 = arith.constant 0 : index
    %c5_544 = arith.constant 5 : index
    %c6_545 = arith.constant 6 : index
    %901 = vector.load %arg8[%c0_543, %c5_544, %c6_545] : memref<3x26x26xf32, #tpu.memory_space<vmem>>, vector<1x16x16xf32>
    %902 = vector.shape_cast %901 : vector<1x16x16xf32> to vector<16x16xf32>
    %903 = vector.broadcast %900 : f32 to vector<16x16xf32>
    %904 = arith.mulf %903, %902 : vector<16x16xf32>
    %905 = arith.addf %899, %904 : vector<16x16xf32>
    %c60_546 = arith.constant 60 : index
    %906 = memref.load %arg4[%c60_546] : memref<81xf32, #tpu.memory_space<smem>>
    %c0_547 = arith.constant 0 : index
    %c6_548 = arith.constant 6 : index
    %c4_549 = arith.constant 4 : index
    %907 = vector.load %arg8[%c0_547, %c6_548, %c4_549] : memref<3x26x26xf32, #tpu.memory_space<vmem>>, vector<1x16x16xf32>
    %908 = vector.shape_cast %907 : vector<1x16x16xf32> to vector<16x16xf32>
    %909 = vector.broadcast %906 : f32 to vector<16x16xf32>
    %910 = arith.mulf %909, %908 : vector<16x16xf32>
    %911 = arith.addf %905, %910 : vector<16x16xf32>
    %c61_550 = arith.constant 61 : index
    %912 = memref.load %arg4[%c61_550] : memref<81xf32, #tpu.memory_space<smem>>
    %c0_551 = arith.constant 0 : index
    %c6_552 = arith.constant 6 : index
    %c5_553 = arith.constant 5 : index
    %913 = vector.load %arg8[%c0_551, %c6_552, %c5_553] : memref<3x26x26xf32, #tpu.memory_space<vmem>>, vector<1x16x16xf32>
    %914 = vector.shape_cast %913 : vector<1x16x16xf32> to vector<16x16xf32>
    %915 = vector.broadcast %912 : f32 to vector<16x16xf32>
    %916 = arith.mulf %915, %914 : vector<16x16xf32>
    %917 = arith.addf %911, %916 : vector<16x16xf32>
    %c62_554 = arith.constant 62 : index
    %918 = memref.load %arg4[%c62_554] : memref<81xf32, #tpu.memory_space<smem>>
    %c0_555 = arith.constant 0 : index
    %c6_556 = arith.constant 6 : index
    %c6_557 = arith.constant 6 : index
    %919 = vector.load %arg8[%c0_555, %c6_556, %c6_557] : memref<3x26x26xf32, #tpu.memory_space<vmem>>, vector<1x16x16xf32>
    %920 = vector.shape_cast %919 : vector<1x16x16xf32> to vector<16x16xf32>
    %921 = vector.broadcast %918 : f32 to vector<16x16xf32>
    %922 = arith.mulf %921, %920 : vector<16x16xf32>
    %923 = arith.addf %917, %922 : vector<16x16xf32>
    %c63_558 = arith.constant 63 : index
    %924 = memref.load %arg4[%c63_558] : memref<81xf32, #tpu.memory_space<smem>>
    %c1_559 = arith.constant 1 : index
    %c4_560 = arith.constant 4 : index
    %c4_561 = arith.constant 4 : index
    %925 = vector.load %arg8[%c1_559, %c4_560, %c4_561] : memref<3x26x26xf32, #tpu.memory_space<vmem>>, vector<1x16x16xf32>
    %926 = vector.shape_cast %925 : vector<1x16x16xf32> to vector<16x16xf32>
    %927 = vector.broadcast %924 : f32 to vector<16x16xf32>
    %928 = arith.mulf %927, %926 : vector<16x16xf32>
    %929 = arith.addf %923, %928 : vector<16x16xf32>
    %c64_562 = arith.constant 64 : index
    %930 = memref.load %arg4[%c64_562] : memref<81xf32, #tpu.memory_space<smem>>
    %c1_563 = arith.constant 1 : index
    %c4_564 = arith.constant 4 : index
    %c5_565 = arith.constant 5 : index
    %931 = vector.load %arg8[%c1_563, %c4_564, %c5_565] : memref<3x26x26xf32, #tpu.memory_space<vmem>>, vector<1x16x16xf32>
    %932 = vector.shape_cast %931 : vector<1x16x16xf32> to vector<16x16xf32>
    %933 = vector.broadcast %930 : f32 to vector<16x16xf32>
    %934 = arith.mulf %933, %932 : vector<16x16xf32>
    %935 = arith.addf %929, %934 : vector<16x16xf32>
    %c65_566 = arith.constant 65 : index
    %936 = memref.load %arg4[%c65_566] : memref<81xf32, #tpu.memory_space<smem>>
    %c1_567 = arith.constant 1 : index
    %c4_568 = arith.constant 4 : index
    %c6_569 = arith.constant 6 : index
    %937 = vector.load %arg8[%c1_567, %c4_568, %c6_569] : memref<3x26x26xf32, #tpu.memory_space<vmem>>, vector<1x16x16xf32>
    %938 = vector.shape_cast %937 : vector<1x16x16xf32> to vector<16x16xf32>
    %939 = vector.broadcast %936 : f32 to vector<16x16xf32>
    %940 = arith.mulf %939, %938 : vector<16x16xf32>
    %941 = arith.addf %935, %940 : vector<16x16xf32>
    %c66_570 = arith.constant 66 : index
    %942 = memref.load %arg4[%c66_570] : memref<81xf32, #tpu.memory_space<smem>>
    %c1_571 = arith.constant 1 : index
    %c5_572 = arith.constant 5 : index
    %c4_573 = arith.constant 4 : index
    %943 = vector.load %arg8[%c1_571, %c5_572, %c4_573] : memref<3x26x26xf32, #tpu.memory_space<vmem>>, vector<1x16x16xf32>
    %944 = vector.shape_cast %943 : vector<1x16x16xf32> to vector<16x16xf32>
    %945 = vector.broadcast %942 : f32 to vector<16x16xf32>
    %946 = arith.mulf %945, %944 : vector<16x16xf32>
    %947 = arith.addf %941, %946 : vector<16x16xf32>
    %c67_574 = arith.constant 67 : index
    %948 = memref.load %arg4[%c67_574] : memref<81xf32, #tpu.memory_space<smem>>
    %c1_575 = arith.constant 1 : index
    %c5_576 = arith.constant 5 : index
    %c5_577 = arith.constant 5 : index
    %949 = vector.load %arg8[%c1_575, %c5_576, %c5_577] : memref<3x26x26xf32, #tpu.memory_space<vmem>>, vector<1x16x16xf32>
    %950 = vector.shape_cast %949 : vector<1x16x16xf32> to vector<16x16xf32>
    %951 = vector.broadcast %948 : f32 to vector<16x16xf32>
    %952 = arith.mulf %951, %950 : vector<16x16xf32>
    %953 = arith.addf %947, %952 : vector<16x16xf32>
    %c68_578 = arith.constant 68 : index
    %954 = memref.load %arg4[%c68_578] : memref<81xf32, #tpu.memory_space<smem>>
    %c1_579 = arith.constant 1 : index
    %c5_580 = arith.constant 5 : index
    %c6_581 = arith.constant 6 : index
    %955 = vector.load %arg8[%c1_579, %c5_580, %c6_581] : memref<3x26x26xf32, #tpu.memory_space<vmem>>, vector<1x16x16xf32>
    %956 = vector.shape_cast %955 : vector<1x16x16xf32> to vector<16x16xf32>
    %957 = vector.broadcast %954 : f32 to vector<16x16xf32>
    %958 = arith.mulf %957, %956 : vector<16x16xf32>
    %959 = arith.addf %953, %958 : vector<16x16xf32>
    %c69_582 = arith.constant 69 : index
    %960 = memref.load %arg4[%c69_582] : memref<81xf32, #tpu.memory_space<smem>>
    %c1_583 = arith.constant 1 : index
    %c6_584 = arith.constant 6 : index
    %c4_585 = arith.constant 4 : index
    %961 = vector.load %arg8[%c1_583, %c6_584, %c4_585] : memref<3x26x26xf32, #tpu.memory_space<vmem>>, vector<1x16x16xf32>
    %962 = vector.shape_cast %961 : vector<1x16x16xf32> to vector<16x16xf32>
    %963 = vector.broadcast %960 : f32 to vector<16x16xf32>
    %964 = arith.mulf %963, %962 : vector<16x16xf32>
    %965 = arith.addf %959, %964 : vector<16x16xf32>
    %c70_586 = arith.constant 70 : index
    %966 = memref.load %arg4[%c70_586] : memref<81xf32, #tpu.memory_space<smem>>
    %c1_587 = arith.constant 1 : index
    %c6_588 = arith.constant 6 : index
    %c5_589 = arith.constant 5 : index
    %967 = vector.load %arg8[%c1_587, %c6_588, %c5_589] : memref<3x26x26xf32, #tpu.memory_space<vmem>>, vector<1x16x16xf32>
    %968 = vector.shape_cast %967 : vector<1x16x16xf32> to vector<16x16xf32>
    %969 = vector.broadcast %966 : f32 to vector<16x16xf32>
    %970 = arith.mulf %969, %968 : vector<16x16xf32>
    %971 = arith.addf %965, %970 : vector<16x16xf32>
    %c71_590 = arith.constant 71 : index
    %972 = memref.load %arg4[%c71_590] : memref<81xf32, #tpu.memory_space<smem>>
    %c1_591 = arith.constant 1 : index
    %c6_592 = arith.constant 6 : index
    %c6_593 = arith.constant 6 : index
    %973 = vector.load %arg8[%c1_591, %c6_592, %c6_593] : memref<3x26x26xf32, #tpu.memory_space<vmem>>, vector<1x16x16xf32>
    %974 = vector.shape_cast %973 : vector<1x16x16xf32> to vector<16x16xf32>
    %975 = vector.broadcast %972 : f32 to vector<16x16xf32>
    %976 = arith.mulf %975, %974 : vector<16x16xf32>
    %977 = arith.addf %971, %976 : vector<16x16xf32>
    %c72_594 = arith.constant 72 : index
    %978 = memref.load %arg4[%c72_594] : memref<81xf32, #tpu.memory_space<smem>>
    %c2_595 = arith.constant 2 : index
    %c4_596 = arith.constant 4 : index
    %c4_597 = arith.constant 4 : index
    %979 = vector.load %arg8[%c2_595, %c4_596, %c4_597] : memref<3x26x26xf32, #tpu.memory_space<vmem>>, vector<1x16x16xf32>
    %980 = vector.shape_cast %979 : vector<1x16x16xf32> to vector<16x16xf32>
    %981 = vector.broadcast %978 : f32 to vector<16x16xf32>
    %982 = arith.mulf %981, %980 : vector<16x16xf32>
    %983 = arith.addf %977, %982 : vector<16x16xf32>
    %c73_598 = arith.constant 73 : index
    %984 = memref.load %arg4[%c73_598] : memref<81xf32, #tpu.memory_space<smem>>
    %c2_599 = arith.constant 2 : index
    %c4_600 = arith.constant 4 : index
    %c5_601 = arith.constant 5 : index
    %985 = vector.load %arg8[%c2_599, %c4_600, %c5_601] : memref<3x26x26xf32, #tpu.memory_space<vmem>>, vector<1x16x16xf32>
    %986 = vector.shape_cast %985 : vector<1x16x16xf32> to vector<16x16xf32>
    %987 = vector.broadcast %984 : f32 to vector<16x16xf32>
    %988 = arith.mulf %987, %986 : vector<16x16xf32>
    %989 = arith.addf %983, %988 : vector<16x16xf32>
    %c74_602 = arith.constant 74 : index
    %990 = memref.load %arg4[%c74_602] : memref<81xf32, #tpu.memory_space<smem>>
    %c2_603 = arith.constant 2 : index
    %c4_604 = arith.constant 4 : index
    %c6_605 = arith.constant 6 : index
    %991 = vector.load %arg8[%c2_603, %c4_604, %c6_605] : memref<3x26x26xf32, #tpu.memory_space<vmem>>, vector<1x16x16xf32>
    %992 = vector.shape_cast %991 : vector<1x16x16xf32> to vector<16x16xf32>
    %993 = vector.broadcast %990 : f32 to vector<16x16xf32>
    %994 = arith.mulf %993, %992 : vector<16x16xf32>
    %995 = arith.addf %989, %994 : vector<16x16xf32>
    %c75_606 = arith.constant 75 : index
    %996 = memref.load %arg4[%c75_606] : memref<81xf32, #tpu.memory_space<smem>>
    %c2_607 = arith.constant 2 : index
    %c5_608 = arith.constant 5 : index
    %c4_609 = arith.constant 4 : index
    %997 = vector.load %arg8[%c2_607, %c5_608, %c4_609] : memref<3x26x26xf32, #tpu.memory_space<vmem>>, vector<1x16x16xf32>
    %998 = vector.shape_cast %997 : vector<1x16x16xf32> to vector<16x16xf32>
    %999 = vector.broadcast %996 : f32 to vector<16x16xf32>
    %1000 = arith.mulf %999, %998 : vector<16x16xf32>
    %1001 = arith.addf %995, %1000 : vector<16x16xf32>
    %c76_610 = arith.constant 76 : index
    %1002 = memref.load %arg4[%c76_610] : memref<81xf32, #tpu.memory_space<smem>>
    %c2_611 = arith.constant 2 : index
    %c5_612 = arith.constant 5 : index
    %c5_613 = arith.constant 5 : index
    %1003 = vector.load %arg8[%c2_611, %c5_612, %c5_613] : memref<3x26x26xf32, #tpu.memory_space<vmem>>, vector<1x16x16xf32>
    %1004 = vector.shape_cast %1003 : vector<1x16x16xf32> to vector<16x16xf32>
    %1005 = vector.broadcast %1002 : f32 to vector<16x16xf32>
    %1006 = arith.mulf %1005, %1004 : vector<16x16xf32>
    %1007 = arith.addf %1001, %1006 : vector<16x16xf32>
    %c77_614 = arith.constant 77 : index
    %1008 = memref.load %arg4[%c77_614] : memref<81xf32, #tpu.memory_space<smem>>
    %c2_615 = arith.constant 2 : index
    %c5_616 = arith.constant 5 : index
    %c6_617 = arith.constant 6 : index
    %1009 = vector.load %arg8[%c2_615, %c5_616, %c6_617] : memref<3x26x26xf32, #tpu.memory_space<vmem>>, vector<1x16x16xf32>
    %1010 = vector.shape_cast %1009 : vector<1x16x16xf32> to vector<16x16xf32>
    %1011 = vector.broadcast %1008 : f32 to vector<16x16xf32>
    %1012 = arith.mulf %1011, %1010 : vector<16x16xf32>
    %1013 = arith.addf %1007, %1012 : vector<16x16xf32>
    %c78_618 = arith.constant 78 : index
    %1014 = memref.load %arg4[%c78_618] : memref<81xf32, #tpu.memory_space<smem>>
    %c2_619 = arith.constant 2 : index
    %c6_620 = arith.constant 6 : index
    %c4_621 = arith.constant 4 : index
    %1015 = vector.load %arg8[%c2_619, %c6_620, %c4_621] : memref<3x26x26xf32, #tpu.memory_space<vmem>>, vector<1x16x16xf32>
    %1016 = vector.shape_cast %1015 : vector<1x16x16xf32> to vector<16x16xf32>
    %1017 = vector.broadcast %1014 : f32 to vector<16x16xf32>
    %1018 = arith.mulf %1017, %1016 : vector<16x16xf32>
    %1019 = arith.addf %1013, %1018 : vector<16x16xf32>
    %c79_622 = arith.constant 79 : index
    %1020 = memref.load %arg4[%c79_622] : memref<81xf32, #tpu.memory_space<smem>>
    %c2_623 = arith.constant 2 : index
    %c6_624 = arith.constant 6 : index
    %c5_625 = arith.constant 5 : index
    %1021 = vector.load %arg8[%c2_623, %c6_624, %c5_625] : memref<3x26x26xf32, #tpu.memory_space<vmem>>, vector<1x16x16xf32>
    %1022 = vector.shape_cast %1021 : vector<1x16x16xf32> to vector<16x16xf32>
    %1023 = vector.broadcast %1020 : f32 to vector<16x16xf32>
    %1024 = arith.mulf %1023, %1022 : vector<16x16xf32>
    %1025 = arith.addf %1019, %1024 : vector<16x16xf32>
    %c80_626 = arith.constant 80 : index
    %1026 = memref.load %arg4[%c80_626] : memref<81xf32, #tpu.memory_space<smem>>
    %c2_627 = arith.constant 2 : index
    %c6_628 = arith.constant 6 : index
    %c6_629 = arith.constant 6 : index
    %1027 = vector.load %arg8[%c2_627, %c6_628, %c6_629] : memref<3x26x26xf32, #tpu.memory_space<vmem>>, vector<1x16x16xf32>
    %1028 = vector.shape_cast %1027 : vector<1x16x16xf32> to vector<16x16xf32>
    %1029 = vector.broadcast %1026 : f32 to vector<16x16xf32>
    %1030 = arith.mulf %1029, %1028 : vector<16x16xf32>
    %1031 = arith.addf %1025, %1030 : vector<16x16xf32>
    %c0_630 = arith.constant 0 : index
    %c2_631 = arith.constant 2 : index
    %c4_632 = arith.constant 4 : index
    %c4_633 = arith.constant 4 : index
    %1032 = vector.load %arg1[%c0_630, %c2_631, %c4_632, %c4_633] : memref<1x3x24x24xf32, #tpu.memory_space<vmem>>, vector<1x1x16x16xf32>
    %1033 = vector.shape_cast %1032 : vector<1x1x16x16xf32> to vector<16x16xf32>
    %1034 = arith.addf %1033, %1031 : vector<16x16xf32>
    %cst_634 = arith.constant -1.000000e+00 : f32
    %cst_635 = arith.constant 1.000000e+00 : f32
    %1035 = vector.broadcast %cst_634 : f32 to vector<16x16xf32>
    %1036 = arith.maximumf %1035, %1034 : vector<16x16xf32>
    %1037 = vector.broadcast %cst_635 : f32 to vector<16x16xf32>
    %1038 = arith.minimumf %1037, %1036 : vector<16x16xf32>
    %c0_636 = arith.constant 0 : index
    %c2_637 = arith.constant 2 : index
    %c0_638 = arith.constant 0 : index
    %c0_639 = arith.constant 0 : index
    %1039 = vector.load %arg6[%c0_636, %c2_637, %c0_638, %c0_639] : memref<1x3x16x16xf32, #tpu.memory_space<vmem>>, vector<1x1x16x16xf32>
    %1040 = vector.shape_cast %1039 : vector<1x1x16x16xf32> to vector<16x16xf32>
    %1041 = vector.shape_cast %1038 : vector<16x16xf32> to vector<1x1x16x16xf32>
    tpu.vector_store %arg6[%c0_636, %c2_637, %c0_638, %c0_639], %1041 {strides = array<i32>} : memref<1x3x16x16xf32, #tpu.memory_space<vmem>>, vector<1x1x16x16xf32>,
    return
  }
  func.func @transform_0(%arg0: i32) -> (i32, i32, i32, i32) {
    %c0_i32 = arith.constant 0 : i32
    %c0_i32_0 = arith.constant 0 : i32
    %c0_i32_1 = arith.constant 0 : i32
    %c0_i32_2 = arith.constant 0 : i32
    return %arg0, %c0_i32, %c0_i32_0, %c0_i32_1 : i32, i32, i32, i32
  }
  func.func @transform_1(%arg0: i32) -> i32 {
    %c0_i32 = arith.constant 0 : i32
    %c0_i32_0 = arith.constant 0 : i32
    return %c0_i32 : i32
  }
  func.func @transform_2(%arg0: i32) -> i32 {
    %c0_i32 = arith.constant 0 : i32
    %c0_i32_0 = arith.constant 0 : i32
    return %c0_i32 : i32
  }
  func.func @transform_3(%arg0: i32) -> i32 {
    %c0_i32 = arith.constant 0 : i32
    %c0_i32_0 = arith.constant 0 : i32
    return %c0_i32 : i32
  }
  func.func @transform_4(%arg0: i32) -> i32 {
    %c0_i32 = arith.constant 0 : i32
    %c0_i32_0 = arith.constant 0 : i32
    return %c0_i32 : i32
  }
  func.func @transform_5(%arg0: i32) -> (i32, i32, i32, i32) {
    %c0_i32 = arith.constant 0 : i32
    %c0_i32_0 = arith.constant 0 : i32
    %c0_i32_1 = arith.constant 0 : i32
    %c0_i32_2 = arith.constant 0 : i32
    return %arg0, %c0_i32, %c0_i32_0, %c0_i32_1 : i32, i32, i32, i32
  }
}

</mosaic_0001>

<llo_original>
// kernel: naive_ae_8decode.2
$region0: #{naive_ae_8decode.2}
  #allocation0 [shape = 'u32[]', space=smem, size = 0x4, offset = 0x4, fixed_abs, tag = 'smem constant byte address 0x4 - core index']
  #allocation1 [shape = 'u32[144,128]{1,0:T(1,128)}', space=vmem, size = 0x12000, scoped, tag = 'internal scratch']
  %s0 = inlined_call_operand.vmem [shape: bf16[32,192], index: 0, kind: input, shape index: {}]
  %s1 = inlined_call_operand.vmem [shape: bf16[192,192], index: 1, kind: input, shape index: {}]
  %s2 = inlined_call_operand.vmem [shape: f32[1,192], index: 2, kind: input, shape index: {}]
  %s3 = inlined_call_operand.vmem [shape: f32[32,192], index: 3, kind: output, shape index: {}]
  %s4 = sld [smem:[#allocation0]]
  $region22: #{naive_ae_8decode.2} parent=0
    _
  %s6 = ssub.s32 1, %s4
  %s7 = scalar_select 0, %s6, %s4
  // Predicated region
  $region2: #{naive_ae_8decode.2} parent=0 // pred_check
    _
  $region3: #{naive_ae_8decode.2} parent=0 // pred_check_branch
    %9 = sbr.rel (0) target = $region5
  $region4: #{naive_ae_8decode.2} parent=0 // pred_region
    _
  $region5: #{naive_ae_8decode.2} parent=0 // pred_fallthru
    _
  // Predicated region
  $region6: #{naive_ae_8decode.2} parent=0 // pred_check
    _
  $region7: #{naive_ae_8decode.2} parent=0 // pred_check_branch
    %11 = sbr.rel (0) target = $region9
  $region8: #{naive_ae_8decode.2} parent=0 // pred_region
    _
  $region9: #{naive_ae_8decode.2} parent=0 // pred_fallthru
    _
  // Predicated region
  $region10: #{naive_ae_8decode.2} parent=0 // pred_check
    _
  $region11: #{naive_ae_8decode.2} parent=0 // pred_check_branch
    %13 = sbr.rel (0) target = $region13
  $region12: #{naive_ae_8decode.2} parent=0 // pred_region
    _
  $region13: #{naive_ae_8decode.2} parent=0 // pred_fallthru
    _
  %v15 = vld [vmem:[%s0] sm:$0xff]
  %v16 = vld [vmem:[%s0 + $0x8] sm:$0xff]
  %v17 = vld [vmem:[%s0 + $0x10] sm:$0xff]
  %v18 = vld [vmem:[%s0 + $0x18] sm:$0xff]
  %v19 = vld [vmem:[%s1] sm:$0xff]
  %v20 = vld [vmem:[%s1 + $0x8] sm:$0xff]
  %v21 = vld [vmem:[%s1 + $0x10] sm:$0xff]
  %v22 = vld [vmem:[%s1 + $0x18] sm:$0xff]
  %v23 = vld [vmem:[%s1 + $0x20] sm:$0xff]
  %v24 = vld [vmem:[%s1 + $0x28] sm:$0xff]
  %v25 = vld [vmem:[%s1 + $0x30] sm:$0xff]
  %v26 = vld [vmem:[%s1 + $0x38] sm:$0xff]
  %v27 = vld [vmem:[%s1 + $0x40] sm:$0xff]
  %v28 = vld [vmem:[%s1 + $0x48] sm:$0xff]
  %v29 = vld [vmem:[%s1 + $0x50] sm:$0xff]
  %v30 = vld [vmem:[%s1 + $0x58] sm:$0xff]
  %v31 = vld [vmem:[%s1 + $0x60] sm:$0xff]
  %v32 = vld [vmem:[%s1 + $0x68] sm:$0xff]
  %v33 = vld [vmem:[%s1 + $0x70] sm:$0xff]
  %v34 = vld [vmem:[%s1 + $0x78] sm:$0xff]
  %v35 = vld [vmem:[%s1 + $0x80] sm:$0xff]
  %v36 = vld [vmem:[%s1 + $0x88] sm:$0xff]
  %v37 = vld [vmem:[%s1 + $0x90] sm:$0xff]
  %v38 = vld [vmem:[%s1 + $0x98] sm:$0xff]
  %v39 = vld [vmem:[%s1 + $0xa0] sm:$0xff]
  %v40 = vld [vmem:[%s1 + $0xa8] sm:$0xff]
  %v41 = vld [vmem:[%s1 + $0xb0] sm:$0xff]
  %v42 = vld [vmem:[%s1 + $0xb8] sm:$0xff]
  %v43 = vld [vmem:[%s2] sm:$0x3]
  %v45 = vlaneseq
  %v46 = vshrl.u32 %v45, 7
  %v47 = vsub.s32 0, %v46
  %v48 = vrot.slane %v43, %v47
  %v49 = vlaneseq
  %v50 = vshrl.u32 %v49, 7
  %v51 = vsub.s32 1, %v50
  %v52 = vrot.slane %v43, %v51
  %v59 = vunpack.c.l.b16 %v15
  %v60 = vunpack.c.h.b16 %v15
  %v61 = vunpack.c.l.b16 %v16
  %v62 = vunpack.c.h.b16 %v16
  %v63 = vunpack.c.l.b16 %v17
  %v64 = vunpack.c.h.b16 %v17
  %v65 = vunpack.c.l.b16 %v18
  %v66 = vunpack.c.h.b16 %v18
  %v67 = vpack.c.b16 %v61, %v59
  %v68 = vpack.c.b16 %v62, %v60
  %v69 = vpack.c.b16 %v65, %v63
  %v70 = vpack.c.b16 %v66, %v64
  %v97 = vunpack.c.l.b16 %v19
  %v98 = vunpack.c.h.b16 %v19
  %v99 = vunpack.c.l.b16 %v20
  %v100 = vunpack.c.h.b16 %v20
  %v101 = vunpack.c.l.b16 %v21
  %v102 = vunpack.c.h.b16 %v21
  %v103 = vunpack.c.l.b16 %v22
  %v104 = vunpack.c.h.b16 %v22
  %v105 = vunpack.c.l.b16 %v23
  %v106 = vunpack.c.h.b16 %v23
  %v107 = vunpack.c.l.b16 %v24
  %v108 = vunpack.c.h.b16 %v24
  %v109 = vunpack.c.l.b16 %v25
  %v110 = vunpack.c.h.b16 %v25
  %v111 = vunpack.c.l.b16 %v26
  %v112 = vunpack.c.h.b16 %v26
  %v113 = vunpack.c.l.b16 %v27
  %v114 = vunpack.c.h.b16 %v27
  %v115 = vunpack.c.l.b16 %v28
  %v116 = vunpack.c.h.b16 %v28
  %v117 = vunpack.c.l.b16 %v29
  %v118 = vunpack.c.h.b16 %v29
  %v119 = vunpack.c.l.b16 %v30
  %v120 = vunpack.c.h.b16 %v30
  %v121 = vunpack.c.l.b16 %v31
  %v122 = vunpack.c.h.b16 %v31
  %v123 = vunpack.c.l.b16 %v32
  %v124 = vunpack.c.h.b16 %v32
  %v125 = vunpack.c.l.b16 %v33
  %v126 = vunpack.c.h.b16 %v33
  %v127 = vunpack.c.l.b16 %v34
  %v128 = vunpack.c.h.b16 %v34
  %v129 = vunpack.c.l.b16 %v35
  %v130 = vunpack.c.h.b16 %v35
  %v131 = vunpack.c.l.b16 %v36
  %v132 = vunpack.c.h.b16 %v36
  %v133 = vunpack.c.l.b16 %v37
  %v134 = vunpack.c.h.b16 %v37
  %v135 = vunpack.c.l.b16 %v38
  %v136 = vunpack.c.h.b16 %v38
  %v137 = vunpack.c.l.b16 %v39
  %v138 = vunpack.c.h.b16 %v39
  %v139 = vunpack.c.l.b16 %v40
  %v140 = vunpack.c.h.b16 %v40
  %v141 = vunpack.c.l.b16 %v41
  %v142 = vunpack.c.h.b16 %v41
  %v143 = vunpack.c.l.b16 %v42
  %v144 = vunpack.c.h.b16 %v42
  %v145 = vpack.c.b16 %v99, %v97
  %v146 = vpack.c.b16 %v100, %v98
  %v147 = vpack.c.b16 %v103, %v101
  %v148 = vpack.c.b16 %v104, %v102
  %v149 = vpack.c.b16 %v107, %v105
  %v150 = vpack.c.b16 %v108, %v106
  %v151 = vpack.c.b16 %v111, %v109
  %v152 = vpack.c.b16 %v112, %v110
  %v153 = vpack.c.b16 %v115, %v113
  %v154 = vpack.c.b16 %v116, %v114
  %v155 = vpack.c.b16 %v119, %v117
  %v156 = vpack.c.b16 %v120, %v118
  %v157 = vpack.c.b16 %v123, %v121
  %v158 = vpack.c.b16 %v124, %v122
  %v159 = vpack.c.b16 %v127, %v125
  %v160 = vpack.c.b16 %v128, %v126
  %v161 = vpack.c.b16 %v131, %v129
  %v162 = vpack.c.b16 %v132, %v130
  %v163 = vpack.c.b16 %v135, %v133
  %v164 = vpack.c.b16 %v136, %v134
  %v165 = vpack.c.b16 %v139, %v137
  %v166 = vpack.c.b16 %v140, %v138
  %v167 = vpack.c.b16 %v143, %v141
  %v168 = vpack.c.b16 %v144, %v142
  %vm193 = vcmask 523264
  %v195 = vsel %vm193, %v68, 0
  %v198 = vsel %vm193, %v70, 0
  %200 = vmatprep.subr.bf16.mxu0 %v146
  %201 = vmatpush1.bf16.msra.mxu0 %v145
  %202 = vmatprep.subr.bf16.mxu0 %v148
  %203 = vmatpush1.bf16.msra.mxu0 %v147
  %204 = vmatprep.subr.bf16.mxu0 %v150
  %205 = vmatpush1.bf16.msra.mxu0 %v149
  %206 = vmatprep.subr.bf16.mxu0 %v152
  %207 = vmatpush1.bf16.msra.mxu0 %v151
  %208 = vmatprep.subr.bf16.mxu0 %v154
  %209 = vmatpush1.bf16.msra.mxu0 %v153
  %210 = vmatprep.subr.bf16.mxu0 %v156
  %211 = vmatpush1.bf16.msra.mxu0 %v155
  %212 = vmatprep.subr.bf16.mxu0 %v158
  %213 = vmatpush1.bf16.msra.mxu0 %v157
  %214 = vmatprep.subr.bf16.mxu0 %v160
  %215 = vmatpush1.bf16.msra.mxu0 %v159
  %216 = vmatprep.subr.bf16.mxu0 %v162
  %217 = vmatpush1.bf16.msra.mxu0 %v161
  %218 = vmatprep.subr.bf16.mxu0 %v164
  %219 = vmatpush1.bf16.msra.mxu0 %v163
  %220 = vmatprep.subr.bf16.mxu0 %v166
  %221 = vmatpush1.bf16.msra.mxu0 %v165
  %222 = vmatprep.subr.bf16.mxu0 %v168
  %223 = vmatpush1.bf16.msra.mxu0 %v167
  %224 = vmatprep.subr.bf16.mxu0 0
  %225 = vmatpush1.bf16.msra.mxu0 0
  %226 = vmatprep.subr.bf16.mxu0 0
  %227 = vmatpush1.bf16.msra.mxu0 0
  %228 = vmatprep.subr.bf16.mxu0 0
  %229 = vmatpush1.bf16.msra.mxu0 0
  %230 = vmatprep.subr.bf16.mxu0 0
  %231 = vmatpush1.bf16.msra.mxu0 0
  %232 = vmatprep.mubr.bf16.mxu0 %v195
  %233 = vmatmul.mubr.bf16.gmra.mrb[0].mxu0 %v67
  %v234 = vpop.f32.mrb[0].mxu0
  %v235 = vadd.f32 %v48, %v234
  %v236 = vpop.f32.mrb[0].mxu0
  %v237 = vadd.f32 %v52, %v236
  %v238 = vpop.f32.mrb[0].mxu0
  %v239 = vadd.f32 %v48, %v238
  %v240 = vpop.f32.mrb[0].mxu0
  %v241 = vadd.f32 %v52, %v240
  %242 = vmatprep.mubr.bf16.mxu0 %v198
  %243 = vmatmul.mubr.bf16.gmra.mrb[0].mxu0 %v69
  %v244 = vpop.f32.mrb[0].mxu0
  %v245 = vadd.f32 %v48, %v244
  %v246 = vpop.f32.mrb[0].mxu0
  %v247 = vadd.f32 %v52, %v246
  %v248 = vpop.f32.mrb[0].mxu0
  %v249 = vadd.f32 %v48, %v248
  %v250 = vpop.f32.mrb[0].mxu0
  %v251 = vadd.f32 %v52, %v250
  %252 = vdwg.mxu0
  %253 = vst [vmem:[%s3] sm:$0xff] %v235
  %254 = vst.msk [vmem:[%s3 + $0x8] sm:$0xff] %vm193, %v237
  %255 = vst [vmem:[%s3 + $0x10] sm:$0xff] %v239
  %256 = vst.msk [vmem:[%s3 + $0x18] sm:$0xff] %vm193, %v241
  %257 = vst [vmem:[%s3 + $0x20] sm:$0xff] %v245
  %258 = vst.msk [vmem:[%s3 + $0x28] sm:$0xff] %vm193, %v247
  %259 = vst [vmem:[%s3 + $0x30] sm:$0xff] %v249
  %260 = vst.msk [vmem:[%s3 + $0x38] sm:$0xff] %vm193, %v251
  // Predicated region
  $region14: #{naive_ae_8decode.2} parent=0 // pred_check
    _
  $region15: #{naive_ae_8decode.2} parent=0 // pred_check_branch
    %262 = sbr.rel (0) target = $region17
  $region16: #{naive_ae_8decode.2} parent=0 // pred_region
    _
  $region17: #{naive_ae_8decode.2} parent=0 // pred_fallthru
    _
  // Predicated region
  $region18: #{naive_ae_8decode.2} parent=0 // pred_check
    _
  $region19: #{naive_ae_8decode.2} parent=0 // pred_check_branch
    %264 = sbr.rel (0) target = $region21
  $region20: #{naive_ae_8decode.2} parent=0 // pred_region
    _
  $region21: #{naive_ae_8decode.2} parent=0 // pred_fallthru
    _

// kernel: naive_ae_8decode.3
$region0: #{naive_ae_8decode.3}
  #allocation0 [shape = 'u32[]', space=smem, size = 0x4, offset = 0x4, fixed_abs, tag = 'smem constant byte address 0x4 - core index']
  #allocation1 [shape = 'u32[144,128]{1,0:T(1,128)}', space=vmem, size = 0x12000, scoped, tag = 'internal scratch']
  #allocation2 [shape = 'f32[3,26,26]{2,1,0:T(8,128)}', space=vmem, size = 0xc000, scoped, tag = 'scratch operand']
  #allocation3 [shape = 'f32[3,26,26]{2,1,0:T(8,128)}', space=vmem, size = 0xc000, scoped, tag = 'scratch operand']
  %s0 = inlined_call_operand.vmem [shape: f32[2,3,24,24], index: 0, kind: input, shape index: {}]
  %s1 = inlined_call_operand.vmem [shape: f32[81], index: 1, kind: input, shape index: {}]
  %s2 = inlined_call_operand.vmem [shape: f32[3], index: 2, kind: input, shape index: {}]
  %s3 = inlined_call_operand.vmem [shape: f32[81], index: 3, kind: input, shape index: {}]
  %s4 = inlined_call_operand.vmem [shape: f32[3], index: 4, kind: input, shape index: {}]
  %s5 = inlined_call_operand.hbm [shape: f32[2,3,16,16], index: 5, kind: output, shape index: {}]
  %s6 = sld [smem:[#allocation0]]
  $region69: #{naive_ae_8decode.3} parent=0
    _
  %s8 = ssub.s32 1, %s6
  %s9 = scalar_select 0, %s8, %s6
  $region1: #{naive_ae_8decode.3} parent=0
    #allocation4 [shape = 'u8[512]{0}', space=smem, size = 0x200, scoped, tag = 'input window, operand 1, single buffered']
    #allocation5 [shape = 's32[2]{0}', space=sflag, size = 0x8, scoped, tag = 'scoped memory for naive_ae_8decode.3']
    #allocation6 [shape = 's32[2]{0}', space=sflag, size = 0x8, scoped, tag = 'scoped memory for naive_ae_8decode.3']
    #allocation7 [shape = 'u8[512]{0}', space=smem, size = 0x200, scoped, tag = 'input window, operand 2, single buffered']
    #allocation8 [shape = 's32[1]{0}', space=sflag, size = 0x4, scoped, tag = 'scoped memory for naive_ae_8decode.3']
    #allocation9 [shape = 'u8[512]{0}', space=smem, size = 0x200, scoped, tag = 'input window, operand 3, single buffered']
    #allocation10 [shape = 'u8[512]{0}', space=smem, size = 0x200, scoped, tag = 'input window, operand 4, single buffered']
    #allocation11 [shape = 's32[1]{0}', space=sflag, size = 0x4, scoped, tag = 'scoped memory for naive_ae_8decode.3']
    #allocation12 [shape = 'u8[49152]{0}', space=vmem, size = 0xc000, scoped, tag = 'output window, operand 0']
    %10 = vsyncpa [#allocation6], 0
    %11 = vsyncpa [#allocation8], 0
    %12 = vsyncpa [#allocation11], 0
    %13 = vsyncpa [#allocation5], 0
    %s14 = scalar_lea.sflag [#allocation5], 1
    %15 = vsyncpa %s14, 0
    loop: start=0, step=1, limit=4
    $region2: #{naive_ae_8decode.3} parent=1 // loop_pre_header
      _
    $region3: #{naive_ae_8decode.3} parent=1 // loop_header
      %s17 = sphi 0, %s21
      %p18 = scmp.ge.s32.totalorder %s17, 4
      %s27 = sphi 0, %s29
      %s30 = sphi 0, %s27
      %s31 = sphi 0, %s30
      %s47 = sphi 0, %s31
      %s51 = sphi 0, %s51
      %s53 = sphi 0, %s51
      %s54 = sphi 0, %s53
      %s68 = sphi 0, %s54
      %s72 = sphi 0, %s72
      %s74 = sphi 0, %s72
      %s75 = sphi 0, %s74
      %s89 = sphi 0, %s75
      %s93 = sphi 0, %s93
      %s95 = sphi 0, %s93
      %s96 = sphi 0, %s95
      %s110 = sphi 0, %s96
      %s114 = sphi 0, %s114
      %s116 = sphi 0, %s114
      %s117 = sphi 0, %s116
      %s131 = sphi 0, %s117
      %s137 = sphi 0, %s139
      %s140 = sphi 0, %s137
      %s141 = sphi 0, %s140
      %s157 = sphi 0, %s141
    $region4: #{naive_ae_8decode.3} parent=1 // loop_header_branch
      %20 = sbr.rel (%p18) target = $region8
    $region5: #{naive_ae_8decode.3} parent=1 // loop_body
      %s22 = ssub.s32 %s17, 1
      %s23 = ssub.s32 %s17, 2
      %s24 = sadd.s32 %s17, 1
      %s25 = ssub.s32 %s17, %s24
      %p26 = scmp.eq.s32.totalorder %s25, 0
      %s28 = sadd.s32 %s27, 1
      %s29 = scalar_select %p26, %s27, %s28
      %p32 = pneg %p26
      %p33 = scmp.eq.s32.totalorder %s17, 1
      %p34 = por %p32, %p33
      %p35 = scmp.ne.s32.totalorder %s27, %s30
      %p36 = scmp.eq.s32.totalorder %s17, 0
      %p37 = por %p35, %p36
      %p38 = scmp.ne.s32.totalorder %s27, %s30
      %p39 = scmp.eq.s32.totalorder %s22, 1
      %p40 = por %p38, %p39
      %p41 = scmp.ne.s32.totalorder %s30, %s31
      %p42 = scmp.eq.s32.totalorder %s22, 0
      %p43 = por %p41, %p42
      %p44 = scmp.ne.s32.totalorder %s30, %s31
      %p45 = scmp.eq.s32.totalorder %s23, 1
      %p46 = por %p44, %p45
      %p48 = scmp.ne.s32.totalorder %s31, %s47
      %p49 = scmp.eq.s32.totalorder %s23, 0
      %p50 = por %p48, %p49
      %s52 = sadd.s32 %s51, 1
      %p55 = scmp.eq.s32.totalorder %s17, 1
      %p56 = scmp.ne.s32.totalorder %s51, %s53
      %p57 = scmp.eq.s32.totalorder %s17, 0
      %p58 = por %p56, %p57
      %p59 = scmp.ne.s32.totalorder %s51, %s53
      %p60 = scmp.eq.s32.totalorder %s22, 1
      %p61 = por %p59, %p60
      %p62 = scmp.ne.s32.totalorder %s53, %s54
      %p63 = scmp.eq.s32.totalorder %s22, 0
      %p64 = por %p62, %p63
      %p65 = scmp.ne.s32.totalorder %s53, %s54
      %p66 = scmp.eq.s32.totalorder %s23, 1
      %p67 = por %p65, %p66
      %p69 = scmp.ne.s32.totalorder %s54, %s68
      %p70 = scmp.eq.s32.totalorder %s23, 0
      %p71 = por %p69, %p70
      %s73 = sadd.s32 %s72, 1
      %p76 = scmp.eq.s32.totalorder %s17, 1
      %p77 = scmp.ne.s32.totalorder %s72, %s74
      %p78 = scmp.eq.s32.totalorder %s17, 0
      %p79 = por %p77, %p78
      %p80 = scmp.ne.s32.totalorder %s72, %s74
      %p81 = scmp.eq.s32.totalorder %s22, 1
      %p82 = por %p80, %p81
      %p83 = scmp.ne.s32.totalorder %s74, %s75
      %p84 = scmp.eq.s32.totalorder %s22, 0
      %p85 = por %p83, %p84
      %p86 = scmp.ne.s32.totalorder %s74, %s75
      %p87 = scmp.eq.s32.totalorder %s23, 1
      %p88 = por %p86, %p87
      %p90 = scmp.ne.s32.totalorder %s75, %s89
      %p91 = scmp.eq.s32.totalorder %s23, 0
      %p92 = por %p90, %p91
      %s94 = sadd.s32 %s93, 1
      %p97 = scmp.eq.s32.totalorder %s17, 1
      %p98 = scmp.ne.s32.totalorder %s93, %s95
      %p99 = scmp.eq.s32.totalorder %s17, 0
      %p100 = por %p98, %p99
      %p101 = scmp.ne.s32.totalorder %s93, %s95
      %p102 = scmp.eq.s32.totalorder %s22, 1
      %p103 = por %p101, %p102
      %p104 = scmp.ne.s32.totalorder %s95, %s96
      %p105 = scmp.eq.s32.totalorder %s22, 0
      %p106 = por %p104, %p105
      %p107 = scmp.ne.s32.totalorder %s95, %s96
      %p108 = scmp.eq.s32.totalorder %s23, 1
      %p109 = por %p107, %p108
      %p111 = scmp.ne.s32.totalorder %s96, %s110
      %p112 = scmp.eq.s32.totalorder %s23, 0
      %p113 = por %p111, %p112
      %s115 = sadd.s32 %s114, 1
      %p118 = scmp.eq.s32.totalorder %s17, 1
      %p119 = scmp.ne.s32.totalorder %s114, %s116
      %p120 = scmp.eq.s32.totalorder %s17, 0
      %p121 = por %p119, %p120
      %p122 = scmp.ne.s32.totalorder %s114, %s116
      %p123 = scmp.eq.s32.totalorder %s22, 1
      %p124 = por %p122, %p123
      %p125 = scmp.ne.s32.totalorder %s116, %s117
      %p126 = scmp.eq.s32.totalorder %s22, 0
      %p127 = por %p125, %p126
      %p128 = scmp.ne.s32.totalorder %s116, %s117
      %p129 = scmp.eq.s32.totalorder %s23, 1
      %p130 = por %p128, %p129
      %p132 = scmp.ne.s32.totalorder %s117, %s131
      %p133 = scmp.eq.s32.totalorder %s23, 0
      %p134 = por %p132, %p133
      %s135 = ssub.s32 %s17, %s24
      %p136 = scmp.eq.s32.totalorder %s135, 0
      %s138 = sadd.s32 %s137, 1
      %s139 = scalar_select %p136, %s137, %s138
      %p142 = pneg %p136
      %p143 = scmp.eq.s32.totalorder %s17, 1
      %p144 = por %p142, %p143
      %p145 = scmp.ne.s32.totalorder %s137, %s140
      %p146 = scmp.eq.s32.totalorder %s17, 0
      %p147 = por %p145, %p146
      %p148 = scmp.ne.s32.totalorder %s137, %s140
      %p149 = scmp.eq.s32.totalorder %s22, 1
      %p150 = por %p148, %p149
      %p151 = scmp.ne.s32.totalorder %s140, %s141
      %p152 = scmp.eq.s32.totalorder %s22, 0
      %p153 = por %p151, %p152
      %p154 = scmp.ne.s32.totalorder %s140, %s141
      %p155 = scmp.eq.s32.totalorder %s23, 1
      %p156 = por %p154, %p155
      %p158 = scmp.ne.s32.totalorder %s141, %s157
      %p159 = scmp.eq.s32.totalorder %s23, 0
      %p160 = por %p158, %p159
      %p161 = scmp.le.s32.totalorder 1, %s17
      %p162 = scmp.lt.s32.totalorder %s17, 3
      %p163 = pnand %p161, %p162
      %p164 = pneg %p163
      // Predicated region
      $region9: #{naive_ae_8decode.3} parent=5 // pred_check
        _
      $region10: #{naive_ae_8decode.3} parent=5 // pred_check_branch
        %166 = sbr.rel (%p163) target = $region12
      $region11: #{naive_ae_8decode.3} parent=5 // pred_region
        %s167 = ssub.s32 %s17, 1
        // Predicated region
        $region13: #{naive_ae_8decode.3} parent=11 // pred_check
          %p168 = pneg %p64
        $region14: #{naive_ae_8decode.3} parent=11 // pred_check_branch
          %170 = sbr.rel (%p168) target = $region16
        $region15: #{naive_ae_8decode.3} parent=11 // pred_region
          %s172 = ssub.s32 16, 16
          %173 = vsyncadd [#allocation6], %s172
          %s175 = sshll.u32 %s1, 4
          %s176 = int_to_ptr.vmem [resolvable:$true] %s175
          %178 = dma.vmem_to_smem %s176, 16, [#allocation4], [#allocation6]
        $region16: #{naive_ae_8decode.3} parent=11 // pred_fallthru
          _
        // Predicated region
        $region17: #{naive_ae_8decode.3} parent=11 // pred_check
          %p179 = pneg %p85
        $region18: #{naive_ae_8decode.3} parent=11 // pred_check_branch
          %181 = sbr.rel (%p179) target = $region20
        $region19: #{naive_ae_8decode.3} parent=11 // pred_region
          %s183 = ssub.s32 16, 16
          %184 = vsyncadd [#allocation8], %s183
          %s186 = sshll.u32 %s2, 4
          %s187 = int_to_ptr.vmem [resolvable:$true] %s186
          %189 = dma.vmem_to_smem %s187, 16, [#allocation7], [#allocation8]
        $region20: #{naive_ae_8decode.3} parent=11 // pred_fallthru
          _
        // Predicated region
        $region21: #{naive_ae_8decode.3} parent=11 // pred_check
          %p190 = pneg %p106
        $region22: #{naive_ae_8decode.3} parent=11 // pred_check_branch
          %192 = sbr.rel (%p190) target = $region24
        $region23: #{naive_ae_8decode.3} parent=11 // pred_region
          %s194 = ssub.s32 16, 16
          %195 = vsyncadd [#allocation8], %s194
          %s197 = sshll.u32 %s3, 4
          %s198 = int_to_ptr.vmem [resolvable:$true] %s197
          %200 = dma.vmem_to_smem %s198, 16, [#allocation9], [#allocation8]
        $region24: #{naive_ae_8decode.3} parent=11 // pred_fallthru
          _
        // Predicated region
        $region25: #{naive_ae_8decode.3} parent=11 // pred_check
          %p201 = pneg %p127
        $region26: #{naive_ae_8decode.3} parent=11 // pred_check_branch
          %203 = sbr.rel (%p201) target = $region28
        $region27: #{naive_ae_8decode.3} parent=11 // pred_region
          %s205 = ssub.s32 16, 16
          %206 = vsyncadd [#allocation11], %s205
          %s208 = sshll.u32 %s4, 4
          %s209 = int_to_ptr.vmem [resolvable:$true] %s208
          %211 = dma.vmem_to_smem %s209, 16, [#allocation10], [#allocation11]
        $region28: #{naive_ae_8decode.3} parent=11 // pred_fallthru
          _
      $region12: #{naive_ae_8decode.3} parent=5 // pred_fallthru
        _
      %p212 = scmp.lt.s32.totalorder %s17, 2
      // Predicated region
      $region29: #{naive_ae_8decode.3} parent=5 // pred_check
        %p213 = pneg %p212
      $region30: #{naive_ae_8decode.3} parent=5 // pred_check_branch
        %215 = sbr.rel (%p213) target = $region32
      $region31: #{naive_ae_8decode.3} parent=5 // pred_region
        // Predicated region
        $region33: #{naive_ae_8decode.3} parent=31 // pred_check
          %p216 = pneg %p37
        $region34: #{naive_ae_8decode.3} parent=31 // pred_check_branch
          %218 = sbr.rel (%p216) target = $region36
        $region35: #{naive_ae_8decode.3} parent=31 // pred_region
          %p219 = scmp.lt.s32.totalorder %s17, 1
          %s220 = scalar_select %p219, %s17, 1
          %s221 = smul.addr %s220, 9
          %s222 = smul.addr %s221, 8
          %s223 = scalar_lea.vmem %s0, %s222
        $region36: #{naive_ae_8decode.3} parent=31 // pred_fallthru
          _
      $region32: #{naive_ae_8decode.3} parent=5 // pred_fallthru
        _
      %p224 = scmp.le.s32.totalorder 1, %s17
      %p225 = scmp.lt.s32.totalorder %s17, 3
      %p226 = pnand %p224, %p225
      %p227 = pneg %p226
      // Predicated region
      $region37: #{naive_ae_8decode.3} parent=5 // pred_check
        _
      $region38: #{naive_ae_8decode.3} parent=5 // pred_check_branch
        %229 = sbr.rel (%p226) target = $region40
      $region39: #{naive_ae_8decode.3} parent=5 // pred_region
        %s230 = ssub.s32 %s17, 1
        // Predicated region
        $region41: #{naive_ae_8decode.3} parent=39 // pred_check
          %p231 = pneg %p64
        $region42: #{naive_ae_8decode.3} parent=39 // pred_check_branch
          %233 = sbr.rel (%p231) target = $region44
        $region43: #{naive_ae_8decode.3} parent=39 // pred_region
          %234 = dma.done [#allocation6], 16
        $region44: #{naive_ae_8decode.3} parent=39 // pred_fallthru
          _
        // Predicated region
        $region45: #{naive_ae_8decode.3} parent=39 // pred_check
          %p235 = pneg %p85
        $region46: #{naive_ae_8decode.3} parent=39 // pred_check_branch
          %237 = sbr.rel (%p235) target = $region48
        $region47: #{naive_ae_8decode.3} parent=39 // pred_region
          %238 = dma.done [#allocation8], 16
        $region48: #{naive_ae_8decode.3} parent=39 // pred_fallthru
          _
        // Predicated region
        $region49: #{naive_ae_8decode.3} parent=39 // pred_check
          %p239 = pneg %p106
        $region50: #{naive_ae_8decode.3} parent=39 // pred_check_branch
          %241 = sbr.rel (%p239) target = $region52
        $region51: #{naive_ae_8decode.3} parent=39 // pred_region
          %242 = dma.done [#allocation8], 16
        $region52: #{naive_ae_8decode.3} parent=39 // pred_fallthru
          _
        // Predicated region
        $region53: #{naive_ae_8decode.3} parent=39 // pred_check
          %p243 = pneg %p127
        $region54: #{naive_ae_8decode.3} parent=39 // pred_check_branch
          %245 = sbr.rel (%p243) target = $region56
        $region55: #{naive_ae_8decode.3} parent=39 // pred_region
          %246 = dma.done [#allocation11], 16
        $region56: #{naive_ae_8decode.3} parent=39 // pred_fallthru
          _
        %247 = sfence
        %p248 = scmp.lt.s32.totalorder %s22, 1
        %s249 = scalar_select %p248, %s22, 1
        %s250 = smul.addr %s249, 9
        %s251 = smul.addr %s250, 8
        %s252 = scalar_lea.vmem %s0, %s251
        %p253 = pneg %p43
        %p254 = pneg %p40
        %p255 = pneg %p64
        %p256 = pneg %p61
        %p257 = pneg %p85
        %p258 = pneg %p82
        %p259 = pneg %p106
        %p260 = pneg %p103
        %p261 = pneg %p127
        %p262 = pneg %p124
        %p263 = pneg %p153
        %p264 = pneg %p150
        %s265 = sand.u32 %s140, 1
        %s266 = scalar_lea.sflag [#allocation5], %s265
        %s267 = sand.u32 %s140, 1
        %s268 = smul.addr %s267, 48
        %s269 = scalar_lea.vmem [#allocation12], %s268
        %p270 = scmp.lt.s32.totalorder %s22, 1
        %s271 = scalar_select %p270, %s22, 1
        %s272 = smul.addr %s271, 9
        %s273 = smul.addr %s272, 8
        %s274 = scalar_lea.vmem %s0, %s273
        %vm275 = vcmask 211968
        %276 = vst.msk [vmem:[#allocation2] sm:$0xff] %vm275, 0.0
        %277 = vst.msk [vmem:[#allocation2 + $0x8] sm:$0xff] %vm275, 0.0
        %278 = vst.msk [vmem:[#allocation2 + $0x10] sm:$0xff] %vm275, 0.0
        %vm279 = vcmask 205824
        %280 = vst.msk [vmem:[#allocation2 + $0x18] sm:$0x3] %vm279, 0.0
        %281 = vst.msk [vmem:[#allocation2 + $0x20] sm:$0xff] %vm275, 0.0
        %282 = vst.msk [vmem:[#allocation2 + $0x28] sm:$0xff] %vm275, 0.0
        %283 = vst.msk [vmem:[#allocation2 + $0x30] sm:$0xff] %vm275, 0.0
        %284 = vst.msk [vmem:[#allocation2 + $0x38] sm:$0x3] %vm279, 0.0
        %285 = vst.msk [vmem:[#allocation2 + $0x40] sm:$0xff] %vm275, 0.0
        %286 = vst.msk [vmem:[#allocation2 + $0x48] sm:$0xff] %vm275, 0.0
        %287 = vst.msk [vmem:[#allocation2 + $0x50] sm:$0xff] %vm275, 0.0
        %288 = vst.msk [vmem:[#allocation2 + $0x58] sm:$0x3] %vm279, 0.0
        %289 = vst.msk [vmem:[#allocation3] sm:$0xff] %vm275, 0.0
        %290 = vst.msk [vmem:[#allocation3 + $0x8] sm:$0xff] %vm275, 0.0
        %291 = vst.msk [vmem:[#allocation3 + $0x10] sm:$0xff] %vm275, 0.0
        %292 = vst.msk [vmem:[#allocation3 + $0x18] sm:$0x3] %vm279, 0.0
        %293 = vst.msk [vmem:[#allocation3 + $0x20] sm:$0xff] %vm275, 0.0
        %294 = vst.msk [vmem:[#allocation3 + $0x28] sm:$0xff] %vm275, 0.0
        %295 = vst.msk [vmem:[#allocation3 + $0x30] sm:$0xff] %vm275, 0.0
        %296 = vst.msk [vmem:[#allocation3 + $0x38] sm:$0x3] %vm279, 0.0
        %297 = vst.msk [vmem:[#allocation3 + $0x40] sm:$0xff] %vm275, 0.0
        %298 = vst.msk [vmem:[#allocation3 + $0x48] sm:$0xff] %vm275, 0.0
        %299 = vst.msk [vmem:[#allocation3 + $0x50] sm:$0xff] %vm275, 0.0
        %300 = vst.msk [vmem:[#allocation3 + $0x58] sm:$0x3] %vm279, 0.0
        %v301 = vld [vmem:[%s274] sm:$0xff]
        %v302 = vld [vmem:[%s274 + $0x8] sm:$0xff]
        %v303 = vld [vmem:[%s274 + $0x10] sm:$0xff]
        %307 = vrot.lane.b32.xlu0 %v301, 1
        %v308 = vpop.permute.xlu0 %307
        %309 = vrot.lane.b32.xlu0 %v302, 1
        %v310 = vpop.permute.xlu0 %309
        %311 = vrot.lane.b32.xlu0 %v303, 1
        %v312 = vpop.permute.xlu0 %311
        %vm316 = vcmask 203784
        %317 = vst.msk [vmem:[#allocation2 + $0x1] sm:$0xff] %vm316, %v308
        %318 = vst.msk [vmem:[#allocation2 + $0x9] sm:$0xff] %vm316, %v310
        %319 = vst.msk [vmem:[#allocation2 + $0x11] sm:$0xff] %vm316, %v312
        %s320 = scalar_lea.vmem %s274, 24
        %v321 = vld [vmem:[%s320] sm:$0xff]
        %v322 = vld [vmem:[%s320 + $0x8] sm:$0xff]
        %v323 = vld [vmem:[%s320 + $0x10] sm:$0xff]
        %327 = vrot.lane.b32.xlu0 %v321, 1
        %v328 = vpop.permute.xlu0 %327
        %329 = vrot.lane.b32.xlu0 %v322, 1
        %v330 = vpop.permute.xlu0 %329
        %331 = vrot.lane.b32.xlu0 %v323, 1
        %v332 = vpop.permute.xlu0 %331
        %s336 = scalar_lea.vmem [#allocation2], 32
        %337 = vst.msk [vmem:[%s336 + $0x1] sm:$0xff] %vm316, %v328
        %338 = vst.msk [vmem:[%s336 + $0x9] sm:$0xff] %vm316, %v330
        %339 = vst.msk [vmem:[%s336 + $0x11] sm:$0xff] %vm316, %v332
        %s340 = scalar_lea.vmem %s274, 48
        %v341 = vld [vmem:[%s340] sm:$0xff]
        %v342 = vld [vmem:[%s340 + $0x8] sm:$0xff]
        %v343 = vld [vmem:[%s340 + $0x10] sm:$0xff]
        %347 = vrot.lane.b32.xlu0 %v341, 1
        %v348 = vpop.permute.xlu0 %347
        %349 = vrot.lane.b32.xlu0 %v342, 1
        %v350 = vpop.permute.xlu0 %349
        %351 = vrot.lane.b32.xlu0 %v343, 1
        %v352 = vpop.permute.xlu0 %351
        %s356 = scalar_lea.vmem [#allocation2], 64
        %357 = vst.msk [vmem:[%s356 + $0x1] sm:$0xff] %vm316, %v348
        %358 = vst.msk [vmem:[%s356 + $0x9] sm:$0xff] %vm316, %v350
        %359 = vst.msk [vmem:[%s356 + $0x11] sm:$0xff] %vm316, %v352
        %s360 = sld [smem:[#allocation7]]
        %v361 = vstv %s360
        %s362 = sld [smem:[#allocation4]]
        %v363 = vld [vmem:[#allocation2] sm:$0xff]
        %v364 = vld [vmem:[#allocation2 + $0x8] sm:$0xff]
        %v365 = vld [vmem:[#allocation2 + $0x10] sm:$0xff]
        %v366 = vstv %s362
        %v367 = vmul.f32 %v366, %v363
        %v368 = vmul.f32 %v366, %v364
        %v369 = vmul.f32 %v366, %v365
        %v370 = vadd.f32 %v361, %v367
        %v371 = vadd.f32 %v361, %v368
        %v372 = vadd.f32 %v361, %v369
        %s373 = sld [smem:[#allocation4 + $0x1]]
        %v374 = vstv %s373
        %v375 = vmul.f32 %v374, %v363
        %v376 = vmul.f32 %v374, %v364
        %v377 = vmul.f32 %v374, %v365
        %381 = vrot.lane.b32.xlu0 %v375, 127
        %v382 = vpop.permute.xlu0 %381
        %383 = vrot.lane.b32.xlu0 %v376, 127
        %v384 = vpop.permute.xlu0 %383
        %385 = vrot.lane.b32.xlu0 %v377, 127
        %v386 = vpop.permute.xlu0 %385
        %v390 = vadd.f32 %v370, %v382
        %v391 = vadd.f32 %v371, %v384
        %v392 = vadd.f32 %v372, %v386
        %s393 = sld [smem:[#allocation4 + $0x2]]
        %v394 = vstv %s393
        %v395 = vmul.f32 %v394, %v363
        %v396 = vmul.f32 %v394, %v364
        %v397 = vmul.f32 %v394, %v365
        %401 = vrot.lane.b32.xlu0 %v395, 126
        %v402 = vpop.permute.xlu0 %401
        %403 = vrot.lane.b32.xlu0 %v396, 126
        %v404 = vpop.permute.xlu0 %403
        %405 = vrot.lane.b32.xlu0 %v397, 126
        %v406 = vpop.permute.xlu0 %405
        %v410 = vadd.f32 %v390, %v402
        %v411 = vadd.f32 %v391, %v404
        %v412 = vadd.f32 %v392, %v406
        %s413 = sld [smem:[#allocation4 + $0x3]]
        %v414 = vld [vmem:[#allocation2 + $0x1] sm:$0xff]
        %v415 = vld [vmem:[#allocation2 + $0x9] sm:$0xff]
        %v416 = vld [vmem:[#allocation2 + $0x11] sm:$0xff]
        %v417 = vstv %s413
        %v418 = vmul.f32 %v417, %v414
        %v419 = vmul.f32 %v417, %v415
        %v420 = vmul.f32 %v417, %v416
        %v421 = vadd.f32 %v410, %v418
        %v422 = vadd.f32 %v411, %v419
        %v423 = vadd.f32 %v412, %v420
        %s424 = sld [smem:[#allocation4 + $0x4]]
        %v425 = vstv %s424
        %v426 = vmul.f32 %v425, %v414
        %v427 = vmul.f32 %v425, %v415
        %v428 = vmul.f32 %v425, %v416
        %432 = vrot.lane.b32.xlu0 %v426, 127
        %v433 = vpop.permute.xlu0 %432
        %434 = vrot.lane.b32.xlu0 %v427, 127
        %v435 = vpop.permute.xlu0 %434
        %436 = vrot.lane.b32.xlu0 %v428, 127
        %v437 = vpop.permute.xlu0 %436
        %v441 = vadd.f32 %v421, %v433
        %v442 = vadd.f32 %v422, %v435
        %v443 = vadd.f32 %v423, %v437
        %s444 = sld [smem:[#allocation4 + $0x5]]
        %v445 = vstv %s444
        %v446 = vmul.f32 %v445, %v414
        %v447 = vmul.f32 %v445, %v415
        %v448 = vmul.f32 %v445, %v416
        %452 = vrot.lane.b32.xlu0 %v446, 126
        %v453 = vpop.permute.xlu0 %452
        %454 = vrot.lane.b32.xlu0 %v447, 126
        %v455 = vpop.permute.xlu0 %454
        %456 = vrot.lane.b32.xlu0 %v448, 126
        %v457 = vpop.permute.xlu0 %456
        %v461 = vadd.f32 %v441, %v453
        %v462 = vadd.f32 %v442, %v455
        %v463 = vadd.f32 %v443, %v457
        %s464 = sld [smem:[#allocation4 + $0x6]]
        %v465 = vld [vmem:[#allocation2 + $0x2] sm:$0xff]
        %v466 = vld [vmem:[#allocation2 + $0xa] sm:$0xff]
        %v467 = vld [vmem:[#allocation2 + $0x12] sm:$0xff]
        %v468 = vstv %s464
        %v469 = vmul.f32 %v468, %v465
        %v470 = vmul.f32 %v468, %v466
        %v471 = vmul.f32 %v468, %v467
        %v472 = vadd.f32 %v461, %v469
        %v473 = vadd.f32 %v462, %v470
        %v474 = vadd.f32 %v463, %v471
        %s475 = sld [smem:[#allocation4 + $0x7]]
        %v476 = vstv %s475
        %v477 = vmul.f32 %v476, %v465
        %v478 = vmul.f32 %v476, %v466
        %v479 = vmul.f32 %v476, %v467
        %483 = vrot.lane.b32.xlu0 %v477, 127
        %v484 = vpop.permute.xlu0 %483
        %485 = vrot.lane.b32.xlu0 %v478, 127
        %v486 = vpop.permute.xlu0 %485
        %487 = vrot.lane.b32.xlu0 %v479, 127
        %v488 = vpop.permute.xlu0 %487
        %v492 = vadd.f32 %v472, %v484
        %v493 = vadd.f32 %v473, %v486
        %v494 = vadd.f32 %v474, %v488
        %s495 = sld [smem:[#allocation4 + $0x8]]
        %v496 = vstv %s495
        %v497 = vmul.f32 %v496, %v465
        %v498 = vmul.f32 %v496, %v466
        %v499 = vmul.f32 %v496, %v467
        %503 = vrot.lane.b32.xlu0 %v497, 126
        %v504 = vpop.permute.xlu0 %503
        %505 = vrot.lane.b32.xlu0 %v498, 126
        %v506 = vpop.permute.xlu0 %505
        %507 = vrot.lane.b32.xlu0 %v499, 126
        %v508 = vpop.permute.xlu0 %507
        %v512 = vadd.f32 %v492, %v504
        %v513 = vadd.f32 %v493, %v506
        %v514 = vadd.f32 %v494, %v508
        %s515 = sld [smem:[#allocation4 + $0x9]]
        %v516 = vld [vmem:[%s336] sm:$0xff]
        %v517 = vld [vmem:[%s336 + $0x8] sm:$0xff]
        %v518 = vld [vmem:[%s336 + $0x10] sm:$0xff]
        %v519 = vstv %s515
        %v520 = vmul.f32 %v519, %v516
        %v521 = vmul.f32 %v519, %v517
        %v522 = vmul.f32 %v519, %v518
        %v523 = vadd.f32 %v512, %v520
        %v524 = vadd.f32 %v513, %v521
        %v525 = vadd.f32 %v514, %v522
        %s526 = sld [smem:[#allocation4 + $0xa]]
        %v527 = vstv %s526
        %v528 = vmul.f32 %v527, %v516
        %v529 = vmul.f32 %v527, %v517
        %v530 = vmul.f32 %v527, %v518
        %534 = vrot.lane.b32.xlu0 %v528, 127
        %v535 = vpop.permute.xlu0 %534
        %536 = vrot.lane.b32.xlu0 %v529, 127
        %v537 = vpop.permute.xlu0 %536
        %538 = vrot.lane.b32.xlu0 %v530, 127
        %v539 = vpop.permute.xlu0 %538
        %v543 = vadd.f32 %v523, %v535
        %v544 = vadd.f32 %v524, %v537
        %v545 = vadd.f32 %v525, %v539
        %s546 = sld [smem:[#allocation4 + $0xb]]
        %v547 = vstv %s546
        %v548 = vmul.f32 %v547, %v516
        %v549 = vmul.f32 %v547, %v517
        %v550 = vmul.f32 %v547, %v518
        %554 = vrot.lane.b32.xlu0 %v548, 126
        %v555 = vpop.permute.xlu0 %554
        %556 = vrot.lane.b32.xlu0 %v549, 126
        %v557 = vpop.permute.xlu0 %556
        %558 = vrot.lane.b32.xlu0 %v550, 126
        %v559 = vpop.permute.xlu0 %558
        %v563 = vadd.f32 %v543, %v555
        %v564 = vadd.f32 %v544, %v557
        %v565 = vadd.f32 %v545, %v559
        %s566 = sld [smem:[#allocation4 + $0xc]]
        %v567 = vld [vmem:[%s336 + $0x1] sm:$0xff]
        %v568 = vld [vmem:[%s336 + $0x9] sm:$0xff]
        %v569 = vld [vmem:[%s336 + $0x11] sm:$0xff]
        %v570 = vstv %s566
        %v571 = vmul.f32 %v570, %v567
        %v572 = vmul.f32 %v570, %v568
        %v573 = vmul.f32 %v570, %v569
        %v574 = vadd.f32 %v563, %v571
        %v575 = vadd.f32 %v564, %v572
        %v576 = vadd.f32 %v565, %v573
        %s577 = sld [smem:[#allocation4 + $0xd]]
        %v578 = vstv %s577
        %v579 = vmul.f32 %v578, %v567
        %v580 = vmul.f32 %v578, %v568
        %v581 = vmul.f32 %v578, %v569
        %585 = vrot.lane.b32.xlu0 %v579, 127
        %v586 = vpop.permute.xlu0 %585
        %587 = vrot.lane.b32.xlu0 %v580, 127
        %v588 = vpop.permute.xlu0 %587
        %589 = vrot.lane.b32.xlu0 %v581, 127
        %v590 = vpop.permute.xlu0 %589
        %v594 = vadd.f32 %v574, %v586
        %v595 = vadd.f32 %v575, %v588
        %v596 = vadd.f32 %v576, %v590
        %s597 = sld [smem:[#allocation4 + $0xe]]
        %v598 = vstv %s597
        %v599 = vmul.f32 %v598, %v567
        %v600 = vmul.f32 %v598, %v568
        %v601 = vmul.f32 %v598, %v569
        %605 = vrot.lane.b32.xlu0 %v599, 126
        %v606 = vpop.permute.xlu0 %605
        %607 = vrot.lane.b32.xlu0 %v600, 126
        %v608 = vpop.permute.xlu0 %607
        %609 = vrot.lane.b32.xlu0 %v601, 126
        %v610 = vpop.permute.xlu0 %609
        %v614 = vadd.f32 %v594, %v606
        %v615 = vadd.f32 %v595, %v608
        %v616 = vadd.f32 %v596, %v610
        %s617 = sld [smem:[#allocation4 + $0xf]]
        %v618 = vld [vmem:[%s336 + $0x2] sm:$0xff]
        %v619 = vld [vmem:[%s336 + $0xa] sm:$0xff]
        %v620 = vld [vmem:[%s336 + $0x12] sm:$0xff]
        %v621 = vstv %s617
        %v622 = vmul.f32 %v621, %v618
        %v623 = vmul.f32 %v621, %v619
        %v624 = vmul.f32 %v621, %v620
        %v625 = vadd.f32 %v614, %v622
        %v626 = vadd.f32 %v615, %v623
        %v627 = vadd.f32 %v616, %v624
        %s628 = sld [smem:[#allocation4 + $0x10]]
        %v629 = vstv %s628
        %v630 = vmul.f32 %v629, %v618
        %v631 = vmul.f32 %v629, %v619
        %v632 = vmul.f32 %v629, %v620
        %636 = vrot.lane.b32.xlu0 %v630, 127
        %v637 = vpop.permute.xlu0 %636
        %638 = vrot.lane.b32.xlu0 %v631, 127
        %v639 = vpop.permute.xlu0 %638
        %640 = vrot.lane.b32.xlu0 %v632, 127
        %v641 = vpop.permute.xlu0 %640
        %v645 = vadd.f32 %v625, %v637
        %v646 = vadd.f32 %v626, %v639
        %v647 = vadd.f32 %v627, %v641
        %s648 = sld [smem:[#allocation4 + $0x11]]
        %v649 = vstv %s648
        %v650 = vmul.f32 %v649, %v618
        %v651 = vmul.f32 %v649, %v619
        %v652 = vmul.f32 %v649, %v620
        %656 = vrot.lane.b32.xlu0 %v650, 126
        %v657 = vpop.permute.xlu0 %656
        %658 = vrot.lane.b32.xlu0 %v651, 126
        %v659 = vpop.permute.xlu0 %658
        %660 = vrot.lane.b32.xlu0 %v652, 126
        %v661 = vpop.permute.xlu0 %660
        %v665 = vadd.f32 %v645, %v657
        %v666 = vadd.f32 %v646, %v659
        %v667 = vadd.f32 %v647, %v661
        %s668 = sld [smem:[#allocation4 + $0x12]]
        %v669 = vld [vmem:[%s356] sm:$0xff]
        %v670 = vld [vmem:[%s356 + $0x8] sm:$0xff]
        %v671 = vld [vmem:[%s356 + $0x10] sm:$0xff]
        %v672 = vstv %s668
        %v673 = vmul.f32 %v672, %v669
        %v674 = vmul.f32 %v672, %v670
        %v675 = vmul.f32 %v672, %v671
        %v676 = vadd.f32 %v665, %v673
        %v677 = vadd.f32 %v666, %v674
        %v678 = vadd.f32 %v667, %v675
        %s679 = sld [smem:[#allocation4 + $0x13]]
        %v680 = vstv %s679
        %v681 = vmul.f32 %v680, %v669
        %v682 = vmul.f32 %v680, %v670
        %v683 = vmul.f32 %v680, %v671
        %687 = vrot.lane.b32.xlu0 %v681, 127
        %v688 = vpop.permute.xlu0 %687
        %689 = vrot.lane.b32.xlu0 %v682, 127
        %v690 = vpop.permute.xlu0 %689
        %691 = vrot.lane.b32.xlu0 %v683, 127
        %v692 = vpop.permute.xlu0 %691
        %v696 = vadd.f32 %v676, %v688
        %v697 = vadd.f32 %v677, %v690
        %v698 = vadd.f32 %v678, %v692
        %s699 = sld [smem:[#allocation4 + $0x14]]
        %v700 = vstv %s699
        %v701 = vmul.f32 %v700, %v669
        %v702 = vmul.f32 %v700, %v670
        %v703 = vmul.f32 %v700, %v671
        %707 = vrot.lane.b32.xlu0 %v701, 126
        %v708 = vpop.permute.xlu0 %707
        %709 = vrot.lane.b32.xlu0 %v702, 126
        %v710 = vpop.permute.xlu0 %709
        %711 = vrot.lane.b32.xlu0 %v703, 126
        %v712 = vpop.permute.xlu0 %711
        %v716 = vadd.f32 %v696, %v708
        %v717 = vadd.f32 %v697, %v710
        %v718 = vadd.f32 %v698, %v712
        %s719 = sld [smem:[#allocation4 + $0x15]]
        %v720 = vld [vmem:[%s356 + $0x1] sm:$0xff]
        %v721 = vld [vmem:[%s356 + $0x9] sm:$0xff]
        %v722 = vld [vmem:[%s356 + $0x11] sm:$0xff]
        %v723 = vstv %s719
        %v724 = vmul.f32 %v723, %v720
        %v725 = vmul.f32 %v723, %v721
        %v726 = vmul.f32 %v723, %v722
        %v727 = vadd.f32 %v716, %v724
        %v728 = vadd.f32 %v717, %v725
        %v729 = vadd.f32 %v718, %v726
        %s730 = sld [smem:[#allocation4 + $0x16]]
        %v731 = vstv %s730
        %v732 = vmul.f32 %v731, %v720
        %v733 = vmul.f32 %v731, %v721
        %v734 = vmul.f32 %v731, %v722
        %738 = vrot.lane.b32.xlu0 %v732, 127
        %v739 = vpop.permute.xlu0 %738
        %740 = vrot.lane.b32.xlu0 %v733, 127
        %v741 = vpop.permute.xlu0 %740
        %742 = vrot.lane.b32.xlu0 %v734, 127
        %v743 = vpop.permute.xlu0 %742
        %v747 = vadd.f32 %v727, %v739
        %v748 = vadd.f32 %v728, %v741
        %v749 = vadd.f32 %v729, %v743
        %s750 = sld [smem:[#allocation4 + $0x17]]
        %v751 = vstv %s750
        %v752 = vmul.f32 %v751, %v720
        %v753 = vmul.f32 %v751, %v721
        %v754 = vmul.f32 %v751, %v722
        %758 = vrot.lane.b32.xlu0 %v752, 126
        %v759 = vpop.permute.xlu0 %758
        %760 = vrot.lane.b32.xlu0 %v753, 126
        %v761 = vpop.permute.xlu0 %760
        %762 = vrot.lane.b32.xlu0 %v754, 126
        %v763 = vpop.permute.xlu0 %762
        %v767 = vadd.f32 %v747, %v759
        %v768 = vadd.f32 %v748, %v761
        %v769 = vadd.f32 %v749, %v763
        %s770 = sld [smem:[#allocation4 + $0x18]]
        %v771 = vld [vmem:[%s356 + $0x2] sm:$0xff]
        %v772 = vld [vmem:[%s356 + $0xa] sm:$0xff]
        %v773 = vld [vmem:[%s356 + $0x12] sm:$0xff]
        %v774 = vstv %s770
        %v775 = vmul.f32 %v774, %v771
        %v776 = vmul.f32 %v774, %v772
        %v777 = vmul.f32 %v774, %v773
        %v778 = vadd.f32 %v767, %v775
        %v779 = vadd.f32 %v768, %v776
        %v780 = vadd.f32 %v769, %v777
        %s781 = sld [smem:[#allocation4 + $0x19]]
        %v782 = vstv %s781
        %v783 = vmul.f32 %v782, %v771
        %v784 = vmul.f32 %v782, %v772
        %v785 = vmul.f32 %v782, %v773
        %789 = vrot.lane.b32.xlu0 %v783, 127
        %v790 = vpop.permute.xlu0 %789
        %791 = vrot.lane.b32.xlu0 %v784, 127
        %v792 = vpop.permute.xlu0 %791
        %793 = vrot.lane.b32.xlu0 %v785, 127
        %v794 = vpop.permute.xlu0 %793
        %v798 = vadd.f32 %v778, %v790
        %v799 = vadd.f32 %v779, %v792
        %v800 = vadd.f32 %v780, %v794
        %s801 = sld [smem:[#allocation4 + $0x1a]]
        %v802 = vstv %s801
        %v803 = vmul.f32 %v802, %v771
        %v804 = vmul.f32 %v802, %v772
        %v805 = vmul.f32 %v802, %v773
        %809 = vrot.lane.b32.xlu0 %v803, 126
        %v810 = vpop.permute.xlu0 %809
        %811 = vrot.lane.b32.xlu0 %v804, 126
        %v812 = vpop.permute.xlu0 %811
        %813 = vrot.lane.b32.xlu0 %v805, 126
        %v814 = vpop.permute.xlu0 %813
        %v818 = vadd.f32 %v798, %v810
        %v819 = vadd.f32 %v799, %v812
        %v820 = vadd.f32 %v800, %v814
        %824 = vrot.lane.b32.xlu0 %v818, 1
        %v825 = vpop.permute.xlu0 %824
        %826 = vrot.lane.b32.xlu0 %v819, 1
        %v827 = vpop.permute.xlu0 %826
        %828 = vrot.lane.b32.xlu0 %v820, 1
        %v829 = vpop.permute.xlu0 %828
        %833 = vst.msk [vmem:[#allocation3 + $0x1] sm:$0xff] %vm316, %v825
        %834 = vst.msk [vmem:[#allocation3 + $0x9] sm:$0xff] %vm316, %v827
        %835 = vst.msk [vmem:[#allocation3 + $0x11] sm:$0xff] %vm316, %v829
        %s836 = sld [smem:[#allocation7 + $0x1]]
        %v837 = vstv %s836
        %s838 = sld [smem:[#allocation4 + $0x1b]]
        %v839 = vld [vmem:[#allocation2] sm:$0xff]
        %v840 = vld [vmem:[#allocation2 + $0x8] sm:$0xff]
        %v841 = vld [vmem:[#allocation2 + $0x10] sm:$0xff]
        %v842 = vstv %s838
        %v843 = vmul.f32 %v842, %v839
        %v844 = vmul.f32 %v842, %v840
        %v845 = vmul.f32 %v842, %v841
        %v846 = vadd.f32 %v837, %v843
        %v847 = vadd.f32 %v837, %v844
        %v848 = vadd.f32 %v837, %v845
        %s849 = sld [smem:[#allocation4 + $0x1c]]
        %v850 = vstv %s849
        %v851 = vmul.f32 %v850, %v839
        %v852 = vmul.f32 %v850, %v840
        %v853 = vmul.f32 %v850, %v841
        %857 = vrot.lane.b32.xlu0 %v851, 127
        %v858 = vpop.permute.xlu0 %857
        %859 = vrot.lane.b32.xlu0 %v852, 127
        %v860 = vpop.permute.xlu0 %859
        %861 = vrot.lane.b32.xlu0 %v853, 127
        %v862 = vpop.permute.xlu0 %861
        %v866 = vadd.f32 %v846, %v858
        %v867 = vadd.f32 %v847, %v860
        %v868 = vadd.f32 %v848, %v862
        %s869 = sld [smem:[#allocation4 + $0x1d]]
        %v870 = vstv %s869
        %v871 = vmul.f32 %v870, %v839
        %v872 = vmul.f32 %v870, %v840
        %v873 = vmul.f32 %v870, %v841
        %877 = vrot.lane.b32.xlu0 %v871, 126
        %v878 = vpop.permute.xlu0 %877
        %879 = vrot.lane.b32.xlu0 %v872, 126
        %v880 = vpop.permute.xlu0 %879
        %881 = vrot.lane.b32.xlu0 %v873, 126
        %v882 = vpop.permute.xlu0 %881
        %v886 = vadd.f32 %v866, %v878
        %v887 = vadd.f32 %v867, %v880
        %v888 = vadd.f32 %v868, %v882
        %s889 = sld [smem:[#allocation4 + $0x1e]]
        %v890 = vld [vmem:[#allocation2 + $0x1] sm:$0xff]
        %v891 = vld [vmem:[#allocation2 + $0x9] sm:$0xff]
        %v892 = vld [vmem:[#allocation2 + $0x11] sm:$0xff]
        %v893 = vstv %s889
        %v894 = vmul.f32 %v893, %v890
        %v895 = vmul.f32 %v893, %v891
        %v896 = vmul.f32 %v893, %v892
        %v897 = vadd.f32 %v886, %v894
        %v898 = vadd.f32 %v887, %v895
        %v899 = vadd.f32 %v888, %v896
        %s900 = sld [smem:[#allocation4 + $0x1f]]
        %v901 = vstv %s900
        %v902 = vmul.f32 %v901, %v890
        %v903 = vmul.f32 %v901, %v891
        %v904 = vmul.f32 %v901, %v892
        %908 = vrot.lane.b32.xlu0 %v902, 127
        %v909 = vpop.permute.xlu0 %908
        %910 = vrot.lane.b32.xlu0 %v903, 127
        %v911 = vpop.permute.xlu0 %910
        %912 = vrot.lane.b32.xlu0 %v904, 127
        %v913 = vpop.permute.xlu0 %912
        %v917 = vadd.f32 %v897, %v909
        %v918 = vadd.f32 %v898, %v911
        %v919 = vadd.f32 %v899, %v913
        %s920 = sld [smem:[#allocation4 + $0x20]]
        %v921 = vstv %s920
        %v922 = vmul.f32 %v921, %v890
        %v923 = vmul.f32 %v921, %v891
        %v924 = vmul.f32 %v921, %v892
        %928 = vrot.lane.b32.xlu0 %v922, 126
        %v929 = vpop.permute.xlu0 %928
        %930 = vrot.lane.b32.xlu0 %v923, 126
        %v931 = vpop.permute.xlu0 %930
        %932 = vrot.lane.b32.xlu0 %v924, 126
        %v933 = vpop.permute.xlu0 %932
        %v937 = vadd.f32 %v917, %v929
        %v938 = vadd.f32 %v918, %v931
        %v939 = vadd.f32 %v919, %v933
        %s940 = sld [smem:[#allocation4 + $0x21]]
        %v941 = vld [vmem:[#allocation2 + $0x2] sm:$0xff]
        %v942 = vld [vmem:[#allocation2 + $0xa] sm:$0xff]
        %v943 = vld [vmem:[#allocation2 + $0x12] sm:$0xff]
        %v944 = vstv %s940
        %v945 = vmul.f32 %v944, %v941
        %v946 = vmul.f32 %v944, %v942
        %v947 = vmul.f32 %v944, %v943
        %v948 = vadd.f32 %v937, %v945
        %v949 = vadd.f32 %v938, %v946
        %v950 = vadd.f32 %v939, %v947
        %s951 = sld [smem:[#allocation4 + $0x22]]
        %v952 = vstv %s951
        %v953 = vmul.f32 %v952, %v941
        %v954 = vmul.f32 %v952, %v942
        %v955 = vmul.f32 %v952, %v943
        %959 = vrot.lane.b32.xlu0 %v953, 127
        %v960 = vpop.permute.xlu0 %959
        %961 = vrot.lane.b32.xlu0 %v954, 127
        %v962 = vpop.permute.xlu0 %961
        %963 = vrot.lane.b32.xlu0 %v955, 127
        %v964 = vpop.permute.xlu0 %963
        %v968 = vadd.f32 %v948, %v960
        %v969 = vadd.f32 %v949, %v962
        %v970 = vadd.f32 %v950, %v964
        %s971 = sld [smem:[#allocation4 + $0x23]]
        %v972 = vstv %s971
        %v973 = vmul.f32 %v972, %v941
        %v974 = vmul.f32 %v972, %v942
        %v975 = vmul.f32 %v972, %v943
        %979 = vrot.lane.b32.xlu0 %v973, 126
        %v980 = vpop.permute.xlu0 %979
        %981 = vrot.lane.b32.xlu0 %v974, 126
        %v982 = vpop.permute.xlu0 %981
        %983 = vrot.lane.b32.xlu0 %v975, 126
        %v984 = vpop.permute.xlu0 %983
        %v988 = vadd.f32 %v968, %v980
        %v989 = vadd.f32 %v969, %v982
        %v990 = vadd.f32 %v970, %v984
        %s991 = sld [smem:[#allocation4 + $0x24]]
        %v992 = vld [vmem:[%s336] sm:$0xff]
        %v993 = vld [vmem:[%s336 + $0x8] sm:$0xff]
        %v994 = vld [vmem:[%s336 + $0x10] sm:$0xff]
        %v995 = vstv %s991
        %v996 = vmul.f32 %v995, %v992
        %v997 = vmul.f32 %v995, %v993
        %v998 = vmul.f32 %v995, %v994
        %v999 = vadd.f32 %v988, %v996
        %v1000 = vadd.f32 %v989, %v997
        %v1001 = vadd.f32 %v990, %v998
        %s1002 = sld [smem:[#allocation4 + $0x25]]
        %v1003 = vstv %s1002
        %v1004 = vmul.f32 %v1003, %v992
        %v1005 = vmul.f32 %v1003, %v993
        %v1006 = vmul.f32 %v1003, %v994
        %1010 = vrot.lane.b32.xlu0 %v1004, 127
        %v1011 = vpop.permute.xlu0 %1010
        %1012 = vrot.lane.b32.xlu0 %v1005, 127
        %v1013 = vpop.permute.xlu0 %1012
        %1014 = vrot.lane.b32.xlu0 %v1006, 127
        %v1015 = vpop.permute.xlu0 %1014
        %v1019 = vadd.f32 %v999, %v1011
        %v1020 = vadd.f32 %v1000, %v1013
        %v1021 = vadd.f32 %v1001, %v1015
        %s1022 = sld [smem:[#allocation4 + $0x26]]
        %v1023 = vstv %s1022
        %v1024 = vmul.f32 %v1023, %v992
        %v1025 = vmul.f32 %v1023, %v993
        %v1026 = vmul.f32 %v1023, %v994
        %1030 = vrot.lane.b32.xlu0 %v1024, 126
        %v1031 = vpop.permute.xlu0 %1030
        %1032 = vrot.lane.b32.xlu0 %v1025, 126
        %v1033 = vpop.permute.xlu0 %1032
        %1034 = vrot.lane.b32.xlu0 %v1026, 126
        %v1035 = vpop.permute.xlu0 %1034
        %v1039 = vadd.f32 %v1019, %v1031
        %v1040 = vadd.f32 %v1020, %v1033
        %v1041 = vadd.f32 %v1021, %v1035
        %s1042 = sld [smem:[#allocation4 + $0x27]]
        %v1043 = vld [vmem:[%s336 + $0x1] sm:$0xff]
        %v1044 = vld [vmem:[%s336 + $0x9] sm:$0xff]
        %v1045 = vld [vmem:[%s336 + $0x11] sm:$0xff]
        %v1046 = vstv %s1042
        %v1047 = vmul.f32 %v1046, %v1043
        %v1048 = vmul.f32 %v1046, %v1044
        %v1049 = vmul.f32 %v1046, %v1045
        %v1050 = vadd.f32 %v1039, %v1047
        %v1051 = vadd.f32 %v1040, %v1048
        %v1052 = vadd.f32 %v1041, %v1049
        %s1053 = sld [smem:[#allocation4 + $0x28]]
        %v1054 = vstv %s1053
        %v1055 = vmul.f32 %v1054, %v1043
        %v1056 = vmul.f32 %v1054, %v1044
        %v1057 = vmul.f32 %v1054, %v1045
        %1061 = vrot.lane.b32.xlu0 %v1055, 127
        %v1062 = vpop.permute.xlu0 %1061
        %1063 = vrot.lane.b32.xlu0 %v1056, 127
        %v1064 = vpop.permute.xlu0 %1063
        %1065 = vrot.lane.b32.xlu0 %v1057, 127
        %v1066 = vpop.permute.xlu0 %1065
        %v1070 = vadd.f32 %v1050, %v1062
        %v1071 = vadd.f32 %v1051, %v1064
        %v1072 = vadd.f32 %v1052, %v1066
        %s1073 = sld [smem:[#allocation4 + $0x29]]
        %v1074 = vstv %s1073
        %v1075 = vmul.f32 %v1074, %v1043
        %v1076 = vmul.f32 %v1074, %v1044
        %v1077 = vmul.f32 %v1074, %v1045
        %1081 = vrot.lane.b32.xlu0 %v1075, 126
        %v1082 = vpop.permute.xlu0 %1081
        %1083 = vrot.lane.b32.xlu0 %v1076, 126
        %v1084 = vpop.permute.xlu0 %1083
        %1085 = vrot.lane.b32.xlu0 %v1077, 126
        %v1086 = vpop.permute.xlu0 %1085
        %v1090 = vadd.f32 %v1070, %v1082
        %v1091 = vadd.f32 %v1071, %v1084
        %v1092 = vadd.f32 %v1072, %v1086
        %s1093 = sld [smem:[#allocation4 + $0x2a]]
        %v1094 = vld [vmem:[%s336 + $0x2] sm:$0xff]
        %v1095 = vld [vmem:[%s336 + $0xa] sm:$0xff]
        %v1096 = vld [vmem:[%s336 + $0x12] sm:$0xff]
        %v1097 = vstv %s1093
        %v1098 = vmul.f32 %v1097, %v1094
        %v1099 = vmul.f32 %v1097, %v1095
        %v1100 = vmul.f32 %v1097, %v1096
        %v1101 = vadd.f32 %v1090, %v1098
        %v1102 = vadd.f32 %v1091, %v1099
        %v1103 = vadd.f32 %v1092, %v1100
        %s1104 = sld [smem:[#allocation4 + $0x2b]]
        %v1105 = vstv %s1104
        %v1106 = vmul.f32 %v1105, %v1094
        %v1107 = vmul.f32 %v1105, %v1095
        %v1108 = vmul.f32 %v1105, %v1096
        %1112 = vrot.lane.b32.xlu0 %v1106, 127
        %v1113 = vpop.permute.xlu0 %1112
        %1114 = vrot.lane.b32.xlu0 %v1107, 127
        %v1115 = vpop.permute.xlu0 %1114
        %1116 = vrot.lane.b32.xlu0 %v1108, 127
        %v1117 = vpop.permute.xlu0 %1116
        %v1121 = vadd.f32 %v1101, %v1113
        %v1122 = vadd.f32 %v1102, %v1115
        %v1123 = vadd.f32 %v1103, %v1117
        %s1124 = sld [smem:[#allocation4 + $0x2c]]
        %v1125 = vstv %s1124
        %v1126 = vmul.f32 %v1125, %v1094
        %v1127 = vmul.f32 %v1125, %v1095
        %v1128 = vmul.f32 %v1125, %v1096
        %1132 = vrot.lane.b32.xlu0 %v1126, 126
        %v1133 = vpop.permute.xlu0 %1132
        %1134 = vrot.lane.b32.xlu0 %v1127, 126
        %v1135 = vpop.permute.xlu0 %1134
        %1136 = vrot.lane.b32.xlu0 %v1128, 126
        %v1137 = vpop.permute.xlu0 %1136
        %v1141 = vadd.f32 %v1121, %v1133
        %v1142 = vadd.f32 %v1122, %v1135
        %v1143 = vadd.f32 %v1123, %v1137
        %s1144 = sld [smem:[#allocation4 + $0x2d]]
        %v1145 = vld [vmem:[%s356] sm:$0xff]
        %v1146 = vld [vmem:[%s356 + $0x8] sm:$0xff]
        %v1147 = vld [vmem:[%s356 + $0x10] sm:$0xff]
        %v1148 = vstv %s1144
        %v1149 = vmul.f32 %v1148, %v1145
        %v1150 = vmul.f32 %v1148, %v1146
        %v1151 = vmul.f32 %v1148, %v1147
        %v1152 = vadd.f32 %v1141, %v1149
        %v1153 = vadd.f32 %v1142, %v1150
        %v1154 = vadd.f32 %v1143, %v1151
        %s1155 = sld [smem:[#allocation4 + $0x2e]]
        %v1156 = vstv %s1155
        %v1157 = vmul.f32 %v1156, %v1145
        %v1158 = vmul.f32 %v1156, %v1146
        %v1159 = vmul.f32 %v1156, %v1147
        %1163 = vrot.lane.b32.xlu0 %v1157, 127
        %v1164 = vpop.permute.xlu0 %1163
        %1165 = vrot.lane.b32.xlu0 %v1158, 127
        %v1166 = vpop.permute.xlu0 %1165
        %1167 = vrot.lane.b32.xlu0 %v1159, 127
        %v1168 = vpop.permute.xlu0 %1167
        %v1172 = vadd.f32 %v1152, %v1164
        %v1173 = vadd.f32 %v1153, %v1166
        %v1174 = vadd.f32 %v1154, %v1168
        %s1175 = sld [smem:[#allocation4 + $0x2f]]
        %v1176 = vstv %s1175
        %v1177 = vmul.f32 %v1176, %v1145
        %v1178 = vmul.f32 %v1176, %v1146
        %v1179 = vmul.f32 %v1176, %v1147
        %1183 = vrot.lane.b32.xlu0 %v1177, 126
        %v1184 = vpop.permute.xlu0 %1183
        %1185 = vrot.lane.b32.xlu0 %v1178, 126
        %v1186 = vpop.permute.xlu0 %1185
        %1187 = vrot.lane.b32.xlu0 %v1179, 126
        %v1188 = vpop.permute.xlu0 %1187
        %v1192 = vadd.f32 %v1172, %v1184
        %v1193 = vadd.f32 %v1173, %v1186
        %v1194 = vadd.f32 %v1174, %v1188
        %s1195 = sld [smem:[#allocation4 + $0x30]]
        %v1196 = vld [vmem:[%s356 + $0x1] sm:$0xff]
        %v1197 = vld [vmem:[%s356 + $0x9] sm:$0xff]
        %v1198 = vld [vmem:[%s356 + $0x11] sm:$0xff]
        %v1199 = vstv %s1195
        %v1200 = vmul.f32 %v1199, %v1196
        %v1201 = vmul.f32 %v1199, %v1197
        %v1202 = vmul.f32 %v1199, %v1198
        %v1203 = vadd.f32 %v1192, %v1200
        %v1204 = vadd.f32 %v1193, %v1201
        %v1205 = vadd.f32 %v1194, %v1202
        %s1206 = sld [smem:[#allocation4 + $0x31]]
        %v1207 = vstv %s1206
        %v1208 = vmul.f32 %v1207, %v1196
        %v1209 = vmul.f32 %v1207, %v1197
        %v1210 = vmul.f32 %v1207, %v1198
        %1214 = vrot.lane.b32.xlu0 %v1208, 127
        %v1215 = vpop.permute.xlu0 %1214
        %1216 = vrot.lane.b32.xlu0 %v1209, 127
        %v1217 = vpop.permute.xlu0 %1216
        %1218 = vrot.lane.b32.xlu0 %v1210, 127
        %v1219 = vpop.permute.xlu0 %1218
        %v1223 = vadd.f32 %v1203, %v1215
        %v1224 = vadd.f32 %v1204, %v1217
        %v1225 = vadd.f32 %v1205, %v1219
        %s1226 = sld [smem:[#allocation4 + $0x32]]
        %v1227 = vstv %s1226
        %v1228 = vmul.f32 %v1227, %v1196
        %v1229 = vmul.f32 %v1227, %v1197
        %v1230 = vmul.f32 %v1227, %v1198
        %1234 = vrot.lane.b32.xlu0 %v1228, 126
        %v1235 = vpop.permute.xlu0 %1234
        %1236 = vrot.lane.b32.xlu0 %v1229, 126
        %v1237 = vpop.permute.xlu0 %1236
        %1238 = vrot.lane.b32.xlu0 %v1230, 126
        %v1239 = vpop.permute.xlu0 %1238
        %v1243 = vadd.f32 %v1223, %v1235
        %v1244 = vadd.f32 %v1224, %v1237
        %v1245 = vadd.f32 %v1225, %v1239
        %s1246 = sld [smem:[#allocation4 + $0x33]]
        %v1247 = vld [vmem:[%s356 + $0x2] sm:$0xff]
        %v1248 = vld [vmem:[%s356 + $0xa] sm:$0xff]
        %v1249 = vld [vmem:[%s356 + $0x12] sm:$0xff]
        %v1250 = vstv %s1246
        %v1251 = vmul.f32 %v1250, %v1247
        %v1252 = vmul.f32 %v1250, %v1248
        %v1253 = vmul.f32 %v1250, %v1249
        %v1254 = vadd.f32 %v1243, %v1251
        %v1255 = vadd.f32 %v1244, %v1252
        %v1256 = vadd.f32 %v1245, %v1253
        %s1257 = sld [smem:[#allocation4 + $0x34]]
        %v1258 = vstv %s1257
        %v1259 = vmul.f32 %v1258, %v1247
        %v1260 = vmul.f32 %v1258, %v1248
        %v1261 = vmul.f32 %v1258, %v1249
        %1265 = vrot.lane.b32.xlu0 %v1259, 127
        %v1266 = vpop.permute.xlu0 %1265
        %1267 = vrot.lane.b32.xlu0 %v1260, 127
        %v1268 = vpop.permute.xlu0 %1267
        %1269 = vrot.lane.b32.xlu0 %v1261, 127
        %v1270 = vpop.permute.xlu0 %1269
        %v1274 = vadd.f32 %v1254, %v1266
        %v1275 = vadd.f32 %v1255, %v1268
        %v1276 = vadd.f32 %v1256, %v1270
        %s1277 = sld [smem:[#allocation4 + $0x35]]
        %v1278 = vstv %s1277
        %v1279 = vmul.f32 %v1278, %v1247
        %v1280 = vmul.f32 %v1278, %v1248
        %v1281 = vmul.f32 %v1278, %v1249
        %1285 = vrot.lane.b32.xlu0 %v1279, 126
        %v1286 = vpop.permute.xlu0 %1285
        %1287 = vrot.lane.b32.xlu0 %v1280, 126
        %v1288 = vpop.permute.xlu0 %1287
        %1289 = vrot.lane.b32.xlu0 %v1281, 126
        %v1290 = vpop.permute.xlu0 %1289
        %v1294 = vadd.f32 %v1274, %v1286
        %v1295 = vadd.f32 %v1275, %v1288
        %v1296 = vadd.f32 %v1276, %v1290
        %1300 = vrot.lane.b32.xlu0 %v1294, 1
        %v1301 = vpop.permute.xlu0 %1300
        %1302 = vrot.lane.b32.xlu0 %v1295, 1
        %v1303 = vpop.permute.xlu0 %1302
        %1304 = vrot.lane.b32.xlu0 %v1296, 1
        %v1305 = vpop.permute.xlu0 %1304
        %s1309 = scalar_lea.vmem [#allocation3], 32
        %1310 = vst.msk [vmem:[%s1309 + $0x1] sm:$0xff] %vm316, %v1301
        %1311 = vst.msk [vmem:[%s1309 + $0x9] sm:$0xff] %vm316, %v1303
        %1312 = vst.msk [vmem:[%s1309 + $0x11] sm:$0xff] %vm316, %v1305
        %s1313 = sld [smem:[#allocation7 + $0x2]]
        %v1314 = vstv %s1313
        %s1315 = sld [smem:[#allocation4 + $0x36]]
        %v1316 = vld [vmem:[#allocation2] sm:$0xff]
        %v1317 = vld [vmem:[#allocation2 + $0x8] sm:$0xff]
        %v1318 = vld [vmem:[#allocation2 + $0x10] sm:$0xff]
        %v1319 = vstv %s1315
        %v1320 = vmul.f32 %v1319, %v1316
        %v1321 = vmul.f32 %v1319, %v1317
        %v1322 = vmul.f32 %v1319, %v1318
        %v1323 = vadd.f32 %v1314, %v1320
        %v1324 = vadd.f32 %v1314, %v1321
        %v1325 = vadd.f32 %v1314, %v1322
        %s1326 = sld [smem:[#allocation4 + $0x37]]
        %v1327 = vstv %s1326
        %v1328 = vmul.f32 %v1327, %v1316
        %v1329 = vmul.f32 %v1327, %v1317
        %v1330 = vmul.f32 %v1327, %v1318
        %1334 = vrot.lane.b32.xlu0 %v1328, 127
        %v1335 = vpop.permute.xlu0 %1334
        %1336 = vrot.lane.b32.xlu0 %v1329, 127
        %v1337 = vpop.permute.xlu0 %1336
        %1338 = vrot.lane.b32.xlu0 %v1330, 127
        %v1339 = vpop.permute.xlu0 %1338
        %v1343 = vadd.f32 %v1323, %v1335
        %v1344 = vadd.f32 %v1324, %v1337
        %v1345 = vadd.f32 %v1325, %v1339
        %s1346 = sld [smem:[#allocation4 + $0x38]]
        %v1347 = vstv %s1346
        %v1348 = vmul.f32 %v1347, %v1316
        %v1349 = vmul.f32 %v1347, %v1317
        %v1350 = vmul.f32 %v1347, %v1318
        %1354 = vrot.lane.b32.xlu0 %v1348, 126
        %v1355 = vpop.permute.xlu0 %1354
        %1356 = vrot.lane.b32.xlu0 %v1349, 126
        %v1357 = vpop.permute.xlu0 %1356
        %1358 = vrot.lane.b32.xlu0 %v1350, 126
        %v1359 = vpop.permute.xlu0 %1358
        %v1363 = vadd.f32 %v1343, %v1355
        %v1364 = vadd.f32 %v1344, %v1357
        %v1365 = vadd.f32 %v1345, %v1359
        %s1366 = sld [smem:[#allocation4 + $0x39]]
        %v1367 = vld [vmem:[#allocation2 + $0x1] sm:$0xff]
        %v1368 = vld [vmem:[#allocation2 + $0x9] sm:$0xff]
        %v1369 = vld [vmem:[#allocation2 + $0x11] sm:$0xff]
        %v1370 = vstv %s1366
        %v1371 = vmul.f32 %v1370, %v1367
        %v1372 = vmul.f32 %v1370, %v1368
        %v1373 = vmul.f32 %v1370, %v1369
        %v1374 = vadd.f32 %v1363, %v1371
        %v1375 = vadd.f32 %v1364, %v1372
        %v1376 = vadd.f32 %v1365, %v1373
        %s1377 = sld [smem:[#allocation4 + $0x3a]]
        %v1378 = vstv %s1377
        %v1379 = vmul.f32 %v1378, %v1367
        %v1380 = vmul.f32 %v1378, %v1368
        %v1381 = vmul.f32 %v1378, %v1369
        %1385 = vrot.lane.b32.xlu0 %v1379, 127
        %v1386 = vpop.permute.xlu0 %1385
        %1387 = vrot.lane.b32.xlu0 %v1380, 127
        %v1388 = vpop.permute.xlu0 %1387
        %1389 = vrot.lane.b32.xlu0 %v1381, 127
        %v1390 = vpop.permute.xlu0 %1389
        %v1394 = vadd.f32 %v1374, %v1386
        %v1395 = vadd.f32 %v1375, %v1388
        %v1396 = vadd.f32 %v1376, %v1390
        %s1397 = sld [smem:[#allocation4 + $0x3b]]
        %v1398 = vstv %s1397
        %v1399 = vmul.f32 %v1398, %v1367
        %v1400 = vmul.f32 %v1398, %v1368
        %v1401 = vmul.f32 %v1398, %v1369
        %1405 = vrot.lane.b32.xlu0 %v1399, 126
        %v1406 = vpop.permute.xlu0 %1405
        %1407 = vrot.lane.b32.xlu0 %v1400, 126
        %v1408 = vpop.permute.xlu0 %1407
        %1409 = vrot.lane.b32.xlu0 %v1401, 126
        %v1410 = vpop.permute.xlu0 %1409
        %v1414 = vadd.f32 %v1394, %v1406
        %v1415 = vadd.f32 %v1395, %v1408
        %v1416 = vadd.f32 %v1396, %v1410
        %s1417 = sld [smem:[#allocation4 + $0x3c]]
        %v1418 = vld [vmem:[#allocation2 + $0x2] sm:$0xff]
        %v1419 = vld [vmem:[#allocation2 + $0xa] sm:$0xff]
        %v1420 = vld [vmem:[#allocation2 + $0x12] sm:$0xff]
        %v1421 = vstv %s1417
        %v1422 = vmul.f32 %v1421, %v1418
        %v1423 = vmul.f32 %v1421, %v1419
        %v1424 = vmul.f32 %v1421, %v1420
        %v1425 = vadd.f32 %v1414, %v1422
        %v1426 = vadd.f32 %v1415, %v1423
        %v1427 = vadd.f32 %v1416, %v1424
        %s1428 = sld [smem:[#allocation4 + $0x3d]]
        %v1429 = vstv %s1428
        %v1430 = vmul.f32 %v1429, %v1418
        %v1431 = vmul.f32 %v1429, %v1419
        %v1432 = vmul.f32 %v1429, %v1420
        %1436 = vrot.lane.b32.xlu0 %v1430, 127
        %v1437 = vpop.permute.xlu0 %1436
        %1438 = vrot.lane.b32.xlu0 %v1431, 127
        %v1439 = vpop.permute.xlu0 %1438
        %1440 = vrot.lane.b32.xlu0 %v1432, 127
        %v1441 = vpop.permute.xlu0 %1440
        %v1445 = vadd.f32 %v1425, %v1437
        %v1446 = vadd.f32 %v1426, %v1439
        %v1447 = vadd.f32 %v1427, %v1441
        %s1448 = sld [smem:[#allocation4 + $0x3e]]
        %v1449 = vstv %s1448
        %v1450 = vmul.f32 %v1449, %v1418
        %v1451 = vmul.f32 %v1449, %v1419
        %v1452 = vmul.f32 %v1449, %v1420
        %1456 = vrot.lane.b32.xlu0 %v1450, 126
        %v1457 = vpop.permute.xlu0 %1456
        %1458 = vrot.lane.b32.xlu0 %v1451, 126
        %v1459 = vpop.permute.xlu0 %1458
        %1460 = vrot.lane.b32.xlu0 %v1452, 126
        %v1461 = vpop.permute.xlu0 %1460
        %v1465 = vadd.f32 %v1445, %v1457
        %v1466 = vadd.f32 %v1446, %v1459
        %v1467 = vadd.f32 %v1447, %v1461
        %s1468 = sld [smem:[#allocation4 + $0x3f]]
        %v1469 = vld [vmem:[%s336] sm:$0xff]
        %v1470 = vld [vmem:[%s336 + $0x8] sm:$0xff]
        %v1471 = vld [vmem:[%s336 + $0x10] sm:$0xff]
        %v1472 = vstv %s1468
        %v1473 = vmul.f32 %v1472, %v1469
        %v1474 = vmul.f32 %v1472, %v1470
        %v1475 = vmul.f32 %v1472, %v1471
        %v1476 = vadd.f32 %v1465, %v1473
        %v1477 = vadd.f32 %v1466, %v1474
        %v1478 = vadd.f32 %v1467, %v1475
        %s1479 = sld [smem:[#allocation4 + $0x40]]
        %v1480 = vstv %s1479
        %v1481 = vmul.f32 %v1480, %v1469
        %v1482 = vmul.f32 %v1480, %v1470
        %v1483 = vmul.f32 %v1480, %v1471
        %1487 = vrot.lane.b32.xlu0 %v1481, 127
        %v1488 = vpop.permute.xlu0 %1487
        %1489 = vrot.lane.b32.xlu0 %v1482, 127
        %v1490 = vpop.permute.xlu0 %1489
        %1491 = vrot.lane.b32.xlu0 %v1483, 127
        %v1492 = vpop.permute.xlu0 %1491
        %v1496 = vadd.f32 %v1476, %v1488
        %v1497 = vadd.f32 %v1477, %v1490
        %v1498 = vadd.f32 %v1478, %v1492
        %s1499 = sld [smem:[#allocation4 + $0x41]]
        %v1500 = vstv %s1499
        %v1501 = vmul.f32 %v1500, %v1469
        %v1502 = vmul.f32 %v1500, %v1470
        %v1503 = vmul.f32 %v1500, %v1471
        %1507 = vrot.lane.b32.xlu0 %v1501, 126
        %v1508 = vpop.permute.xlu0 %1507
        %1509 = vrot.lane.b32.xlu0 %v1502, 126
        %v1510 = vpop.permute.xlu0 %1509
        %1511 = vrot.lane.b32.xlu0 %v1503, 126
        %v1512 = vpop.permute.xlu0 %1511
        %v1516 = vadd.f32 %v1496, %v1508
        %v1517 = vadd.f32 %v1497, %v1510
        %v1518 = vadd.f32 %v1498, %v1512
        %s1519 = sld [smem:[#allocation4 + $0x42]]
        %v1520 = vld [vmem:[%s336 + $0x1] sm:$0xff]
        %v1521 = vld [vmem:[%s336 + $0x9] sm:$0xff]
        %v1522 = vld [vmem:[%s336 + $0x11] sm:$0xff]
        %v1523 = vstv %s1519
        %v1524 = vmul.f32 %v1523, %v1520
        %v1525 = vmul.f32 %v1523, %v1521
        %v1526 = vmul.f32 %v1523, %v1522
        %v1527 = vadd.f32 %v1516, %v1524
        %v1528 = vadd.f32 %v1517, %v1525
        %v1529 = vadd.f32 %v1518, %v1526
        %s1530 = sld [smem:[#allocation4 + $0x43]]
        %v1531 = vstv %s1530
        %v1532 = vmul.f32 %v1531, %v1520
        %v1533 = vmul.f32 %v1531, %v1521
        %v1534 = vmul.f32 %v1531, %v1522
        %1538 = vrot.lane.b32.xlu0 %v1532, 127
        %v1539 = vpop.permute.xlu0 %1538
        %1540 = vrot.lane.b32.xlu0 %v1533, 127
        %v1541 = vpop.permute.xlu0 %1540
        %1542 = vrot.lane.b32.xlu0 %v1534, 127
        %v1543 = vpop.permute.xlu0 %1542
        %v1547 = vadd.f32 %v1527, %v1539
        %v1548 = vadd.f32 %v1528, %v1541
        %v1549 = vadd.f32 %v1529, %v1543
        %s1550 = sld [smem:[#allocation4 + $0x44]]
        %v1551 = vstv %s1550
        %v1552 = vmul.f32 %v1551, %v1520
        %v1553 = vmul.f32 %v1551, %v1521
        %v1554 = vmul.f32 %v1551, %v1522
        %1558 = vrot.lane.b32.xlu0 %v1552, 126
        %v1559 = vpop.permute.xlu0 %1558
        %1560 = vrot.lane.b32.xlu0 %v1553, 126
        %v1561 = vpop.permute.xlu0 %1560
        %1562 = vrot.lane.b32.xlu0 %v1554, 126
        %v1563 = vpop.permute.xlu0 %1562
        %v1567 = vadd.f32 %v1547, %v1559
        %v1568 = vadd.f32 %v1548, %v1561
        %v1569 = vadd.f32 %v1549, %v1563
        %s1570 = sld [smem:[#allocation4 + $0x45]]
        %v1571 = vld [vmem:[%s336 + $0x2] sm:$0xff]
        %v1572 = vld [vmem:[%s336 + $0xa] sm:$0xff]
        %v1573 = vld [vmem:[%s336 + $0x12] sm:$0xff]
        %v1574 = vstv %s1570
        %v1575 = vmul.f32 %v1574, %v1571
        %v1576 = vmul.f32 %v1574, %v1572
        %v1577 = vmul.f32 %v1574, %v1573
        %v1578 = vadd.f32 %v1567, %v1575
        %v1579 = vadd.f32 %v1568, %v1576
        %v1580 = vadd.f32 %v1569, %v1577
        %s1581 = sld [smem:[#allocation4 + $0x46]]
        %v1582 = vstv %s1581
        %v1583 = vmul.f32 %v1582, %v1571
        %v1584 = vmul.f32 %v1582, %v1572
        %v1585 = vmul.f32 %v1582, %v1573
        %1589 = vrot.lane.b32.xlu0 %v1583, 127
        %v1590 = vpop.permute.xlu0 %1589
        %1591 = vrot.lane.b32.xlu0 %v1584, 127
        %v1592 = vpop.permute.xlu0 %1591
        %1593 = vrot.lane.b32.xlu0 %v1585, 127
        %v1594 = vpop.permute.xlu0 %1593
        %v1598 = vadd.f32 %v1578, %v1590
        %v1599 = vadd.f32 %v1579, %v1592
        %v1600 = vadd.f32 %v1580, %v1594
        %s1601 = sld [smem:[#allocation4 + $0x47]]
        %v1602 = vstv %s1601
        %v1603 = vmul.f32 %v1602, %v1571
        %v1604 = vmul.f32 %v1602, %v1572
        %v1605 = vmul.f32 %v1602, %v1573
        %1609 = vrot.lane.b32.xlu0 %v1603, 126
        %v1610 = vpop.permute.xlu0 %1609
        %1611 = vrot.lane.b32.xlu0 %v1604, 126
        %v1612 = vpop.permute.xlu0 %1611
        %1613 = vrot.lane.b32.xlu0 %v1605, 126
        %v1614 = vpop.permute.xlu0 %1613
        %v1618 = vadd.f32 %v1598, %v1610
        %v1619 = vadd.f32 %v1599, %v1612
        %v1620 = vadd.f32 %v1600, %v1614
        %s1621 = sld [smem:[#allocation4 + $0x48]]
        %v1622 = vld [vmem:[%s356] sm:$0xff]
        %v1623 = vld [vmem:[%s356 + $0x8] sm:$0xff]
        %v1624 = vld [vmem:[%s356 + $0x10] sm:$0xff]
        %v1625 = vstv %s1621
        %v1626 = vmul.f32 %v1625, %v1622
        %v1627 = vmul.f32 %v1625, %v1623
        %v1628 = vmul.f32 %v1625, %v1624
        %v1629 = vadd.f32 %v1618, %v1626
        %v1630 = vadd.f32 %v1619, %v1627
        %v1631 = vadd.f32 %v1620, %v1628
        %s1632 = sld [smem:[#allocation4 + $0x49]]
        %v1633 = vstv %s1632
        %v1634 = vmul.f32 %v1633, %v1622
        %v1635 = vmul.f32 %v1633, %v1623
        %v1636 = vmul.f32 %v1633, %v1624
        %1640 = vrot.lane.b32.xlu0 %v1634, 127
        %v1641 = vpop.permute.xlu0 %1640
        %1642 = vrot.lane.b32.xlu0 %v1635, 127
        %v1643 = vpop.permute.xlu0 %1642
        %1644 = vrot.lane.b32.xlu0 %v1636, 127
        %v1645 = vpop.permute.xlu0 %1644
        %v1649 = vadd.f32 %v1629, %v1641
        %v1650 = vadd.f32 %v1630, %v1643
        %v1651 = vadd.f32 %v1631, %v1645
        %s1652 = sld [smem:[#allocation4 + $0x4a]]
        %v1653 = vstv %s1652
        %v1654 = vmul.f32 %v1653, %v1622
        %v1655 = vmul.f32 %v1653, %v1623
        %v1656 = vmul.f32 %v1653, %v1624
        %1660 = vrot.lane.b32.xlu0 %v1654, 126
        %v1661 = vpop.permute.xlu0 %1660
        %1662 = vrot.lane.b32.xlu0 %v1655, 126
        %v1663 = vpop.permute.xlu0 %1662
        %1664 = vrot.lane.b32.xlu0 %v1656, 126
        %v1665 = vpop.permute.xlu0 %1664
        %v1669 = vadd.f32 %v1649, %v1661
        %v1670 = vadd.f32 %v1650, %v1663
        %v1671 = vadd.f32 %v1651, %v1665
        %s1672 = sld [smem:[#allocation4 + $0x4b]]
        %v1673 = vld [vmem:[%s356 + $0x1] sm:$0xff]
        %v1674 = vld [vmem:[%s356 + $0x9] sm:$0xff]
        %v1675 = vld [vmem:[%s356 + $0x11] sm:$0xff]
        %v1676 = vstv %s1672
        %v1677 = vmul.f32 %v1676, %v1673
        %v1678 = vmul.f32 %v1676, %v1674
        %v1679 = vmul.f32 %v1676, %v1675
        %v1680 = vadd.f32 %v1669, %v1677
        %v1681 = vadd.f32 %v1670, %v1678
        %v1682 = vadd.f32 %v1671, %v1679
        %s1683 = sld [smem:[#allocation4 + $0x4c]]
        %v1684 = vstv %s1683
        %v1685 = vmul.f32 %v1684, %v1673
        %v1686 = vmul.f32 %v1684, %v1674
        %v1687 = vmul.f32 %v1684, %v1675
        %1691 = vrot.lane.b32.xlu0 %v1685, 127
        %v1692 = vpop.permute.xlu0 %1691
        %1693 = vrot.lane.b32.xlu0 %v1686, 127
        %v1694 = vpop.permute.xlu0 %1693
        %1695 = vrot.lane.b32.xlu0 %v1687, 127
        %v1696 = vpop.permute.xlu0 %1695
        %v1700 = vadd.f32 %v1680, %v1692
        %v1701 = vadd.f32 %v1681, %v1694
        %v1702 = vadd.f32 %v1682, %v1696
        %s1703 = sld [smem:[#allocation4 + $0x4d]]
        %v1704 = vstv %s1703
        %v1705 = vmul.f32 %v1704, %v1673
        %v1706 = vmul.f32 %v1704, %v1674
        %v1707 = vmul.f32 %v1704, %v1675
        %1711 = vrot.lane.b32.xlu0 %v1705, 126
        %v1712 = vpop.permute.xlu0 %1711
        %1713 = vrot.lane.b32.xlu0 %v1706, 126
        %v1714 = vpop.permute.xlu0 %1713
        %1715 = vrot.lane.b32.xlu0 %v1707, 126
        %v1716 = vpop.permute.xlu0 %1715
        %v1720 = vadd.f32 %v1700, %v1712
        %v1721 = vadd.f32 %v1701, %v1714
        %v1722 = vadd.f32 %v1702, %v1716
        %s1723 = sld [smem:[#allocation4 + $0x4e]]
        %v1724 = vld [vmem:[%s356 + $0x2] sm:$0xff]
        %v1725 = vld [vmem:[%s356 + $0xa] sm:$0xff]
        %v1726 = vld [vmem:[%s356 + $0x12] sm:$0xff]
        %v1727 = vstv %s1723
        %v1728 = vmul.f32 %v1727, %v1724
        %v1729 = vmul.f32 %v1727, %v1725
        %v1730 = vmul.f32 %v1727, %v1726
        %v1731 = vadd.f32 %v1720, %v1728
        %v1732 = vadd.f32 %v1721, %v1729
        %v1733 = vadd.f32 %v1722, %v1730
        %s1734 = sld [smem:[#allocation4 + $0x4f]]
        %v1735 = vstv %s1734
        %v1736 = vmul.f32 %v1735, %v1724
        %v1737 = vmul.f32 %v1735, %v1725
        %v1738 = vmul.f32 %v1735, %v1726
        %1742 = vrot.lane.b32.xlu0 %v1736, 127
        %v1743 = vpop.permute.xlu0 %1742
        %1744 = vrot.lane.b32.xlu0 %v1737, 127
        %v1745 = vpop.permute.xlu0 %1744
        %1746 = vrot.lane.b32.xlu0 %v1738, 127
        %v1747 = vpop.permute.xlu0 %1746
        %v1751 = vadd.f32 %v1731, %v1743
        %v1752 = vadd.f32 %v1732, %v1745
        %v1753 = vadd.f32 %v1733, %v1747
        %s1754 = sld [smem:[#allocation4 + $0x50]]
        %v1755 = vstv %s1754
        %v1756 = vmul.f32 %v1755, %v1724
        %v1757 = vmul.f32 %v1755, %v1725
        %v1758 = vmul.f32 %v1755, %v1726
        %1762 = vrot.lane.b32.xlu0 %v1756, 126
        %v1763 = vpop.permute.xlu0 %1762
        %1764 = vrot.lane.b32.xlu0 %v1757, 126
        %v1765 = vpop.permute.xlu0 %1764
        %1766 = vrot.lane.b32.xlu0 %v1758, 126
        %v1767 = vpop.permute.xlu0 %1766
        %v1771 = vadd.f32 %v1751, %v1763
        %v1772 = vadd.f32 %v1752, %v1765
        %v1773 = vadd.f32 %v1753, %v1767
        %1777 = vrot.lane.b32.xlu0 %v1771, 1
        %v1778 = vpop.permute.xlu0 %1777
        %1779 = vrot.lane.b32.xlu0 %v1772, 1
        %v1780 = vpop.permute.xlu0 %1779
        %1781 = vrot.lane.b32.xlu0 %v1773, 1
        %v1782 = vpop.permute.xlu0 %1781
        %s1786 = scalar_lea.vmem [#allocation3], 64
        %1787 = vst.msk [vmem:[%s1786 + $0x1] sm:$0xff] %vm316, %v1778
        %1788 = vst.msk [vmem:[%s1786 + $0x9] sm:$0xff] %vm316, %v1780
        %1789 = vst.msk [vmem:[%s1786 + $0x11] sm:$0xff] %vm316, %v1782
        %s1790 = sld [smem:[#allocation10]]
        %v1791 = vstv %s1790
        %s1792 = sld [smem:[#allocation9]]
        %v1793 = vld [vmem:[#allocation3 + $0x4] sm:$0xff]
        %v1794 = vld [vmem:[#allocation3 + $0xc] sm:$0xff]
        %v1795 = vstv %s1792
        %v1796 = vmul.f32 %v1795, %v1793
        %v1797 = vmul.f32 %v1795, %v1794
        %v1798 = vadd.f32 %v1791, %v1796
        %v1799 = vadd.f32 %v1791, %v1797
        %s1800 = sld [smem:[#allocation9 + $0x1]]
        %v1801 = vstv %s1800
        %v1802 = vmul.f32 %v1801, %v1793
        %v1803 = vmul.f32 %v1801, %v1794
        %1806 = vrot.lane.b32.xlu0 %v1802, 127
        %v1807 = vpop.permute.xlu0 %1806
        %1808 = vrot.lane.b32.xlu0 %v1803, 127
        %v1809 = vpop.permute.xlu0 %1808
        %v1812 = vadd.f32 %v1798, %v1807
        %v1813 = vadd.f32 %v1799, %v1809
        %s1814 = sld [smem:[#allocation9 + $0x2]]
        %v1815 = vstv %s1814
        %v1816 = vmul.f32 %v1815, %v1793
        %v1817 = vmul.f32 %v1815, %v1794
        %1820 = vrot.lane.b32.xlu0 %v1816, 126
        %v1821 = vpop.permute.xlu0 %1820
        %1822 = vrot.lane.b32.xlu0 %v1817, 126
        %v1823 = vpop.permute.xlu0 %1822
        %v1826 = vadd.f32 %v1812, %v1821
        %v1827 = vadd.f32 %v1813, %v1823
        %s1828 = sld [smem:[#allocation9 + $0x3]]
        %v1829 = vld [vmem:[#allocation3 + $0x5] sm:$0xff]
        %v1830 = vld [vmem:[#allocation3 + $0xd] sm:$0xff]
        %v1831 = vstv %s1828
        %v1832 = vmul.f32 %v1831, %v1829
        %v1833 = vmul.f32 %v1831, %v1830
        %v1834 = vadd.f32 %v1826, %v1832
        %v1835 = vadd.f32 %v1827, %v1833
        %s1836 = sld [smem:[#allocation9 + $0x4]]
        %v1837 = vstv %s1836
        %v1838 = vmul.f32 %v1837, %v1829
        %v1839 = vmul.f32 %v1837, %v1830
        %1842 = vrot.lane.b32.xlu0 %v1838, 127
        %v1843 = vpop.permute.xlu0 %1842
        %1844 = vrot.lane.b32.xlu0 %v1839, 127
        %v1845 = vpop.permute.xlu0 %1844
        %v1848 = vadd.f32 %v1834, %v1843
        %v1849 = vadd.f32 %v1835, %v1845
        %s1850 = sld [smem:[#allocation9 + $0x5]]
        %v1851 = vstv %s1850
        %v1852 = vmul.f32 %v1851, %v1829
        %v1853 = vmul.f32 %v1851, %v1830
        %1856 = vrot.lane.b32.xlu0 %v1852, 126
        %v1857 = vpop.permute.xlu0 %1856
        %1858 = vrot.lane.b32.xlu0 %v1853, 126
        %v1859 = vpop.permute.xlu0 %1858
        %v1862 = vadd.f32 %v1848, %v1857
        %v1863 = vadd.f32 %v1849, %v1859
        %s1864 = sld [smem:[#allocation9 + $0x6]]
        %v1865 = vld [vmem:[#allocation3 + $0x6] sm:$0xff]
        %v1866 = vld [vmem:[#allocation3 + $0xe] sm:$0xff]
        %v1867 = vstv %s1864
        %v1868 = vmul.f32 %v1867, %v1865
        %v1869 = vmul.f32 %v1867, %v1866
        %v1870 = vadd.f32 %v1862, %v1868
        %v1871 = vadd.f32 %v1863, %v1869
        %s1872 = sld [smem:[#allocation9 + $0x7]]
        %v1873 = vstv %s1872
        %v1874 = vmul.f32 %v1873, %v1865
        %v1875 = vmul.f32 %v1873, %v1866
        %1878 = vrot.lane.b32.xlu0 %v1874, 127
        %v1879 = vpop.permute.xlu0 %1878
        %1880 = vrot.lane.b32.xlu0 %v1875, 127
        %v1881 = vpop.permute.xlu0 %1880
        %v1884 = vadd.f32 %v1870, %v1879
        %v1885 = vadd.f32 %v1871, %v1881
        %s1886 = sld [smem:[#allocation9 + $0x8]]
        %v1887 = vstv %s1886
        %v1888 = vmul.f32 %v1887, %v1865
        %v1889 = vmul.f32 %v1887, %v1866
        %1892 = vrot.lane.b32.xlu0 %v1888, 126
        %v1893 = vpop.permute.xlu0 %1892
        %1894 = vrot.lane.b32.xlu0 %v1889, 126
        %v1895 = vpop.permute.xlu0 %1894
        %v1898 = vadd.f32 %v1884, %v1893
        %v1899 = vadd.f32 %v1885, %v1895
        %s1900 = sld [smem:[#allocation9 + $0x9]]
        %v1901 = vld [vmem:[%s1309 + $0x4] sm:$0xff]
        %v1902 = vld [vmem:[%s1309 + $0xc] sm:$0xff]
        %v1903 = vstv %s1900
        %v1904 = vmul.f32 %v1903, %v1901
        %v1905 = vmul.f32 %v1903, %v1902
        %v1906 = vadd.f32 %v1898, %v1904
        %v1907 = vadd.f32 %v1899, %v1905
        %s1908 = sld [smem:[#allocation9 + $0xa]]
        %v1909 = vstv %s1908
        %v1910 = vmul.f32 %v1909, %v1901
        %v1911 = vmul.f32 %v1909, %v1902
        %1914 = vrot.lane.b32.xlu0 %v1910, 127
        %v1915 = vpop.permute.xlu0 %1914
        %1916 = vrot.lane.b32.xlu0 %v1911, 127
        %v1917 = vpop.permute.xlu0 %1916
        %v1920 = vadd.f32 %v1906, %v1915
        %v1921 = vadd.f32 %v1907, %v1917
        %s1922 = sld [smem:[#allocation9 + $0xb]]
        %v1923 = vstv %s1922
        %v1924 = vmul.f32 %v1923, %v1901
        %v1925 = vmul.f32 %v1923, %v1902
        %1928 = vrot.lane.b32.xlu0 %v1924, 126
        %v1929 = vpop.permute.xlu0 %1928
        %1930 = vrot.lane.b32.xlu0 %v1925, 126
        %v1931 = vpop.permute.xlu0 %1930
        %v1934 = vadd.f32 %v1920, %v1929
        %v1935 = vadd.f32 %v1921, %v1931
        %s1936 = sld [smem:[#allocation9 + $0xc]]
        %v1937 = vld [vmem:[%s1309 + $0x5] sm:$0xff]
        %v1938 = vld [vmem:[%s1309 + $0xd] sm:$0xff]
        %v1939 = vstv %s1936
        %v1940 = vmul.f32 %v1939, %v1937
        %v1941 = vmul.f32 %v1939, %v1938
        %v1942 = vadd.f32 %v1934, %v1940
        %v1943 = vadd.f32 %v1935, %v1941
        %s1944 = sld [smem:[#allocation9 + $0xd]]
        %v1945 = vstv %s1944
        %v1946 = vmul.f32 %v1945, %v1937
        %v1947 = vmul.f32 %v1945, %v1938
        %1950 = vrot.lane.b32.xlu0 %v1946, 127
        %v1951 = vpop.permute.xlu0 %1950
        %1952 = vrot.lane.b32.xlu0 %v1947, 127
        %v1953 = vpop.permute.xlu0 %1952
        %v1956 = vadd.f32 %v1942, %v1951
        %v1957 = vadd.f32 %v1943, %v1953
        %s1958 = sld [smem:[#allocation9 + $0xe]]
        %v1959 = vstv %s1958
        %v1960 = vmul.f32 %v1959, %v1937
        %v1961 = vmul.f32 %v1959, %v1938
        %1964 = vrot.lane.b32.xlu0 %v1960, 126
        %v1965 = vpop.permute.xlu0 %1964
        %1966 = vrot.lane.b32.xlu0 %v1961, 126
        %v1967 = vpop.permute.xlu0 %1966
        %v1970 = vadd.f32 %v1956, %v1965
        %v1971 = vadd.f32 %v1957, %v1967
        %s1972 = sld [smem:[#allocation9 + $0xf]]
        %v1973 = vld [vmem:[%s1309 + $0x6] sm:$0xff]
        %v1974 = vld [vmem:[%s1309 + $0xe] sm:$0xff]
        %v1975 = vstv %s1972
        %v1976 = vmul.f32 %v1975, %v1973
        %v1977 = vmul.f32 %v1975, %v1974
        %v1978 = vadd.f32 %v1970, %v1976
        %v1979 = vadd.f32 %v1971, %v1977
        %s1980 = sld [smem:[#allocation9 + $0x10]]
        %v1981 = vstv %s1980
        %v1982 = vmul.f32 %v1981, %v1973
        %v1983 = vmul.f32 %v1981, %v1974
        %1986 = vrot.lane.b32.xlu0 %v1982, 127
        %v1987 = vpop.permute.xlu0 %1986
        %1988 = vrot.lane.b32.xlu0 %v1983, 127
        %v1989 = vpop.permute.xlu0 %1988
        %v1992 = vadd.f32 %v1978, %v1987
        %v1993 = vadd.f32 %v1979, %v1989
        %s1994 = sld [smem:[#allocation9 + $0x11]]
        %v1995 = vstv %s1994
        %v1996 = vmul.f32 %v1995, %v1973
        %v1997 = vmul.f32 %v1995, %v1974
        %2000 = vrot.lane.b32.xlu0 %v1996, 126
        %v2001 = vpop.permute.xlu0 %2000
        %2002 = vrot.lane.b32.xlu0 %v1997, 126
        %v2003 = vpop.permute.xlu0 %2002
        %v2006 = vadd.f32 %v1992, %v2001
        %v2007 = vadd.f32 %v1993, %v2003
        %s2008 = sld [smem:[#allocation9 + $0x12]]
        %v2009 = vld [vmem:[%s1786 + $0x4] sm:$0xff]
        %v2010 = vld [vmem:[%s1786 + $0xc] sm:$0xff]
        %v2011 = vstv %s2008
        %v2012 = vmul.f32 %v2011, %v2009
        %v2013 = vmul.f32 %v2011, %v2010
        %v2014 = vadd.f32 %v2006, %v2012
        %v2015 = vadd.f32 %v2007, %v2013
        %s2016 = sld [smem:[#allocation9 + $0x13]]
        %v2017 = vstv %s2016
        %v2018 = vmul.f32 %v2017, %v2009
        %v2019 = vmul.f32 %v2017, %v2010
        %2022 = vrot.lane.b32.xlu0 %v2018, 127
        %v2023 = vpop.permute.xlu0 %2022
        %2024 = vrot.lane.b32.xlu0 %v2019, 127
        %v2025 = vpop.permute.xlu0 %2024
        %v2028 = vadd.f32 %v2014, %v2023
        %v2029 = vadd.f32 %v2015, %v2025
        %s2030 = sld [smem:[#allocation9 + $0x14]]
        %v2031 = vstv %s2030
        %v2032 = vmul.f32 %v2031, %v2009
        %v2033 = vmul.f32 %v2031, %v2010
        %2036 = vrot.lane.b32.xlu0 %v2032, 126
        %v2037 = vpop.permute.xlu0 %2036
        %2038 = vrot.lane.b32.xlu0 %v2033, 126
        %v2039 = vpop.permute.xlu0 %2038
        %v2042 = vadd.f32 %v2028, %v2037
        %v2043 = vadd.f32 %v2029, %v2039
        %s2044 = sld [smem:[#allocation9 + $0x15]]
        %v2045 = vld [vmem:[%s1786 + $0x5] sm:$0xff]
        %v2046 = vld [vmem:[%s1786 + $0xd] sm:$0xff]
        %v2047 = vstv %s2044
        %v2048 = vmul.f32 %v2047, %v2045
        %v2049 = vmul.f32 %v2047, %v2046
        %v2050 = vadd.f32 %v2042, %v2048
        %v2051 = vadd.f32 %v2043, %v2049
        %s2052 = sld [smem:[#allocation9 + $0x16]]
        %v2053 = vstv %s2052
        %v2054 = vmul.f32 %v2053, %v2045
        %v2055 = vmul.f32 %v2053, %v2046
        %2058 = vrot.lane.b32.xlu0 %v2054, 127
        %v2059 = vpop.permute.xlu0 %2058
        %2060 = vrot.lane.b32.xlu0 %v2055, 127
        %v2061 = vpop.permute.xlu0 %2060
        %v2064 = vadd.f32 %v2050, %v2059
        %v2065 = vadd.f32 %v2051, %v2061
        %s2066 = sld [smem:[#allocation9 + $0x17]]
        %v2067 = vstv %s2066
        %v2068 = vmul.f32 %v2067, %v2045
        %v2069 = vmul.f32 %v2067, %v2046
        %2072 = vrot.lane.b32.xlu0 %v2068, 126
        %v2073 = vpop.permute.xlu0 %2072
        %2074 = vrot.lane.b32.xlu0 %v2069, 126
        %v2075 = vpop.permute.xlu0 %2074
        %v2078 = vadd.f32 %v2064, %v2073
        %v2079 = vadd.f32 %v2065, %v2075
        %s2080 = sld [smem:[#allocation9 + $0x18]]
        %v2081 = vld [vmem:[%s1786 + $0x6] sm:$0xff]
        %v2082 = vld [vmem:[%s1786 + $0xe] sm:$0xff]
        %v2083 = vstv %s2080
        %v2084 = vmul.f32 %v2083, %v2081
        %v2085 = vmul.f32 %v2083, %v2082
        %v2086 = vadd.f32 %v2078, %v2084
        %v2087 = vadd.f32 %v2079, %v2085
        %s2088 = sld [smem:[#allocation9 + $0x19]]
        %v2089 = vstv %s2088
        %v2090 = vmul.f32 %v2089, %v2081
        %v2091 = vmul.f32 %v2089, %v2082
        %2094 = vrot.lane.b32.xlu0 %v2090, 127
        %v2095 = vpop.permute.xlu0 %2094
        %2096 = vrot.lane.b32.xlu0 %v2091, 127
        %v2097 = vpop.permute.xlu0 %2096
        %v2100 = vadd.f32 %v2086, %v2095
        %v2101 = vadd.f32 %v2087, %v2097
        %s2102 = sld [smem:[#allocation9 + $0x1a]]
        %v2103 = vstv %s2102
        %v2104 = vmul.f32 %v2103, %v2081
        %v2105 = vmul.f32 %v2103, %v2082
        %2108 = vrot.lane.b32.xlu0 %v2104, 126
        %v2109 = vpop.permute.xlu0 %2108
        %2110 = vrot.lane.b32.xlu0 %v2105, 126
        %v2111 = vpop.permute.xlu0 %2110
        %v2114 = vadd.f32 %v2100, %v2109
        %v2115 = vadd.f32 %v2101, %v2111
        %v2116 = vld [vmem:[%s274 + $0x4] sm:$0xff]
        %v2117 = vld [vmem:[%s274 + $0xc] sm:$0xff]
        %v2118 = vadd.f32 %v2116, %v2114
        %v2119 = vadd.f32 %v2117, %v2115
        %v2120 = vmax.f32 %v2118, -1.0
        %v2121 = vmax.f32 %v2119, -1.0
        %v2122 = vmin.f32 %v2120, 1.0
        %v2123 = vmin.f32 %v2121, 1.0
        %2126 = vrot.lane.b32.xlu0 %v2122, 124
        %v2127 = vpop.permute.xlu0 %2126
        %2128 = vrot.lane.b32.xlu0 %v2123, 124
        %v2129 = vpop.permute.xlu0 %2128
        %vm2132 = vcmask 130048
        %2133 = vst.msk [vmem:[%s269] sm:$0xff] %vm2132, %v2127
        %2134 = vst.msk [vmem:[%s269 + $0x8] sm:$0xff] %vm2132, %v2129
        %s2135 = sld [smem:[#allocation10 + $0x1]]
        %v2136 = vstv %s2135
        %s2137 = sld [smem:[#allocation9 + $0x1b]]
        %v2138 = vld [vmem:[#allocation3 + $0x4] sm:$0xff]
        %v2139 = vld [vmem:[#allocation3 + $0xc] sm:$0xff]
        %v2140 = vstv %s2137
        %v2141 = vmul.f32 %v2140, %v2138
        %v2142 = vmul.f32 %v2140, %v2139
        %v2143 = vadd.f32 %v2136, %v2141
        %v2144 = vadd.f32 %v2136, %v2142
        %s2145 = sld [smem:[#allocation9 + $0x1c]]
        %v2146 = vstv %s2145
        %v2147 = vmul.f32 %v2146, %v2138
        %v2148 = vmul.f32 %v2146, %v2139
        %2151 = vrot.lane.b32.xlu0 %v2147, 127
        %v2152 = vpop.permute.xlu0 %2151
        %2153 = vrot.lane.b32.xlu0 %v2148, 127
        %v2154 = vpop.permute.xlu0 %2153
        %v2157 = vadd.f32 %v2143, %v2152
        %v2158 = vadd.f32 %v2144, %v2154
        %s2159 = sld [smem:[#allocation9 + $0x1d]]
        %v2160 = vstv %s2159
        %v2161 = vmul.f32 %v2160, %v2138
        %v2162 = vmul.f32 %v2160, %v2139
        %2165 = vrot.lane.b32.xlu0 %v2161, 126
        %v2166 = vpop.permute.xlu0 %2165
        %2167 = vrot.lane.b32.xlu0 %v2162, 126
        %v2168 = vpop.permute.xlu0 %2167
        %v2171 = vadd.f32 %v2157, %v2166
        %v2172 = vadd.f32 %v2158, %v2168
        %s2173 = sld [smem:[#allocation9 + $0x1e]]
        %v2174 = vld [vmem:[#allocation3 + $0x5] sm:$0xff]
        %v2175 = vld [vmem:[#allocation3 + $0xd] sm:$0xff]
        %v2176 = vstv %s2173
        %v2177 = vmul.f32 %v2176, %v2174
        %v2178 = vmul.f32 %v2176, %v2175
        %v2179 = vadd.f32 %v2171, %v2177
        %v2180 = vadd.f32 %v2172, %v2178
        %s2181 = sld [smem:[#allocation9 + $0x1f]]
        %v2182 = vstv %s2181
        %v2183 = vmul.f32 %v2182, %v2174
        %v2184 = vmul.f32 %v2182, %v2175
        %2187 = vrot.lane.b32.xlu0 %v2183, 127
        %v2188 = vpop.permute.xlu0 %2187
        %2189 = vrot.lane.b32.xlu0 %v2184, 127
        %v2190 = vpop.permute.xlu0 %2189
        %v2193 = vadd.f32 %v2179, %v2188
        %v2194 = vadd.f32 %v2180, %v2190
        %s2195 = sld [smem:[#allocation9 + $0x20]]
        %v2196 = vstv %s2195
        %v2197 = vmul.f32 %v2196, %v2174
        %v2198 = vmul.f32 %v2196, %v2175
        %2201 = vrot.lane.b32.xlu0 %v2197, 126
        %v2202 = vpop.permute.xlu0 %2201
        %2203 = vrot.lane.b32.xlu0 %v2198, 126
        %v2204 = vpop.permute.xlu0 %2203
        %v2207 = vadd.f32 %v2193, %v2202
        %v2208 = vadd.f32 %v2194, %v2204
        %s2209 = sld [smem:[#allocation9 + $0x21]]
        %v2210 = vld [vmem:[#allocation3 + $0x6] sm:$0xff]
        %v2211 = vld [vmem:[#allocation3 + $0xe] sm:$0xff]
        %v2212 = vstv %s2209
        %v2213 = vmul.f32 %v2212, %v2210
        %v2214 = vmul.f32 %v2212, %v2211
        %v2215 = vadd.f32 %v2207, %v2213
        %v2216 = vadd.f32 %v2208, %v2214
        %s2217 = sld [smem:[#allocation9 + $0x22]]
        %v2218 = vstv %s2217
        %v2219 = vmul.f32 %v2218, %v2210
        %v2220 = vmul.f32 %v2218, %v2211
        %2223 = vrot.lane.b32.xlu0 %v2219, 127
        %v2224 = vpop.permute.xlu0 %2223
        %2225 = vrot.lane.b32.xlu0 %v2220, 127
        %v2226 = vpop.permute.xlu0 %2225
        %v2229 = vadd.f32 %v2215, %v2224
        %v2230 = vadd.f32 %v2216, %v2226
        %s2231 = sld [smem:[#allocation9 + $0x23]]
        %v2232 = vstv %s2231
        %v2233 = vmul.f32 %v2232, %v2210
        %v2234 = vmul.f32 %v2232, %v2211
        %2237 = vrot.lane.b32.xlu0 %v2233, 126
        %v2238 = vpop.permute.xlu0 %2237
        %2239 = vrot.lane.b32.xlu0 %v2234, 126
        %v2240 = vpop.permute.xlu0 %2239
        %v2243 = vadd.f32 %v2229, %v2238
        %v2244 = vadd.f32 %v2230, %v2240
        %s2245 = sld [smem:[#allocation9 + $0x24]]
        %v2246 = vld [vmem:[%s1309 + $0x4] sm:$0xff]
        %v2247 = vld [vmem:[%s1309 + $0xc] sm:$0xff]
        %v2248 = vstv %s2245
        %v2249 = vmul.f32 %v2248, %v2246
        %v2250 = vmul.f32 %v2248, %v2247
        %v2251 = vadd.f32 %v2243, %v2249
        %v2252 = vadd.f32 %v2244, %v2250
        %s2253 = sld [smem:[#allocation9 + $0x25]]
        %v2254 = vstv %s2253
        %v2255 = vmul.f32 %v2254, %v2246
        %v2256 = vmul.f32 %v2254, %v2247
        %2259 = vrot.lane.b32.xlu0 %v2255, 127
        %v2260 = vpop.permute.xlu0 %2259
        %2261 = vrot.lane.b32.xlu0 %v2256, 127
        %v2262 = vpop.permute.xlu0 %2261
        %v2265 = vadd.f32 %v2251, %v2260
        %v2266 = vadd.f32 %v2252, %v2262
        %s2267 = sld [smem:[#allocation9 + $0x26]]
        %v2268 = vstv %s2267
        %v2269 = vmul.f32 %v2268, %v2246
        %v2270 = vmul.f32 %v2268, %v2247
        %2273 = vrot.lane.b32.xlu0 %v2269, 126
        %v2274 = vpop.permute.xlu0 %2273
        %2275 = vrot.lane.b32.xlu0 %v2270, 126
        %v2276 = vpop.permute.xlu0 %2275
        %v2279 = vadd.f32 %v2265, %v2274
        %v2280 = vadd.f32 %v2266, %v2276
        %s2281 = sld [smem:[#allocation9 + $0x27]]
        %v2282 = vld [vmem:[%s1309 + $0x5] sm:$0xff]
        %v2283 = vld [vmem:[%s1309 + $0xd] sm:$0xff]
        %v2284 = vstv %s2281
        %v2285 = vmul.f32 %v2284, %v2282
        %v2286 = vmul.f32 %v2284, %v2283
        %v2287 = vadd.f32 %v2279, %v2285
        %v2288 = vadd.f32 %v2280, %v2286
        %s2289 = sld [smem:[#allocation9 + $0x28]]
        %v2290 = vstv %s2289
        %v2291 = vmul.f32 %v2290, %v2282
        %v2292 = vmul.f32 %v2290, %v2283
        %2295 = vrot.lane.b32.xlu0 %v2291, 127
        %v2296 = vpop.permute.xlu0 %2295
        %2297 = vrot.lane.b32.xlu0 %v2292, 127
        %v2298 = vpop.permute.xlu0 %2297
        %v2301 = vadd.f32 %v2287, %v2296
        %v2302 = vadd.f32 %v2288, %v2298
        %s2303 = sld [smem:[#allocation9 + $0x29]]
        %v2304 = vstv %s2303
        %v2305 = vmul.f32 %v2304, %v2282
        %v2306 = vmul.f32 %v2304, %v2283
        %2309 = vrot.lane.b32.xlu0 %v2305, 126
        %v2310 = vpop.permute.xlu0 %2309
        %2311 = vrot.lane.b32.xlu0 %v2306, 126
        %v2312 = vpop.permute.xlu0 %2311
        %v2315 = vadd.f32 %v2301, %v2310
        %v2316 = vadd.f32 %v2302, %v2312
        %s2317 = sld [smem:[#allocation9 + $0x2a]]
        %v2318 = vld [vmem:[%s1309 + $0x6] sm:$0xff]
        %v2319 = vld [vmem:[%s1309 + $0xe] sm:$0xff]
        %v2320 = vstv %s2317
        %v2321 = vmul.f32 %v2320, %v2318
        %v2322 = vmul.f32 %v2320, %v2319
        %v2323 = vadd.f32 %v2315, %v2321
        %v2324 = vadd.f32 %v2316, %v2322
        %s2325 = sld [smem:[#allocation9 + $0x2b]]
        %v2326 = vstv %s2325
        %v2327 = vmul.f32 %v2326, %v2318
        %v2328 = vmul.f32 %v2326, %v2319
        %2331 = vrot.lane.b32.xlu0 %v2327, 127
        %v2332 = vpop.permute.xlu0 %2331
        %2333 = vrot.lane.b32.xlu0 %v2328, 127
        %v2334 = vpop.permute.xlu0 %2333
        %v2337 = vadd.f32 %v2323, %v2332
        %v2338 = vadd.f32 %v2324, %v2334
        %s2339 = sld [smem:[#allocation9 + $0x2c]]
        %v2340 = vstv %s2339
        %v2341 = vmul.f32 %v2340, %v2318
        %v2342 = vmul.f32 %v2340, %v2319
        %2345 = vrot.lane.b32.xlu0 %v2341, 126
        %v2346 = vpop.permute.xlu0 %2345
        %2347 = vrot.lane.b32.xlu0 %v2342, 126
        %v2348 = vpop.permute.xlu0 %2347
        %v2351 = vadd.f32 %v2337, %v2346
        %v2352 = vadd.f32 %v2338, %v2348
        %s2353 = sld [smem:[#allocation9 + $0x2d]]
        %v2354 = vld [vmem:[%s1786 + $0x4] sm:$0xff]
        %v2355 = vld [vmem:[%s1786 + $0xc] sm:$0xff]
        %v2356 = vstv %s2353
        %v2357 = vmul.f32 %v2356, %v2354
        %v2358 = vmul.f32 %v2356, %v2355
        %v2359 = vadd.f32 %v2351, %v2357
        %v2360 = vadd.f32 %v2352, %v2358
        %s2361 = sld [smem:[#allocation9 + $0x2e]]
        %v2362 = vstv %s2361
        %v2363 = vmul.f32 %v2362, %v2354
        %v2364 = vmul.f32 %v2362, %v2355
        %2367 = vrot.lane.b32.xlu0 %v2363, 127
        %v2368 = vpop.permute.xlu0 %2367
        %2369 = vrot.lane.b32.xlu0 %v2364, 127
        %v2370 = vpop.permute.xlu0 %2369
        %v2373 = vadd.f32 %v2359, %v2368
        %v2374 = vadd.f32 %v2360, %v2370
        %s2375 = sld [smem:[#allocation9 + $0x2f]]
        %v2376 = vstv %s2375
        %v2377 = vmul.f32 %v2376, %v2354
        %v2378 = vmul.f32 %v2376, %v2355
        %2381 = vrot.lane.b32.xlu0 %v2377, 126
        %v2382 = vpop.permute.xlu0 %2381
        %2383 = vrot.lane.b32.xlu0 %v2378, 126
        %v2384 = vpop.permute.xlu0 %2383
        %v2387 = vadd.f32 %v2373, %v2382
        %v2388 = vadd.f32 %v2374, %v2384
        %s2389 = sld [smem:[#allocation9 + $0x30]]
        %v2390 = vld [vmem:[%s1786 + $0x5] sm:$0xff]
        %v2391 = vld [vmem:[%s1786 + $0xd] sm:$0xff]
        %v2392 = vstv %s2389
        %v2393 = vmul.f32 %v2392, %v2390
        %v2394 = vmul.f32 %v2392, %v2391
        %v2395 = vadd.f32 %v2387, %v2393
        %v2396 = vadd.f32 %v2388, %v2394
        %s2397 = sld [smem:[#allocation9 + $0x31]]
        %v2398 = vstv %s2397
        %v2399 = vmul.f32 %v2398, %v2390
        %v2400 = vmul.f32 %v2398, %v2391
        %2403 = vrot.lane.b32.xlu0 %v2399, 127
        %v2404 = vpop.permute.xlu0 %2403
        %2405 = vrot.lane.b32.xlu0 %v2400, 127
        %v2406 = vpop.permute.xlu0 %2405
        %v2409 = vadd.f32 %v2395, %v2404
        %v2410 = vadd.f32 %v2396, %v2406
        %s2411 = sld [smem:[#allocation9 + $0x32]]
        %v2412 = vstv %s2411
        %v2413 = vmul.f32 %v2412, %v2390
        %v2414 = vmul.f32 %v2412, %v2391
        %2417 = vrot.lane.b32.xlu0 %v2413, 126
        %v2418 = vpop.permute.xlu0 %2417
        %2419 = vrot.lane.b32.xlu0 %v2414, 126
        %v2420 = vpop.permute.xlu0 %2419
        %v2423 = vadd.f32 %v2409, %v2418
        %v2424 = vadd.f32 %v2410, %v2420
        %s2425 = sld [smem:[#allocation9 + $0x33]]
        %v2426 = vld [vmem:[%s1786 + $0x6] sm:$0xff]
        %v2427 = vld [vmem:[%s1786 + $0xe] sm:$0xff]
        %v2428 = vstv %s2425
        %v2429 = vmul.f32 %v2428, %v2426
        %v2430 = vmul.f32 %v2428, %v2427
        %v2431 = vadd.f32 %v2423, %v2429
        %v2432 = vadd.f32 %v2424, %v2430
        %s2433 = sld [smem:[#allocation9 + $0x34]]
        %v2434 = vstv %s2433
        %v2435 = vmul.f32 %v2434, %v2426
        %v2436 = vmul.f32 %v2434, %v2427
        %2439 = vrot.lane.b32.xlu0 %v2435, 127
        %v2440 = vpop.permute.xlu0 %2439
        %2441 = vrot.lane.b32.xlu0 %v2436, 127
        %v2442 = vpop.permute.xlu0 %2441
        %v2445 = vadd.f32 %v2431, %v2440
        %v2446 = vadd.f32 %v2432, %v2442
        %s2447 = sld [smem:[#allocation9 + $0x35]]
        %v2448 = vstv %s2447
        %v2449 = vmul.f32 %v2448, %v2426
        %v2450 = vmul.f32 %v2448, %v2427
        %2453 = vrot.lane.b32.xlu0 %v2449, 126
        %v2454 = vpop.permute.xlu0 %2453
        %2455 = vrot.lane.b32.xlu0 %v2450, 126
        %v2456 = vpop.permute.xlu0 %2455
        %v2459 = vadd.f32 %v2445, %v2454
        %v2460 = vadd.f32 %v2446, %v2456
        %v2461 = vld [vmem:[%s320 + $0x4] sm:$0xff]
        %v2462 = vld [vmem:[%s320 + $0xc] sm:$0xff]
        %v2463 = vadd.f32 %v2461, %v2459
        %v2464 = vadd.f32 %v2462, %v2460
        %v2465 = vmax.f32 %v2463, -1.0
        %v2466 = vmax.f32 %v2464, -1.0
        %v2467 = vmin.f32 %v2465, 1.0
        %v2468 = vmin.f32 %v2466, 1.0
        %2471 = vrot.lane.b32.xlu0 %v2467, 124
        %v2472 = vpop.permute.xlu0 %2471
        %2473 = vrot.lane.b32.xlu0 %v2468, 124
        %v2474 = vpop.permute.xlu0 %2473
        %s2477 = scalar_lea.vmem %s269, 16 [#allocation12]
        %2478 = vst.msk [vmem:[%s2477] sm:$0xff] %vm2132, %v2472
        %2479 = vst.msk [vmem:[%s2477 + $0x8] sm:$0xff] %vm2132, %v2474
        %s2480 = sld [smem:[#allocation10 + $0x2]]
        %v2481 = vstv %s2480
        %s2482 = sld [smem:[#allocation9 + $0x36]]
        %v2483 = vld [vmem:[#allocation3 + $0x4] sm:$0xff]
        %v2484 = vld [vmem:[#allocation3 + $0xc] sm:$0xff]
        %v2485 = vstv %s2482
        %v2486 = vmul.f32 %v2485, %v2483
        %v2487 = vmul.f32 %v2485, %v2484
        %v2488 = vadd.f32 %v2481, %v2486
        %v2489 = vadd.f32 %v2481, %v2487
        %s2490 = sld [smem:[#allocation9 + $0x37]]
        %v2491 = vstv %s2490
        %v2492 = vmul.f32 %v2491, %v2483
        %v2493 = vmul.f32 %v2491, %v2484
        %2496 = vrot.lane.b32.xlu0 %v2492, 127
        %v2497 = vpop.permute.xlu0 %2496
        %2498 = vrot.lane.b32.xlu0 %v2493, 127
        %v2499 = vpop.permute.xlu0 %2498
        %v2502 = vadd.f32 %v2488, %v2497
        %v2503 = vadd.f32 %v2489, %v2499
        %s2504 = sld [smem:[#allocation9 + $0x38]]
        %v2505 = vstv %s2504
        %v2506 = vmul.f32 %v2505, %v2483
        %v2507 = vmul.f32 %v2505, %v2484
        %2510 = vrot.lane.b32.xlu0 %v2506, 126
        %v2511 = vpop.permute.xlu0 %2510
        %2512 = vrot.lane.b32.xlu0 %v2507, 126
        %v2513 = vpop.permute.xlu0 %2512
        %v2516 = vadd.f32 %v2502, %v2511
        %v2517 = vadd.f32 %v2503, %v2513
        %s2518 = sld [smem:[#allocation9 + $0x39]]
        %v2519 = vld [vmem:[#allocation3 + $0x5] sm:$0xff]
        %v2520 = vld [vmem:[#allocation3 + $0xd] sm:$0xff]
        %v2521 = vstv %s2518
        %v2522 = vmul.f32 %v2521, %v2519
        %v2523 = vmul.f32 %v2521, %v2520
        %v2524 = vadd.f32 %v2516, %v2522
        %v2525 = vadd.f32 %v2517, %v2523
        %s2526 = sld [smem:[#allocation9 + $0x3a]]
        %v2527 = vstv %s2526
        %v2528 = vmul.f32 %v2527, %v2519
        %v2529 = vmul.f32 %v2527, %v2520
        %2532 = vrot.lane.b32.xlu0 %v2528, 127
        %v2533 = vpop.permute.xlu0 %2532
        %2534 = vrot.lane.b32.xlu0 %v2529, 127
        %v2535 = vpop.permute.xlu0 %2534
        %v2538 = vadd.f32 %v2524, %v2533
        %v2539 = vadd.f32 %v2525, %v2535
        %s2540 = sld [smem:[#allocation9 + $0x3b]]
        %v2541 = vstv %s2540
        %v2542 = vmul.f32 %v2541, %v2519
        %v2543 = vmul.f32 %v2541, %v2520
        %2546 = vrot.lane.b32.xlu0 %v2542, 126
        %v2547 = vpop.permute.xlu0 %2546
        %2548 = vrot.lane.b32.xlu0 %v2543, 126
        %v2549 = vpop.permute.xlu0 %2548
        %v2552 = vadd.f32 %v2538, %v2547
        %v2553 = vadd.f32 %v2539, %v2549
        %s2554 = sld [smem:[#allocation9 + $0x3c]]
        %v2555 = vld [vmem:[#allocation3 + $0x6] sm:$0xff]
        %v2556 = vld [vmem:[#allocation3 + $0xe] sm:$0xff]
        %v2557 = vstv %s2554
        %v2558 = vmul.f32 %v2557, %v2555
        %v2559 = vmul.f32 %v2557, %v2556
        %v2560 = vadd.f32 %v2552, %v2558
        %v2561 = vadd.f32 %v2553, %v2559
        %s2562 = sld [smem:[#allocation9 + $0x3d]]
        %v2563 = vstv %s2562
        %v2564 = vmul.f32 %v2563, %v2555
        %v2565 = vmul.f32 %v2563, %v2556
        %2568 = vrot.lane.b32.xlu0 %v2564, 127
        %v2569 = vpop.permute.xlu0 %2568
        %2570 = vrot.lane.b32.xlu0 %v2565, 127
        %v2571 = vpop.permute.xlu0 %2570
        %v2574 = vadd.f32 %v2560, %v2569
        %v2575 = vadd.f32 %v2561, %v2571
        %s2576 = sld [smem:[#allocation9 + $0x3e]]
        %v2577 = vstv %s2576
        %v2578 = vmul.f32 %v2577, %v2555
        %v2579 = vmul.f32 %v2577, %v2556
        %2582 = vrot.lane.b32.xlu0 %v2578, 126
        %v2583 = vpop.permute.xlu0 %2582
        %2584 = vrot.lane.b32.xlu0 %v2579, 126
        %v2585 = vpop.permute.xlu0 %2584
        %v2588 = vadd.f32 %v2574, %v2583
        %v2589 = vadd.f32 %v2575, %v2585
        %s2590 = sld [smem:[#allocation9 + $0x3f]]
        %v2591 = vld [vmem:[%s1309 + $0x4] sm:$0xff]
        %v2592 = vld [vmem:[%s1309 + $0xc] sm:$0xff]
        %v2593 = vstv %s2590
        %v2594 = vmul.f32 %v2593, %v2591
        %v2595 = vmul.f32 %v2593, %v2592
        %v2596 = vadd.f32 %v2588, %v2594
        %v2597 = vadd.f32 %v2589, %v2595
        %s2598 = sld [smem:[#allocation9 + $0x40]]
        %v2599 = vstv %s2598
        %v2600 = vmul.f32 %v2599, %v2591
        %v2601 = vmul.f32 %v2599, %v2592
        %2604 = vrot.lane.b32.xlu0 %v2600, 127
        %v2605 = vpop.permute.xlu0 %2604
        %2606 = vrot.lane.b32.xlu0 %v2601, 127
        %v2607 = vpop.permute.xlu0 %2606
        %v2610 = vadd.f32 %v2596, %v2605
        %v2611 = vadd.f32 %v2597, %v2607
        %s2612 = sld [smem:[#allocation9 + $0x41]]
        %v2613 = vstv %s2612
        %v2614 = vmul.f32 %v2613, %v2591
        %v2615 = vmul.f32 %v2613, %v2592
        %2618 = vrot.lane.b32.xlu0 %v2614, 126
        %v2619 = vpop.permute.xlu0 %2618
        %2620 = vrot.lane.b32.xlu0 %v2615, 126
        %v2621 = vpop.permute.xlu0 %2620
        %v2624 = vadd.f32 %v2610, %v2619
        %v2625 = vadd.f32 %v2611, %v2621
        %s2626 = sld [smem:[#allocation9 + $0x42]]
        %v2627 = vld [vmem:[%s1309 + $0x5] sm:$0xff]
        %v2628 = vld [vmem:[%s1309 + $0xd] sm:$0xff]
        %v2629 = vstv %s2626
        %v2630 = vmul.f32 %v2629, %v2627
        %v2631 = vmul.f32 %v2629, %v2628
        %v2632 = vadd.f32 %v2624, %v2630
        %v2633 = vadd.f32 %v2625, %v2631
        %s2634 = sld [smem:[#allocation9 + $0x43]]
        %v2635 = vstv %s2634
        %v2636 = vmul.f32 %v2635, %v2627
        %v2637 = vmul.f32 %v2635, %v2628
        %2640 = vrot.lane.b32.xlu0 %v2636, 127
        %v2641 = vpop.permute.xlu0 %2640
        %2642 = vrot.lane.b32.xlu0 %v2637, 127
        %v2643 = vpop.permute.xlu0 %2642
        %v2646 = vadd.f32 %v2632, %v2641
        %v2647 = vadd.f32 %v2633, %v2643
        %s2648 = sld [smem:[#allocation9 + $0x44]]
        %v2649 = vstv %s2648
        %v2650 = vmul.f32 %v2649, %v2627
        %v2651 = vmul.f32 %v2649, %v2628
        %2654 = vrot.lane.b32.xlu0 %v2650, 126
        %v2655 = vpop.permute.xlu0 %2654
        %2656 = vrot.lane.b32.xlu0 %v2651, 126
        %v2657 = vpop.permute.xlu0 %2656
        %v2660 = vadd.f32 %v2646, %v2655
        %v2661 = vadd.f32 %v2647, %v2657
        %s2662 = sld [smem:[#allocation9 + $0x45]]
        %v2663 = vld [vmem:[%s1309 + $0x6] sm:$0xff]
        %v2664 = vld [vmem:[%s1309 + $0xe] sm:$0xff]
        %v2665 = vstv %s2662
        %v2666 = vmul.f32 %v2665, %v2663
        %v2667 = vmul.f32 %v2665, %v2664
        %v2668 = vadd.f32 %v2660, %v2666
        %v2669 = vadd.f32 %v2661, %v2667
        %s2670 = sld [smem:[#allocation9 + $0x46]]
        %v2671 = vstv %s2670
        %v2672 = vmul.f32 %v2671, %v2663
        %v2673 = vmul.f32 %v2671, %v2664
        %2676 = vrot.lane.b32.xlu0 %v2672, 127
        %v2677 = vpop.permute.xlu0 %2676
        %2678 = vrot.lane.b32.xlu0 %v2673, 127
        %v2679 = vpop.permute.xlu0 %2678
        %v2682 = vadd.f32 %v2668, %v2677
        %v2683 = vadd.f32 %v2669, %v2679
        %s2684 = sld [smem:[#allocation9 + $0x47]]
        %v2685 = vstv %s2684
        %v2686 = vmul.f32 %v2685, %v2663
        %v2687 = vmul.f32 %v2685, %v2664
        %2690 = vrot.lane.b32.xlu0 %v2686, 126
        %v2691 = vpop.permute.xlu0 %2690
        %2692 = vrot.lane.b32.xlu0 %v2687, 126
        %v2693 = vpop.permute.xlu0 %2692
        %v2696 = vadd.f32 %v2682, %v2691
        %v2697 = vadd.f32 %v2683, %v2693
        %s2698 = sld [smem:[#allocation9 + $0x48]]
        %v2699 = vld [vmem:[%s1786 + $0x4] sm:$0xff]
        %v2700 = vld [vmem:[%s1786 + $0xc] sm:$0xff]
        %v2701 = vstv %s2698
        %v2702 = vmul.f32 %v2701, %v2699
        %v2703 = vmul.f32 %v2701, %v2700
        %v2704 = vadd.f32 %v2696, %v2702
        %v2705 = vadd.f32 %v2697, %v2703
        %s2706 = sld [smem:[#allocation9 + $0x49]]
        %v2707 = vstv %s2706
        %v2708 = vmul.f32 %v2707, %v2699
        %v2709 = vmul.f32 %v2707, %v2700
        %2712 = vrot.lane.b32.xlu0 %v2708, 127
        %v2713 = vpop.permute.xlu0 %2712
        %2714 = vrot.lane.b32.xlu0 %v2709, 127
        %v2715 = vpop.permute.xlu0 %2714
        %v2718 = vadd.f32 %v2704, %v2713
        %v2719 = vadd.f32 %v2705, %v2715
        %s2720 = sld [smem:[#allocation9 + $0x4a]]
        %v2721 = vstv %s2720
        %v2722 = vmul.f32 %v2721, %v2699
        %v2723 = vmul.f32 %v2721, %v2700
        %2726 = vrot.lane.b32.xlu0 %v2722, 126
        %v2727 = vpop.permute.xlu0 %2726
        %2728 = vrot.lane.b32.xlu0 %v2723, 126
        %v2729 = vpop.permute.xlu0 %2728
        %v2732 = vadd.f32 %v2718, %v2727
        %v2733 = vadd.f32 %v2719, %v2729
        %s2734 = sld [smem:[#allocation9 + $0x4b]]
        %v2735 = vld [vmem:[%s1786 + $0x5] sm:$0xff]
        %v2736 = vld [vmem:[%s1786 + $0xd] sm:$0xff]
        %v2737 = vstv %s2734
        %v2738 = vmul.f32 %v2737, %v2735
        %v2739 = vmul.f32 %v2737, %v2736
        %v2740 = vadd.f32 %v2732, %v2738
        %v2741 = vadd.f32 %v2733, %v2739
        %s2742 = sld [smem:[#allocation9 + $0x4c]]
        %v2743 = vstv %s2742
        %v2744 = vmul.f32 %v2743, %v2735
        %v2745 = vmul.f32 %v2743, %v2736
        %2748 = vrot.lane.b32.xlu0 %v2744, 127
        %v2749 = vpop.permute.xlu0 %2748
        %2750 = vrot.lane.b32.xlu0 %v2745, 127
        %v2751 = vpop.permute.xlu0 %2750
        %v2754 = vadd.f32 %v2740, %v2749
        %v2755 = vadd.f32 %v2741, %v2751
        %s2756 = sld [smem:[#allocation9 + $0x4d]]
        %v2757 = vstv %s2756
        %v2758 = vmul.f32 %v2757, %v2735
        %v2759 = vmul.f32 %v2757, %v2736
        %2762 = vrot.lane.b32.xlu0 %v2758, 126
        %v2763 = vpop.permute.xlu0 %2762
        %2764 = vrot.lane.b32.xlu0 %v2759, 126
        %v2765 = vpop.permute.xlu0 %2764
        %v2768 = vadd.f32 %v2754, %v2763
        %v2769 = vadd.f32 %v2755, %v2765
        %s2770 = sld [smem:[#allocation9 + $0x4e]]
        %v2771 = vld [vmem:[%s1786 + $0x6] sm:$0xff]
        %v2772 = vld [vmem:[%s1786 + $0xe] sm:$0xff]
        %v2773 = vstv %s2770
        %v2774 = vmul.f32 %v2773, %v2771
        %v2775 = vmul.f32 %v2773, %v2772
        %v2776 = vadd.f32 %v2768, %v2774
        %v2777 = vadd.f32 %v2769, %v2775
        %s2778 = sld [smem:[#allocation9 + $0x4f]]
        %v2779 = vstv %s2778
        %v2780 = vmul.f32 %v2779, %v2771
        %v2781 = vmul.f32 %v2779, %v2772
        %2784 = vrot.lane.b32.xlu0 %v2780, 127
        %v2785 = vpop.permute.xlu0 %2784
        %2786 = vrot.lane.b32.xlu0 %v2781, 127
        %v2787 = vpop.permute.xlu0 %2786
        %v2790 = vadd.f32 %v2776, %v2785
        %v2791 = vadd.f32 %v2777, %v2787
        %s2792 = sld [smem:[#allocation9 + $0x50]]
        %v2793 = vstv %s2792
        %v2794 = vmul.f32 %v2793, %v2771
        %v2795 = vmul.f32 %v2793, %v2772
        %2798 = vrot.lane.b32.xlu0 %v2794, 126
        %v2799 = vpop.permute.xlu0 %2798
        %2800 = vrot.lane.b32.xlu0 %v2795, 126
        %v2801 = vpop.permute.xlu0 %2800
        %v2804 = vadd.f32 %v2790, %v2799
        %v2805 = vadd.f32 %v2791, %v2801
        %v2806 = vld [vmem:[%s340 + $0x4] sm:$0xff]
        %v2807 = vld [vmem:[%s340 + $0xc] sm:$0xff]
        %v2808 = vadd.f32 %v2806, %v2804
        %v2809 = vadd.f32 %v2807, %v2805
        %v2810 = vmax.f32 %v2808, -1.0
        %v2811 = vmax.f32 %v2809, -1.0
        %v2812 = vmin.f32 %v2810, 1.0
        %v2813 = vmin.f32 %v2811, 1.0
        %2816 = vrot.lane.b32.xlu0 %v2812, 124
        %v2817 = vpop.permute.xlu0 %2816
        %2818 = vrot.lane.b32.xlu0 %v2813, 124
        %v2819 = vpop.permute.xlu0 %2818
        %s2822 = scalar_lea.vmem %s269, 32 [#allocation12]
        %2823 = vst.msk [vmem:[%s2822] sm:$0xff] %vm2132, %v2817
        %2824 = vst.msk [vmem:[%s2822 + $0x8] sm:$0xff] %vm2132, %v2819
        %s2825 = sand.u32 %s140, 1
        %s2826 = scalar_lea.sflag [#allocation5], %s2825
        %s2827 = sand.u32 %s140, 1
        %s2828 = smul.addr %s2827, 48
        %s2829 = scalar_lea.vmem [#allocation12], %s2828
        // Predicated region
        $region57: #{naive_ae_8decode.3} parent=39 // pred_check
          %p2830 = pneg %p150
        $region58: #{naive_ae_8decode.3} parent=39 // pred_check_branch
          %2832 = sbr.rel (%p2830) target = $region60
        $region59: #{naive_ae_8decode.3} parent=39 // pred_region
          %s2834 = ssub.s32 768, 768
          %2835 = vsyncadd %s2826, %s2834
          %s2836 = smul.addr %s22, 6
          %s2837 = smul.addr %s2836, 128
          %s2838 = scalar_lea.hbm %s5, %s2837
          %s2839 = sshll.u32 %s2829, 4
          %s2840 = int_to_ptr.vmem [resolvable:$true] %s2839
          %2845 = dma.vmem_to_hbm [thread:$0]  %s2840, 768, %s2838, %s2826, 128, 128, 8
        $region60: #{naive_ae_8decode.3} parent=39 // pred_fallthru
          _
      $region40: #{naive_ae_8decode.3} parent=5 // pred_fallthru
        _
      %p2846 = scmp.le.s32.totalorder 2, %s17
      // Predicated region
      $region61: #{naive_ae_8decode.3} parent=5 // pred_check
        %p2847 = pneg %p2846
      $region62: #{naive_ae_8decode.3} parent=5 // pred_check_branch
        %2849 = sbr.rel (%p2847) target = $region64
      $region63: #{naive_ae_8decode.3} parent=5 // pred_region
        %s2850 = ssub.s32 %s17, 2
        // Predicated region
        $region65: #{naive_ae_8decode.3} parent=63 // pred_check
          %p2851 = pneg %p156
        $region66: #{naive_ae_8decode.3} parent=63 // pred_check_branch
          %2853 = sbr.rel (%p2851) target = $region68
        $region67: #{naive_ae_8decode.3} parent=63 // pred_region
          %s2854 = sand.u32 %s141, 1
          %s2855 = scalar_lea.sflag [#allocation5], %s2854
          %s2856 = sand.u32 %s141, 1
          %s2857 = smul.addr %s2856, 48
          %s2858 = scalar_lea.vmem [#allocation12], %s2857
          %2859 = dma.done %s2855, 768
        $region68: #{naive_ae_8decode.3} parent=63 // pred_fallthru
          _
      $region64: #{naive_ae_8decode.3} parent=5 // pred_fallthru
        _
    $region6: #{naive_ae_8decode.3} parent=1 // loop_footer
      %s21 = sadd.s32 1, %s17
    $region7: #{naive_ae_8decode.3} parent=1 // loop_footer_branch
      %16 = sbr.rel target = $region3
    $region8: #{naive_ae_8decode.3} parent=1 // loop_exit
      _
    %2860 = vsyncpa [#allocation5], 1
    %s2861 = scalar_lea.sflag [#allocation5], 1
    %2862 = vsyncpa %s2861, 1
    %2863 = vsyncpa [#allocation6], 1
    %s2864 = scalar_lea.sflag [#allocation6], 1
    %2865 = vsyncpa %s2864, 1
    %2866 = vsyncpa [#allocation8], 1
    %2867 = vsyncpa [#allocation11], 1

</llo_original>
